<compile_context>
chip_gen: v7x
topology: tpu7x:2x2x1
jax: 0.10.0
libtpu: 0.0.40
codegen_flags: <defaults>
</compile_context>

<pallas_src>
import functools

import jax
import jax.numpy as jnp
from jax.experimental import pallas as pl
from jax.experimental.pallas import tpu as pltpu

_BN_EPS = 1e-5


# ----------------------------------------------------------------------------
# Fused whole-network kernel
# ----------------------------------------------------------------------------
def _make_forward_kernel(n_layers, n_nodes):
    """Build the fully fused forward kernel (entire network in one pallas_call)."""

    def _block_matmul(blocks, w):
        # concat(blocks, axis=1) @ w, computed as a sum of per-block matmuls so
        # the kernel never does a lane-axis concatenate.
        acc = None
        off = 0
        for t in blocks:
            d = t.shape[1]
            p = jnp.dot(t, w[off:off + d, :], preferred_element_type=jnp.float32)
            acc = p if acc is None else acc + p
            off += d
        return acc

    def _linear(blocks, w, b):
        return _block_matmul(blocks, w) + b

    def _lin_bn_swish(blocks, w, g, be):
        # Linear (bias omitted: exactly cancelled by training-mode BN mean
        # subtraction) + BatchNorm1d (batch stats, biased var) + Swish.
        h = _block_matmul(blocks, w)
        mean = jnp.mean(h, axis=0, keepdims=True)
        c = h - mean                                    # centered, reused
        var = jnp.mean(c * c, axis=0, keepdims=True)
        hn = c * jax.lax.rsqrt(var + _BN_EPS) * g + be
        return hn * jax.nn.sigmoid(hn)                  # Swish

    def kernel(*refs):
        o_ref = refs[-1]
        it = iter(refs[:-1])

        x = next(it)[...].astype(jnp.float32)
        stem_w = next(it)[...]
        stem_b = next(it)[...]
        s = _linear([x], stem_w, stem_b)
        s0, s1 = [s], [s]                               # activations as block lists

        for _ in range(n_layers):
            p0w = next(it)[...]
            p0g = next(it)[...]
            p0b = next(it)[...]
            p1w = next(it)[...]
            p1g = next(it)[...]
            p1b = next(it)[...]
            nw_ref = next(it)                            # [2*n_nodes, OUT, OUT]
            ng_ref = next(it)                            # [2*n_nodes, 1, OUT]
            nb_ref = next(it)                            # [2*n_nodes, 1, OUT]

            tensors = [
                _lin_bn_swish(s0, p0w, p0g, p0b),        # preproc0
                _lin_bn_swish(s1, p1w, p1g, p1b),        # preproc1
            ]
            for node in range(n_nodes):
                # InputChoice(n_chosen=2): first two candidates only, summed.
                k0, k1 = 2 * node, 2 * node + 1
                o0 = _lin_bn_swish([tensors[0]], nw_ref[k0], ng_ref[k0], nb_ref[k0])
                o1 = _lin_bn_swish([tensors[1]], nw_ref[k1], ng_ref[k1], nb_ref[k1])
                tensors.append(o0 + o1)

            # torch.cat(tensors[2:], dim=1) kept implicit as a block list.
            s0, s1 = s1, tensors[2:]

        dense_w = next(it)[...]
        dense_b = next(it)[...]
        logits = _linear(s1, dense_w, dense_b)
        o_ref[...] = jax.nn.sigmoid(logits).astype(o_ref.dtype)   # last_act='sigmoid'

    return kernel


def forward(params, x, *, n_layers, n_nodes):
    flat = [x, params["stem_w"], params["stem_b"]]
    for cell in params["cells"]:
        flat += [cell["pre0_w"], cell["pre0_g"], cell["pre0_b"],
                 cell["pre1_w"], cell["pre1_g"], cell["pre1_b"],
                 cell["node_w"], cell["node_g"], cell["node_b"]]
    flat += [params["dense_w"], params["dense_b"]]

    num_classes = params["dense_w"].shape[1]
    vmem = pl.BlockSpec(memory_space=pltpu.MemorySpace.VMEM)
    return pl.pallas_call(
        _make_forward_kernel(n_layers, n_nodes),
        out_shape=jax.ShapeDtypeStruct((x.shape[0], num_classes), x.dtype),
        in_specs=[vmem] * len(flat),
        out_specs=vmem,
    )(*flat)


# ----------------------------------------------------------------------------
# Parameter initialization (deterministic, PyTorch-style Linear init)
# ----------------------------------------------------------------------------
def _uniform(key, shape, fan_in):
    bound = 1.0 / (fan_in ** 0.5)
    return jax.random.uniform(key, shape, jnp.float32, -bound, bound)


def init_params(key, input_shape, out_shape, n_layers, n_nodes, num_classes):
    keys = iter(jax.random.split(key, 1024))
    params = {
        "stem_w": _uniform(next(keys), (input_shape, out_shape), input_shape),
        "stem_b": _uniform(next(keys), (1, out_shape), input_shape),
        "cells": [],
    }
    channels_pp = channels_p = out_shape
    for _ in range(n_layers):
        n_ops = 2 * n_nodes
        cell = {
            # Linear bias omitted on all BN-path ops (exactly cancelled by
            # training-mode BatchNorm mean subtraction -> dead operand).
            "pre0_w": _uniform(next(keys), (channels_pp, out_shape), channels_pp),
            "pre0_g": jnp.ones((1, out_shape), jnp.float32),
            "pre0_b": jnp.zeros((1, out_shape), jnp.float32),
            "pre1_w": _uniform(next(keys), (channels_p, out_shape), channels_p),
            "pre1_g": jnp.ones((1, out_shape), jnp.float32),
            "pre1_b": jnp.zeros((1, out_shape), jnp.float32),
            # Two selected LayerChoice ops per node, stacked for one VMEM DMA.
            "node_w": _uniform(next(keys), (n_ops, out_shape, out_shape), out_shape),
            "node_g": jnp.ones((n_ops, 1, out_shape), jnp.float32),
            "node_b": jnp.zeros((n_ops, 1, out_shape), jnp.float32),
        }
        params["cells"].append(cell)
        channels_pp, channels_p = channels_p, out_shape * n_nodes
    params["dense_w"] = _uniform(next(keys), (channels_p, num_classes), channels_p)
    params["dense_b"] = _uniform(next(keys), (1, num_classes), channels_p)
    return params


# ----------------------------------------------------------------------------
if __name__ == "__main__":
    B = 8
    INPUT_SHAPE = 16
    OUT_SHAPE = 32
    N_LAYERS = 2
    N_NODES = 3
    NUM_CLASSES = 10

    key = jax.random.PRNGKey(0)
    k_params, k_x = jax.random.split(key)
    params = init_params(k_params, INPUT_SHAPE, OUT_SHAPE, N_LAYERS, N_NODES, NUM_CLASSES)
    x = jax.random.normal(k_x, (B, INPUT_SHAPE), jnp.float32)

    fwd = jax.jit(functools.partial(forward, n_layers=N_LAYERS, n_nodes=N_NODES))
    y = fwd(params, x)
    jax.block_until_ready(y)

    assert y.shape == (B, NUM_CLASSES)
    assert bool(jnp.all(jnp.isfinite(y)))
    assert bool(jnp.all((y >= 0.0) & (y <= 1.0)))  # sigmoid output range
    print("KERNEL_OK")
</pallas_src>

<mosaic_0001>
module attributes {stable_mosaic.version = 11 : i64} {
  func.func @kernel(%arg0: memref<8x16xf32, #tpu.memory_space<vmem>>, %arg1: memref<16x32xf32, #tpu.memory_space<vmem>>, %arg2: memref<1x32xf32, #tpu.memory_space<vmem>>, %arg3: memref<32x32xf32, #tpu.memory_space<vmem>>, %arg4: memref<1x32xf32, #tpu.memory_space<vmem>>, %arg5: memref<1x32xf32, #tpu.memory_space<vmem>>, %arg6: memref<32x32xf32, #tpu.memory_space<vmem>>, %arg7: memref<1x32xf32, #tpu.memory_space<vmem>>, %arg8: memref<1x32xf32, #tpu.memory_space<vmem>>, %arg9: memref<6x32x32xf32, #tpu.memory_space<vmem>>, %arg10: memref<6x1x32xf32, #tpu.memory_space<vmem>>, %arg11: memref<6x1x32xf32, #tpu.memory_space<vmem>>, %arg12: memref<32x32xf32, #tpu.memory_space<vmem>>, %arg13: memref<1x32xf32, #tpu.memory_space<vmem>>, %arg14: memref<1x32xf32, #tpu.memory_space<vmem>>, %arg15: memref<96x32xf32, #tpu.memory_space<vmem>>, %arg16: memref<1x32xf32, #tpu.memory_space<vmem>>, %arg17: memref<1x32xf32, #tpu.memory_space<vmem>>, %arg18: memref<6x32x32xf32, #tpu.memory_space<vmem>>, %arg19: memref<6x1x32xf32, #tpu.memory_space<vmem>>, %arg20: memref<6x1x32xf32, #tpu.memory_space<vmem>>, %arg21: memref<96x10xf32, #tpu.memory_space<vmem>>, %arg22: memref<1x10xf32, #tpu.memory_space<vmem>>, %arg23: memref<8x10xf32, #tpu.memory_space<vmem>>) attributes {dimension_semantics = [], scalar_prefetch = 0 : i64, scratch_operands = 0 : i64, tpu.core_type = #tpu.core_type<tc>} {
    %c0 = arith.constant 0 : index
    %c0_0 = arith.constant 0 : index
    %0 = vector.load %arg0[%c0, %c0_0] : memref<8x16xf32, #tpu.memory_space<vmem>>, vector<8x16xf32>
    %c0_1 = arith.constant 0 : index
    %c0_2 = arith.constant 0 : index
    %1 = vector.load %arg1[%c0_1, %c0_2] : memref<16x32xf32, #tpu.memory_space<vmem>>, vector<16x32xf32>
    %c0_3 = arith.constant 0 : index
    %c0_4 = arith.constant 0 : index
    %2 = vector.load %arg2[%c0_3, %c0_4] : memref<1x32xf32, #tpu.memory_space<vmem>>, vector<1x32xf32>
    %cst = arith.constant dense<0.000000e+00> : vector<8x32xf32>
    %3 = tpu.matmul %0, %1, %cst {dimension_numbers = #tpu.dot_dimension_numbers<[1], [0], [0], [1], [0, 0, 1, 1], [], []>} : vector<8x16xf32>, vector<16x32xf32>, vector<8x32xf32> -> vector<8x32xf32>
    %4 = vector.broadcast %2 : vector<1x32xf32> to vector<8x32xf32>
    %5 = arith.addf %3, %4 : vector<8x32xf32>
    %c0_5 = arith.constant 0 : index
    %c0_6 = arith.constant 0 : index
    %6 = vector.load %arg3[%c0_5, %c0_6] : memref<32x32xf32, #tpu.memory_space<vmem>>, vector<32x32xf32>
    %c0_7 = arith.constant 0 : index
    %c0_8 = arith.constant 0 : index
    %7 = vector.load %arg4[%c0_7, %c0_8] : memref<1x32xf32, #tpu.memory_space<vmem>>, vector<1x32xf32>
    %c0_9 = arith.constant 0 : index
    %c0_10 = arith.constant 0 : index
    %8 = vector.load %arg5[%c0_9, %c0_10] : memref<1x32xf32, #tpu.memory_space<vmem>>, vector<1x32xf32>
    %c0_11 = arith.constant 0 : index
    %c0_12 = arith.constant 0 : index
    %9 = vector.load %arg6[%c0_11, %c0_12] : memref<32x32xf32, #tpu.memory_space<vmem>>, vector<32x32xf32>
    %c0_13 = arith.constant 0 : index
    %c0_14 = arith.constant 0 : index
    %10 = vector.load %arg7[%c0_13, %c0_14] : memref<1x32xf32, #tpu.memory_space<vmem>>, vector<1x32xf32>
    %c0_15 = arith.constant 0 : index
    %c0_16 = arith.constant 0 : index
    %11 = vector.load %arg8[%c0_15, %c0_16] : memref<1x32xf32, #tpu.memory_space<vmem>>, vector<1x32xf32>
    %cst_17 = arith.constant dense<0.000000e+00> : vector<8x32xf32>
    %12 = tpu.matmul %5, %6, %cst_17 {dimension_numbers = #tpu.dot_dimension_numbers<[1], [0], [0], [1], [0, 0, 1, 1], [], []>} : vector<8x32xf32>, vector<32x32xf32>, vector<8x32xf32> -> vector<8x32xf32>
    %cst_18 = arith.constant dense<0.000000e+00> : vector<32xf32>
    %13 = vector.multi_reduction <add>, %12, %cst_18 [0] : vector<8x32xf32> to vector<32xf32>
    %14 = vector.shape_cast %13 : vector<32xf32> to vector<1x32xf32>
    %cst_19 = arith.constant 8.000000e+00 : f32
    %15 = vector.broadcast %cst_19 : f32 to vector<1x32xf32>
    %16 = arith.divf %14, %15 : vector<1x32xf32>
    %17 = vector.broadcast %16 : vector<1x32xf32> to vector<8x32xf32>
    %18 = arith.subf %12, %17 : vector<8x32xf32>
    %19 = arith.mulf %18, %18 : vector<8x32xf32>
    %cst_20 = arith.constant dense<0.000000e+00> : vector<32xf32>
    %20 = vector.multi_reduction <add>, %19, %cst_20 [0] : vector<8x32xf32> to vector<32xf32>
    %21 = vector.shape_cast %20 : vector<32xf32> to vector<1x32xf32>
    %cst_21 = arith.constant 8.000000e+00 : f32
    %22 = vector.broadcast %cst_21 : f32 to vector<1x32xf32>
    %23 = arith.divf %21, %22 : vector<1x32xf32>
    %cst_22 = arith.constant 9.99999974E-6 : f32
    %24 = vector.broadcast %cst_22 : f32 to vector<1x32xf32>
    %25 = arith.addf %23, %24 : vector<1x32xf32>
    %26 = math.rsqrt %25 : vector<1x32xf32>
    %27 = vector.broadcast %26 : vector<1x32xf32> to vector<8x32xf32>
    %28 = arith.mulf %18, %27 : vector<8x32xf32>
    %29 = vector.broadcast %7 : vector<1x32xf32> to vector<8x32xf32>
    %30 = arith.mulf %28, %29 : vector<8x32xf32>
    %31 = vector.broadcast %8 : vector<1x32xf32> to vector<8x32xf32>
    %32 = arith.addf %30, %31 : vector<8x32xf32>
    %33 = arith.negf %32 : vector<8x32xf32>
    %34 = math.exp %33 : vector<8x32xf32>
    %cst_23 = arith.constant 1.000000e+00 : f32
    %35 = vector.broadcast %cst_23 : f32 to vector<8x32xf32>
    %36 = arith.addf %35, %34 : vector<8x32xf32>
    %37 = arith.divf %35, %36 : vector<8x32xf32>
    %38 = arith.mulf %32, %37 : vector<8x32xf32>
    %cst_24 = arith.constant dense<0.000000e+00> : vector<8x32xf32>
    %39 = tpu.matmul %5, %9, %cst_24 {dimension_numbers = #tpu.dot_dimension_numbers<[1], [0], [0], [1], [0, 0, 1, 1], [], []>} : vector<8x32xf32>, vector<32x32xf32>, vector<8x32xf32> -> vector<8x32xf32>
    %cst_25 = arith.constant dense<0.000000e+00> : vector<32xf32>
    %40 = vector.multi_reduction <add>, %39, %cst_25 [0] : vector<8x32xf32> to vector<32xf32>
    %41 = vector.shape_cast %40 : vector<32xf32> to vector<1x32xf32>
    %cst_26 = arith.constant 8.000000e+00 : f32
    %42 = vector.broadcast %cst_26 : f32 to vector<1x32xf32>
    %43 = arith.divf %41, %42 : vector<1x32xf32>
    %44 = vector.broadcast %43 : vector<1x32xf32> to vector<8x32xf32>
    %45 = arith.subf %39, %44 : vector<8x32xf32>
    %46 = arith.mulf %45, %45 : vector<8x32xf32>
    %cst_27 = arith.constant dense<0.000000e+00> : vector<32xf32>
    %47 = vector.multi_reduction <add>, %46, %cst_27 [0] : vector<8x32xf32> to vector<32xf32>
    %48 = vector.shape_cast %47 : vector<32xf32> to vector<1x32xf32>
    %cst_28 = arith.constant 8.000000e+00 : f32
    %49 = vector.broadcast %cst_28 : f32 to vector<1x32xf32>
    %50 = arith.divf %48, %49 : vector<1x32xf32>
    %cst_29 = arith.constant 9.99999974E-6 : f32
    %51 = vector.broadcast %cst_29 : f32 to vector<1x32xf32>
    %52 = arith.addf %50, %51 : vector<1x32xf32>
    %53 = math.rsqrt %52 : vector<1x32xf32>
    %54 = vector.broadcast %53 : vector<1x32xf32> to vector<8x32xf32>
    %55 = arith.mulf %45, %54 : vector<8x32xf32>
    %56 = vector.broadcast %10 : vector<1x32xf32> to vector<8x32xf32>
    %57 = arith.mulf %55, %56 : vector<8x32xf32>
    %58 = vector.broadcast %11 : vector<1x32xf32> to vector<8x32xf32>
    %59 = arith.addf %57, %58 : vector<8x32xf32>
    %60 = arith.negf %59 : vector<8x32xf32>
    %61 = math.exp %60 : vector<8x32xf32>
    %cst_30 = arith.constant 1.000000e+00 : f32
    %62 = vector.broadcast %cst_30 : f32 to vector<8x32xf32>
    %63 = arith.addf %62, %61 : vector<8x32xf32>
    %64 = arith.divf %62, %63 : vector<8x32xf32>
    %65 = arith.mulf %59, %64 : vector<8x32xf32>
    %c0_31 = arith.constant 0 : index
    %c0_32 = arith.constant 0 : index
    %c0_33 = arith.constant 0 : index
    %66 = vector.load %arg9[%c0_31, %c0_32, %c0_33] : memref<6x32x32xf32, #tpu.memory_space<vmem>>, vector<1x32x32xf32>
    %67 = vector.shape_cast %66 : vector<1x32x32xf32> to vector<32x32xf32>
    %c0_34 = arith.constant 0 : index
    %c0_35 = arith.constant 0 : index
    %c0_36 = arith.constant 0 : index
    %68 = vector.load %arg10[%c0_34, %c0_35, %c0_36] : memref<6x1x32xf32, #tpu.memory_space<vmem>>, vector<1x1x32xf32>
    %69 = vector.shape_cast %68 : vector<1x1x32xf32> to vector<1x32xf32>
    %c0_37 = arith.constant 0 : index
    %c0_38 = arith.constant 0 : index
    %c0_39 = arith.constant 0 : index
    %70 = vector.load %arg11[%c0_37, %c0_38, %c0_39] : memref<6x1x32xf32, #tpu.memory_space<vmem>>, vector<1x1x32xf32>
    %71 = vector.shape_cast %70 : vector<1x1x32xf32> to vector<1x32xf32>
    %cst_40 = arith.constant dense<0.000000e+00> : vector<8x32xf32>
    %72 = tpu.matmul %38, %67, %cst_40 {dimension_numbers = #tpu.dot_dimension_numbers<[1], [0], [0], [1], [0, 0, 1, 1], [], []>} : vector<8x32xf32>, vector<32x32xf32>, vector<8x32xf32> -> vector<8x32xf32>
    %cst_41 = arith.constant dense<0.000000e+00> : vector<32xf32>
    %73 = vector.multi_reduction <add>, %72, %cst_41 [0] : vector<8x32xf32> to vector<32xf32>
    %74 = vector.shape_cast %73 : vector<32xf32> to vector<1x32xf32>
    %cst_42 = arith.constant 8.000000e+00 : f32
    %75 = vector.broadcast %cst_42 : f32 to vector<1x32xf32>
    %76 = arith.divf %74, %75 : vector<1x32xf32>
    %77 = vector.broadcast %76 : vector<1x32xf32> to vector<8x32xf32>
    %78 = arith.subf %72, %77 : vector<8x32xf32>
    %79 = arith.mulf %78, %78 : vector<8x32xf32>
    %cst_43 = arith.constant dense<0.000000e+00> : vector<32xf32>
    %80 = vector.multi_reduction <add>, %79, %cst_43 [0] : vector<8x32xf32> to vector<32xf32>
    %81 = vector.shape_cast %80 : vector<32xf32> to vector<1x32xf32>
    %cst_44 = arith.constant 8.000000e+00 : f32
    %82 = vector.broadcast %cst_44 : f32 to vector<1x32xf32>
    %83 = arith.divf %81, %82 : vector<1x32xf32>
    %cst_45 = arith.constant 9.99999974E-6 : f32
    %84 = vector.broadcast %cst_45 : f32 to vector<1x32xf32>
    %85 = arith.addf %83, %84 : vector<1x32xf32>
    %86 = math.rsqrt %85 : vector<1x32xf32>
    %87 = vector.broadcast %86 : vector<1x32xf32> to vector<8x32xf32>
    %88 = arith.mulf %78, %87 : vector<8x32xf32>
    %89 = vector.broadcast %69 : vector<1x32xf32> to vector<8x32xf32>
    %90 = arith.mulf %88, %89 : vector<8x32xf32>
    %91 = vector.broadcast %71 : vector<1x32xf32> to vector<8x32xf32>
    %92 = arith.addf %90, %91 : vector<8x32xf32>
    %93 = arith.negf %92 : vector<8x32xf32>
    %94 = math.exp %93 : vector<8x32xf32>
    %cst_46 = arith.constant 1.000000e+00 : f32
    %95 = vector.broadcast %cst_46 : f32 to vector<8x32xf32>
    %96 = arith.addf %95, %94 : vector<8x32xf32>
    %97 = arith.divf %95, %96 : vector<8x32xf32>
    %98 = arith.mulf %92, %97 : vector<8x32xf32>
    %c1 = arith.constant 1 : index
    %c0_47 = arith.constant 0 : index
    %c0_48 = arith.constant 0 : index
    %99 = vector.load %arg9[%c1, %c0_47, %c0_48] : memref<6x32x32xf32, #tpu.memory_space<vmem>>, vector<1x32x32xf32>
    %100 = vector.shape_cast %99 : vector<1x32x32xf32> to vector<32x32xf32>
    %c1_49 = arith.constant 1 : index
    %c0_50 = arith.constant 0 : index
    %c0_51 = arith.constant 0 : index
    %101 = vector.load %arg10[%c1_49, %c0_50, %c0_51] : memref<6x1x32xf32, #tpu.memory_space<vmem>>, vector<1x1x32xf32>
    %102 = vector.shape_cast %101 : vector<1x1x32xf32> to vector<1x32xf32>
    %c1_52 = arith.constant 1 : index
    %c0_53 = arith.constant 0 : index
    %c0_54 = arith.constant 0 : index
    %103 = vector.load %arg11[%c1_52, %c0_53, %c0_54] : memref<6x1x32xf32, #tpu.memory_space<vmem>>, vector<1x1x32xf32>
    %104 = vector.shape_cast %103 : vector<1x1x32xf32> to vector<1x32xf32>
    %cst_55 = arith.constant dense<0.000000e+00> : vector<8x32xf32>
    %105 = tpu.matmul %65, %100, %cst_55 {dimension_numbers = #tpu.dot_dimension_numbers<[1], [0], [0], [1], [0, 0, 1, 1], [], []>} : vector<8x32xf32>, vector<32x32xf32>, vector<8x32xf32> -> vector<8x32xf32>
    %cst_56 = arith.constant dense<0.000000e+00> : vector<32xf32>
    %106 = vector.multi_reduction <add>, %105, %cst_56 [0] : vector<8x32xf32> to vector<32xf32>
    %107 = vector.shape_cast %106 : vector<32xf32> to vector<1x32xf32>
    %cst_57 = arith.constant 8.000000e+00 : f32
    %108 = vector.broadcast %cst_57 : f32 to vector<1x32xf32>
    %109 = arith.divf %107, %108 : vector<1x32xf32>
    %110 = vector.broadcast %109 : vector<1x32xf32> to vector<8x32xf32>
    %111 = arith.subf %105, %110 : vector<8x32xf32>
    %112 = arith.mulf %111, %111 : vector<8x32xf32>
    %cst_58 = arith.constant dense<0.000000e+00> : vector<32xf32>
    %113 = vector.multi_reduction <add>, %112, %cst_58 [0] : vector<8x32xf32> to vector<32xf32>
    %114 = vector.shape_cast %113 : vector<32xf32> to vector<1x32xf32>
    %cst_59 = arith.constant 8.000000e+00 : f32
    %115 = vector.broadcast %cst_59 : f32 to vector<1x32xf32>
    %116 = arith.divf %114, %115 : vector<1x32xf32>
    %cst_60 = arith.constant 9.99999974E-6 : f32
    %117 = vector.broadcast %cst_60 : f32 to vector<1x32xf32>
    %118 = arith.addf %116, %117 : vector<1x32xf32>
    %119 = math.rsqrt %118 : vector<1x32xf32>
    %120 = vector.broadcast %119 : vector<1x32xf32> to vector<8x32xf32>
    %121 = arith.mulf %111, %120 : vector<8x32xf32>
    %122 = vector.broadcast %102 : vector<1x32xf32> to vector<8x32xf32>
    %123 = arith.mulf %121, %122 : vector<8x32xf32>
    %124 = vector.broadcast %104 : vector<1x32xf32> to vector<8x32xf32>
    %125 = arith.addf %123, %124 : vector<8x32xf32>
    %126 = arith.negf %125 : vector<8x32xf32>
    %127 = math.exp %126 : vector<8x32xf32>
    %cst_61 = arith.constant 1.000000e+00 : f32
    %128 = vector.broadcast %cst_61 : f32 to vector<8x32xf32>
    %129 = arith.addf %128, %127 : vector<8x32xf32>
    %130 = arith.divf %128, %129 : vector<8x32xf32>
    %131 = arith.mulf %125, %130 : vector<8x32xf32>
    %132 = arith.addf %98, %131 : vector<8x32xf32>
    %c2 = arith.constant 2 : index
    %c0_62 = arith.constant 0 : index
    %c0_63 = arith.constant 0 : index
    %133 = vector.load %arg9[%c2, %c0_62, %c0_63] : memref<6x32x32xf32, #tpu.memory_space<vmem>>, vector<1x32x32xf32>
    %134 = vector.shape_cast %133 : vector<1x32x32xf32> to vector<32x32xf32>
    %c2_64 = arith.constant 2 : index
    %c0_65 = arith.constant 0 : index
    %c0_66 = arith.constant 0 : index
    %135 = vector.load %arg10[%c2_64, %c0_65, %c0_66] : memref<6x1x32xf32, #tpu.memory_space<vmem>>, vector<1x1x32xf32>
    %136 = vector.shape_cast %135 : vector<1x1x32xf32> to vector<1x32xf32>
    %c2_67 = arith.constant 2 : index
    %c0_68 = arith.constant 0 : index
    %c0_69 = arith.constant 0 : index
    %137 = vector.load %arg11[%c2_67, %c0_68, %c0_69] : memref<6x1x32xf32, #tpu.memory_space<vmem>>, vector<1x1x32xf32>
    %138 = vector.shape_cast %137 : vector<1x1x32xf32> to vector<1x32xf32>
    %cst_70 = arith.constant dense<0.000000e+00> : vector<8x32xf32>
    %139 = tpu.matmul %38, %134, %cst_70 {dimension_numbers = #tpu.dot_dimension_numbers<[1], [0], [0], [1], [0, 0, 1, 1], [], []>} : vector<8x32xf32>, vector<32x32xf32>, vector<8x32xf32> -> vector<8x32xf32>
    %cst_71 = arith.constant dense<0.000000e+00> : vector<32xf32>
    %140 = vector.multi_reduction <add>, %139, %cst_71 [0] : vector<8x32xf32> to vector<32xf32>
    %141 = vector.shape_cast %140 : vector<32xf32> to vector<1x32xf32>
    %cst_72 = arith.constant 8.000000e+00 : f32
    %142 = vector.broadcast %cst_72 : f32 to vector<1x32xf32>
    %143 = arith.divf %141, %142 : vector<1x32xf32>
    %144 = vector.broadcast %143 : vector<1x32xf32> to vector<8x32xf32>
    %145 = arith.subf %139, %144 : vector<8x32xf32>
    %146 = arith.mulf %145, %145 : vector<8x32xf32>
    %cst_73 = arith.constant dense<0.000000e+00> : vector<32xf32>
    %147 = vector.multi_reduction <add>, %146, %cst_73 [0] : vector<8x32xf32> to vector<32xf32>
    %148 = vector.shape_cast %147 : vector<32xf32> to vector<1x32xf32>
    %cst_74 = arith.constant 8.000000e+00 : f32
    %149 = vector.broadcast %cst_74 : f32 to vector<1x32xf32>
    %150 = arith.divf %148, %149 : vector<1x32xf32>
    %cst_75 = arith.constant 9.99999974E-6 : f32
    %151 = vector.broadcast %cst_75 : f32 to vector<1x32xf32>
    %152 = arith.addf %150, %151 : vector<1x32xf32>
    %153 = math.rsqrt %152 : vector<1x32xf32>
    %154 = vector.broadcast %153 : vector<1x32xf32> to vector<8x32xf32>
    %155 = arith.mulf %145, %154 : vector<8x32xf32>
    %156 = vector.broadcast %136 : vector<1x32xf32> to vector<8x32xf32>
    %157 = arith.mulf %155, %156 : vector<8x32xf32>
    %158 = vector.broadcast %138 : vector<1x32xf32> to vector<8x32xf32>
    %159 = arith.addf %157, %158 : vector<8x32xf32>
    %160 = arith.negf %159 : vector<8x32xf32>
    %161 = math.exp %160 : vector<8x32xf32>
    %cst_76 = arith.constant 1.000000e+00 : f32
    %162 = vector.broadcast %cst_76 : f32 to vector<8x32xf32>
    %163 = arith.addf %162, %161 : vector<8x32xf32>
    %164 = arith.divf %162, %163 : vector<8x32xf32>
    %165 = arith.mulf %159, %164 : vector<8x32xf32>
    %c3 = arith.constant 3 : index
    %c0_77 = arith.constant 0 : index
    %c0_78 = arith.constant 0 : index
    %166 = vector.load %arg9[%c3, %c0_77, %c0_78] : memref<6x32x32xf32, #tpu.memory_space<vmem>>, vector<1x32x32xf32>
    %167 = vector.shape_cast %166 : vector<1x32x32xf32> to vector<32x32xf32>
    %c3_79 = arith.constant 3 : index
    %c0_80 = arith.constant 0 : index
    %c0_81 = arith.constant 0 : index
    %168 = vector.load %arg10[%c3_79, %c0_80, %c0_81] : memref<6x1x32xf32, #tpu.memory_space<vmem>>, vector<1x1x32xf32>
    %169 = vector.shape_cast %168 : vector<1x1x32xf32> to vector<1x32xf32>
    %c3_82 = arith.constant 3 : index
    %c0_83 = arith.constant 0 : index
    %c0_84 = arith.constant 0 : index
    %170 = vector.load %arg11[%c3_82, %c0_83, %c0_84] : memref<6x1x32xf32, #tpu.memory_space<vmem>>, vector<1x1x32xf32>
    %171 = vector.shape_cast %170 : vector<1x1x32xf32> to vector<1x32xf32>
    %cst_85 = arith.constant dense<0.000000e+00> : vector<8x32xf32>
    %172 = tpu.matmul %65, %167, %cst_85 {dimension_numbers = #tpu.dot_dimension_numbers<[1], [0], [0], [1], [0, 0, 1, 1], [], []>} : vector<8x32xf32>, vector<32x32xf32>, vector<8x32xf32> -> vector<8x32xf32>
    %cst_86 = arith.constant dense<0.000000e+00> : vector<32xf32>
    %173 = vector.multi_reduction <add>, %172, %cst_86 [0] : vector<8x32xf32> to vector<32xf32>
    %174 = vector.shape_cast %173 : vector<32xf32> to vector<1x32xf32>
    %cst_87 = arith.constant 8.000000e+00 : f32
    %175 = vector.broadcast %cst_87 : f32 to vector<1x32xf32>
    %176 = arith.divf %174, %175 : vector<1x32xf32>
    %177 = vector.broadcast %176 : vector<1x32xf32> to vector<8x32xf32>
    %178 = arith.subf %172, %177 : vector<8x32xf32>
    %179 = arith.mulf %178, %178 : vector<8x32xf32>
    %cst_88 = arith.constant dense<0.000000e+00> : vector<32xf32>
    %180 = vector.multi_reduction <add>, %179, %cst_88 [0] : vector<8x32xf32> to vector<32xf32>
    %181 = vector.shape_cast %180 : vector<32xf32> to vector<1x32xf32>
    %cst_89 = arith.constant 8.000000e+00 : f32
    %182 = vector.broadcast %cst_89 : f32 to vector<1x32xf32>
    %183 = arith.divf %181, %182 : vector<1x32xf32>
    %cst_90 = arith.constant 9.99999974E-6 : f32
    %184 = vector.broadcast %cst_90 : f32 to vector<1x32xf32>
    %185 = arith.addf %183, %184 : vector<1x32xf32>
    %186 = math.rsqrt %185 : vector<1x32xf32>
    %187 = vector.broadcast %186 : vector<1x32xf32> to vector<8x32xf32>
    %188 = arith.mulf %178, %187 : vector<8x32xf32>
    %189 = vector.broadcast %169 : vector<1x32xf32> to vector<8x32xf32>
    %190 = arith.mulf %188, %189 : vector<8x32xf32>
    %191 = vector.broadcast %171 : vector<1x32xf32> to vector<8x32xf32>
    %192 = arith.addf %190, %191 : vector<8x32xf32>
    %193 = arith.negf %192 : vector<8x32xf32>
    %194 = math.exp %193 : vector<8x32xf32>
    %cst_91 = arith.constant 1.000000e+00 : f32
    %195 = vector.broadcast %cst_91 : f32 to vector<8x32xf32>
    %196 = arith.addf %195, %194 : vector<8x32xf32>
    %197 = arith.divf %195, %196 : vector<8x32xf32>
    %198 = arith.mulf %192, %197 : vector<8x32xf32>
    %199 = arith.addf %165, %198 : vector<8x32xf32>
    %c4 = arith.constant 4 : index
    %c0_92 = arith.constant 0 : index
    %c0_93 = arith.constant 0 : index
    %200 = vector.load %arg9[%c4, %c0_92, %c0_93] : memref<6x32x32xf32, #tpu.memory_space<vmem>>, vector<1x32x32xf32>
    %201 = vector.shape_cast %200 : vector<1x32x32xf32> to vector<32x32xf32>
    %c4_94 = arith.constant 4 : index
    %c0_95 = arith.constant 0 : index
    %c0_96 = arith.constant 0 : index
    %202 = vector.load %arg10[%c4_94, %c0_95, %c0_96] : memref<6x1x32xf32, #tpu.memory_space<vmem>>, vector<1x1x32xf32>
    %203 = vector.shape_cast %202 : vector<1x1x32xf32> to vector<1x32xf32>
    %c4_97 = arith.constant 4 : index
    %c0_98 = arith.constant 0 : index
    %c0_99 = arith.constant 0 : index
    %204 = vector.load %arg11[%c4_97, %c0_98, %c0_99] : memref<6x1x32xf32, #tpu.memory_space<vmem>>, vector<1x1x32xf32>
    %205 = vector.shape_cast %204 : vector<1x1x32xf32> to vector<1x32xf32>
    %cst_100 = arith.constant dense<0.000000e+00> : vector<8x32xf32>
    %206 = tpu.matmul %38, %201, %cst_100 {dimension_numbers = #tpu.dot_dimension_numbers<[1], [0], [0], [1], [0, 0, 1, 1], [], []>} : vector<8x32xf32>, vector<32x32xf32>, vector<8x32xf32> -> vector<8x32xf32>
    %cst_101 = arith.constant dense<0.000000e+00> : vector<32xf32>
    %207 = vector.multi_reduction <add>, %206, %cst_101 [0] : vector<8x32xf32> to vector<32xf32>
    %208 = vector.shape_cast %207 : vector<32xf32> to vector<1x32xf32>
    %cst_102 = arith.constant 8.000000e+00 : f32
    %209 = vector.broadcast %cst_102 : f32 to vector<1x32xf32>
    %210 = arith.divf %208, %209 : vector<1x32xf32>
    %211 = vector.broadcast %210 : vector<1x32xf32> to vector<8x32xf32>
    %212 = arith.subf %206, %211 : vector<8x32xf32>
    %213 = arith.mulf %212, %212 : vector<8x32xf32>
    %cst_103 = arith.constant dense<0.000000e+00> : vector<32xf32>
    %214 = vector.multi_reduction <add>, %213, %cst_103 [0] : vector<8x32xf32> to vector<32xf32>
    %215 = vector.shape_cast %214 : vector<32xf32> to vector<1x32xf32>
    %cst_104 = arith.constant 8.000000e+00 : f32
    %216 = vector.broadcast %cst_104 : f32 to vector<1x32xf32>
    %217 = arith.divf %215, %216 : vector<1x32xf32>
    %cst_105 = arith.constant 9.99999974E-6 : f32
    %218 = vector.broadcast %cst_105 : f32 to vector<1x32xf32>
    %219 = arith.addf %217, %218 : vector<1x32xf32>
    %220 = math.rsqrt %219 : vector<1x32xf32>
    %221 = vector.broadcast %220 : vector<1x32xf32> to vector<8x32xf32>
    %222 = arith.mulf %212, %221 : vector<8x32xf32>
    %223 = vector.broadcast %203 : vector<1x32xf32> to vector<8x32xf32>
    %224 = arith.mulf %222, %223 : vector<8x32xf32>
    %225 = vector.broadcast %205 : vector<1x32xf32> to vector<8x32xf32>
    %226 = arith.addf %224, %225 : vector<8x32xf32>
    %227 = arith.negf %226 : vector<8x32xf32>
    %228 = math.exp %227 : vector<8x32xf32>
    %cst_106 = arith.constant 1.000000e+00 : f32
    %229 = vector.broadcast %cst_106 : f32 to vector<8x32xf32>
    %230 = arith.addf %229, %228 : vector<8x32xf32>
    %231 = arith.divf %229, %230 : vector<8x32xf32>
    %232 = arith.mulf %226, %231 : vector<8x32xf32>
    %c5 = arith.constant 5 : index
    %c0_107 = arith.constant 0 : index
    %c0_108 = arith.constant 0 : index
    %233 = vector.load %arg9[%c5, %c0_107, %c0_108] : memref<6x32x32xf32, #tpu.memory_space<vmem>>, vector<1x32x32xf32>
    %234 = vector.shape_cast %233 : vector<1x32x32xf32> to vector<32x32xf32>
    %c5_109 = arith.constant 5 : index
    %c0_110 = arith.constant 0 : index
    %c0_111 = arith.constant 0 : index
    %235 = vector.load %arg10[%c5_109, %c0_110, %c0_111] : memref<6x1x32xf32, #tpu.memory_space<vmem>>, vector<1x1x32xf32>
    %236 = vector.shape_cast %235 : vector<1x1x32xf32> to vector<1x32xf32>
    %c5_112 = arith.constant 5 : index
    %c0_113 = arith.constant 0 : index
    %c0_114 = arith.constant 0 : index
    %237 = vector.load %arg11[%c5_112, %c0_113, %c0_114] : memref<6x1x32xf32, #tpu.memory_space<vmem>>, vector<1x1x32xf32>
    %238 = vector.shape_cast %237 : vector<1x1x32xf32> to vector<1x32xf32>
    %cst_115 = arith.constant dense<0.000000e+00> : vector<8x32xf32>
    %239 = tpu.matmul %65, %234, %cst_115 {dimension_numbers = #tpu.dot_dimension_numbers<[1], [0], [0], [1], [0, 0, 1, 1], [], []>} : vector<8x32xf32>, vector<32x32xf32>, vector<8x32xf32> -> vector<8x32xf32>
    %cst_116 = arith.constant dense<0.000000e+00> : vector<32xf32>
    %240 = vector.multi_reduction <add>, %239, %cst_116 [0] : vector<8x32xf32> to vector<32xf32>
    %241 = vector.shape_cast %240 : vector<32xf32> to vector<1x32xf32>
    %cst_117 = arith.constant 8.000000e+00 : f32
    %242 = vector.broadcast %cst_117 : f32 to vector<1x32xf32>
    %243 = arith.divf %241, %242 : vector<1x32xf32>
    %244 = vector.broadcast %243 : vector<1x32xf32> to vector<8x32xf32>
    %245 = arith.subf %239, %244 : vector<8x32xf32>
    %246 = arith.mulf %245, %245 : vector<8x32xf32>
    %cst_118 = arith.constant dense<0.000000e+00> : vector<32xf32>
    %247 = vector.multi_reduction <add>, %246, %cst_118 [0] : vector<8x32xf32> to vector<32xf32>
    %248 = vector.shape_cast %247 : vector<32xf32> to vector<1x32xf32>
    %cst_119 = arith.constant 8.000000e+00 : f32
    %249 = vector.broadcast %cst_119 : f32 to vector<1x32xf32>
    %250 = arith.divf %248, %249 : vector<1x32xf32>
    %cst_120 = arith.constant 9.99999974E-6 : f32
    %251 = vector.broadcast %cst_120 : f32 to vector<1x32xf32>
    %252 = arith.addf %250, %251 : vector<1x32xf32>
    %253 = math.rsqrt %252 : vector<1x32xf32>
    %254 = vector.broadcast %253 : vector<1x32xf32> to vector<8x32xf32>
    %255 = arith.mulf %245, %254 : vector<8x32xf32>
    %256 = vector.broadcast %236 : vector<1x32xf32> to vector<8x32xf32>
    %257 = arith.mulf %255, %256 : vector<8x32xf32>
    %258 = vector.broadcast %238 : vector<1x32xf32> to vector<8x32xf32>
    %259 = arith.addf %257, %258 : vector<8x32xf32>
    %260 = arith.negf %259 : vector<8x32xf32>
    %261 = math.exp %260 : vector<8x32xf32>
    %cst_121 = arith.constant 1.000000e+00 : f32
    %262 = vector.broadcast %cst_121 : f32 to vector<8x32xf32>
    %263 = arith.addf %262, %261 : vector<8x32xf32>
    %264 = arith.divf %262, %263 : vector<8x32xf32>
    %265 = arith.mulf %259, %264 : vector<8x32xf32>
    %266 = arith.addf %232, %265 : vector<8x32xf32>
    %c0_122 = arith.constant 0 : index
    %c0_123 = arith.constant 0 : index
    %267 = vector.load %arg12[%c0_122, %c0_123] : memref<32x32xf32, #tpu.memory_space<vmem>>, vector<32x32xf32>
    %c0_124 = arith.constant 0 : index
    %c0_125 = arith.constant 0 : index
    %268 = vector.load %arg13[%c0_124, %c0_125] : memref<1x32xf32, #tpu.memory_space<vmem>>, vector<1x32xf32>
    %c0_126 = arith.constant 0 : index
    %c0_127 = arith.constant 0 : index
    %269 = vector.load %arg14[%c0_126, %c0_127] : memref<1x32xf32, #tpu.memory_space<vmem>>, vector<1x32xf32>
    %c0_128 = arith.constant 0 : index
    %c0_129 = arith.constant 0 : index
    %270 = vector.load %arg15[%c0_128, %c0_129] : memref<96x32xf32, #tpu.memory_space<vmem>>, vector<96x32xf32>
    %c0_130 = arith.constant 0 : index
    %c0_131 = arith.constant 0 : index
    %271 = vector.load %arg16[%c0_130, %c0_131] : memref<1x32xf32, #tpu.memory_space<vmem>>, vector<1x32xf32>
    %c0_132 = arith.constant 0 : index
    %c0_133 = arith.constant 0 : index
    %272 = vector.load %arg17[%c0_132, %c0_133] : memref<1x32xf32, #tpu.memory_space<vmem>>, vector<1x32xf32>
    %cst_134 = arith.constant dense<0.000000e+00> : vector<8x32xf32>
    %273 = tpu.matmul %5, %267, %cst_134 {dimension_numbers = #tpu.dot_dimension_numbers<[1], [0], [0], [1], [0, 0, 1, 1], [], []>} : vector<8x32xf32>, vector<32x32xf32>, vector<8x32xf32> -> vector<8x32xf32>
    %cst_135 = arith.constant dense<0.000000e+00> : vector<32xf32>
    %274 = vector.multi_reduction <add>, %273, %cst_135 [0] : vector<8x32xf32> to vector<32xf32>
    %275 = vector.shape_cast %274 : vector<32xf32> to vector<1x32xf32>
    %cst_136 = arith.constant 8.000000e+00 : f32
    %276 = vector.broadcast %cst_136 : f32 to vector<1x32xf32>
    %277 = arith.divf %275, %276 : vector<1x32xf32>
    %278 = vector.broadcast %277 : vector<1x32xf32> to vector<8x32xf32>
    %279 = arith.subf %273, %278 : vector<8x32xf32>
    %280 = arith.mulf %279, %279 : vector<8x32xf32>
    %cst_137 = arith.constant dense<0.000000e+00> : vector<32xf32>
    %281 = vector.multi_reduction <add>, %280, %cst_137 [0] : vector<8x32xf32> to vector<32xf32>
    %282 = vector.shape_cast %281 : vector<32xf32> to vector<1x32xf32>
    %cst_138 = arith.constant 8.000000e+00 : f32
    %283 = vector.broadcast %cst_138 : f32 to vector<1x32xf32>
    %284 = arith.divf %282, %283 : vector<1x32xf32>
    %cst_139 = arith.constant 9.99999974E-6 : f32
    %285 = vector.broadcast %cst_139 : f32 to vector<1x32xf32>
    %286 = arith.addf %284, %285 : vector<1x32xf32>
    %287 = math.rsqrt %286 : vector<1x32xf32>
    %288 = vector.broadcast %287 : vector<1x32xf32> to vector<8x32xf32>
    %289 = arith.mulf %279, %288 : vector<8x32xf32>
    %290 = vector.broadcast %268 : vector<1x32xf32> to vector<8x32xf32>
    %291 = arith.mulf %289, %290 : vector<8x32xf32>
    %292 = vector.broadcast %269 : vector<1x32xf32> to vector<8x32xf32>
    %293 = arith.addf %291, %292 : vector<8x32xf32>
    %294 = arith.negf %293 : vector<8x32xf32>
    %295 = math.exp %294 : vector<8x32xf32>
    %cst_140 = arith.constant 1.000000e+00 : f32
    %296 = vector.broadcast %cst_140 : f32 to vector<8x32xf32>
    %297 = arith.addf %296, %295 : vector<8x32xf32>
    %298 = arith.divf %296, %297 : vector<8x32xf32>
    %299 = arith.mulf %293, %298 : vector<8x32xf32>
    %300 = vector.extract_strided_slice %270 {offsets = [0, 0], sizes = [32, 32], strides = [1, 1]} : vector<96x32xf32> to vector<32x32xf32>
    %cst_141 = arith.constant dense<0.000000e+00> : vector<8x32xf32>
    %301 = tpu.matmul %132, %300, %cst_141 {dimension_numbers = #tpu.dot_dimension_numbers<[1], [0], [0], [1], [0, 0, 1, 1], [], []>} : vector<8x32xf32>, vector<32x32xf32>, vector<8x32xf32> -> vector<8x32xf32>
    %302 = vector.extract_strided_slice %270 {offsets = [32, 0], sizes = [32, 32], strides = [1, 1]} : vector<96x32xf32> to vector<32x32xf32>
    %cst_142 = arith.constant dense<0.000000e+00> : vector<8x32xf32>
    %303 = tpu.matmul %199, %302, %cst_142 {dimension_numbers = #tpu.dot_dimension_numbers<[1], [0], [0], [1], [0, 0, 1, 1], [], []>} : vector<8x32xf32>, vector<32x32xf32>, vector<8x32xf32> -> vector<8x32xf32>
    %304 = arith.addf %301, %303 : vector<8x32xf32>
    %305 = vector.extract_strided_slice %270 {offsets = [64, 0], sizes = [32, 32], strides = [1, 1]} : vector<96x32xf32> to vector<32x32xf32>
    %cst_143 = arith.constant dense<0.000000e+00> : vector<8x32xf32>
    %306 = tpu.matmul %266, %305, %cst_143 {dimension_numbers = #tpu.dot_dimension_numbers<[1], [0], [0], [1], [0, 0, 1, 1], [], []>} : vector<8x32xf32>, vector<32x32xf32>, vector<8x32xf32> -> vector<8x32xf32>
    %307 = arith.addf %304, %306 : vector<8x32xf32>
    %cst_144 = arith.constant dense<0.000000e+00> : vector<32xf32>
    %308 = vector.multi_reduction <add>, %307, %cst_144 [0] : vector<8x32xf32> to vector<32xf32>
    %309 = vector.shape_cast %308 : vector<32xf32> to vector<1x32xf32>
    %cst_145 = arith.constant 8.000000e+00 : f32
    %310 = vector.broadcast %cst_145 : f32 to vector<1x32xf32>
    %311 = arith.divf %309, %310 : vector<1x32xf32>
    %312 = vector.broadcast %311 : vector<1x32xf32> to vector<8x32xf32>
    %313 = arith.subf %307, %312 : vector<8x32xf32>
    %314 = arith.mulf %313, %313 : vector<8x32xf32>
    %cst_146 = arith.constant dense<0.000000e+00> : vector<32xf32>
    %315 = vector.multi_reduction <add>, %314, %cst_146 [0] : vector<8x32xf32> to vector<32xf32>
    %316 = vector.shape_cast %315 : vector<32xf32> to vector<1x32xf32>
    %cst_147 = arith.constant 8.000000e+00 : f32
    %317 = vector.broadcast %cst_147 : f32 to vector<1x32xf32>
    %318 = arith.divf %316, %317 : vector<1x32xf32>
    %cst_148 = arith.constant 9.99999974E-6 : f32
    %319 = vector.broadcast %cst_148 : f32 to vector<1x32xf32>
    %320 = arith.addf %318, %319 : vector<1x32xf32>
    %321 = math.rsqrt %320 : vector<1x32xf32>
    %322 = vector.broadcast %321 : vector<1x32xf32> to vector<8x32xf32>
    %323 = arith.mulf %313, %322 : vector<8x32xf32>
    %324 = vector.broadcast %271 : vector<1x32xf32> to vector<8x32xf32>
    %325 = arith.mulf %323, %324 : vector<8x32xf32>
    %326 = vector.broadcast %272 : vector<1x32xf32> to vector<8x32xf32>
    %327 = arith.addf %325, %326 : vector<8x32xf32>
    %328 = arith.negf %327 : vector<8x32xf32>
    %329 = math.exp %328 : vector<8x32xf32>
    %cst_149 = arith.constant 1.000000e+00 : f32
    %330 = vector.broadcast %cst_149 : f32 to vector<8x32xf32>
    %331 = arith.addf %330, %329 : vector<8x32xf32>
    %332 = arith.divf %330, %331 : vector<8x32xf32>
    %333 = arith.mulf %327, %332 : vector<8x32xf32>
    %c0_150 = arith.constant 0 : index
    %c0_151 = arith.constant 0 : index
    %c0_152 = arith.constant 0 : index
    %334 = vector.load %arg18[%c0_150, %c0_151, %c0_152] : memref<6x32x32xf32, #tpu.memory_space<vmem>>, vector<1x32x32xf32>
    %335 = vector.shape_cast %334 : vector<1x32x32xf32> to vector<32x32xf32>
    %c0_153 = arith.constant 0 : index
    %c0_154 = arith.constant 0 : index
    %c0_155 = arith.constant 0 : index
    %336 = vector.load %arg19[%c0_153, %c0_154, %c0_155] : memref<6x1x32xf32, #tpu.memory_space<vmem>>, vector<1x1x32xf32>
    %337 = vector.shape_cast %336 : vector<1x1x32xf32> to vector<1x32xf32>
    %c0_156 = arith.constant 0 : index
    %c0_157 = arith.constant 0 : index
    %c0_158 = arith.constant 0 : index
    %338 = vector.load %arg20[%c0_156, %c0_157, %c0_158] : memref<6x1x32xf32, #tpu.memory_space<vmem>>, vector<1x1x32xf32>
    %339 = vector.shape_cast %338 : vector<1x1x32xf32> to vector<1x32xf32>
    %cst_159 = arith.constant dense<0.000000e+00> : vector<8x32xf32>
    %340 = tpu.matmul %299, %335, %cst_159 {dimension_numbers = #tpu.dot_dimension_numbers<[1], [0], [0], [1], [0, 0, 1, 1], [], []>} : vector<8x32xf32>, vector<32x32xf32>, vector<8x32xf32> -> vector<8x32xf32>
    %cst_160 = arith.constant dense<0.000000e+00> : vector<32xf32>
    %341 = vector.multi_reduction <add>, %340, %cst_160 [0] : vector<8x32xf32> to vector<32xf32>
    %342 = vector.shape_cast %341 : vector<32xf32> to vector<1x32xf32>
    %cst_161 = arith.constant 8.000000e+00 : f32
    %343 = vector.broadcast %cst_161 : f32 to vector<1x32xf32>
    %344 = arith.divf %342, %343 : vector<1x32xf32>
    %345 = vector.broadcast %344 : vector<1x32xf32> to vector<8x32xf32>
    %346 = arith.subf %340, %345 : vector<8x32xf32>
    %347 = arith.mulf %346, %346 : vector<8x32xf32>
    %cst_162 = arith.constant dense<0.000000e+00> : vector<32xf32>
    %348 = vector.multi_reduction <add>, %347, %cst_162 [0] : vector<8x32xf32> to vector<32xf32>
    %349 = vector.shape_cast %348 : vector<32xf32> to vector<1x32xf32>
    %cst_163 = arith.constant 8.000000e+00 : f32
    %350 = vector.broadcast %cst_163 : f32 to vector<1x32xf32>
    %351 = arith.divf %349, %350 : vector<1x32xf32>
    %cst_164 = arith.constant 9.99999974E-6 : f32
    %352 = vector.broadcast %cst_164 : f32 to vector<1x32xf32>
    %353 = arith.addf %351, %352 : vector<1x32xf32>
    %354 = math.rsqrt %353 : vector<1x32xf32>
    %355 = vector.broadcast %354 : vector<1x32xf32> to vector<8x32xf32>
    %356 = arith.mulf %346, %355 : vector<8x32xf32>
    %357 = vector.broadcast %337 : vector<1x32xf32> to vector<8x32xf32>
    %358 = arith.mulf %356, %357 : vector<8x32xf32>
    %359 = vector.broadcast %339 : vector<1x32xf32> to vector<8x32xf32>
    %360 = arith.addf %358, %359 : vector<8x32xf32>
    %361 = arith.negf %360 : vector<8x32xf32>
    %362 = math.exp %361 : vector<8x32xf32>
    %cst_165 = arith.constant 1.000000e+00 : f32
    %363 = vector.broadcast %cst_165 : f32 to vector<8x32xf32>
    %364 = arith.addf %363, %362 : vector<8x32xf32>
    %365 = arith.divf %363, %364 : vector<8x32xf32>
    %366 = arith.mulf %360, %365 : vector<8x32xf32>
    %c1_166 = arith.constant 1 : index
    %c0_167 = arith.constant 0 : index
    %c0_168 = arith.constant 0 : index
    %367 = vector.load %arg18[%c1_166, %c0_167, %c0_168] : memref<6x32x32xf32, #tpu.memory_space<vmem>>, vector<1x32x32xf32>
    %368 = vector.shape_cast %367 : vector<1x32x32xf32> to vector<32x32xf32>
    %c1_169 = arith.constant 1 : index
    %c0_170 = arith.constant 0 : index
    %c0_171 = arith.constant 0 : index
    %369 = vector.load %arg19[%c1_169, %c0_170, %c0_171] : memref<6x1x32xf32, #tpu.memory_space<vmem>>, vector<1x1x32xf32>
    %370 = vector.shape_cast %369 : vector<1x1x32xf32> to vector<1x32xf32>
    %c1_172 = arith.constant 1 : index
    %c0_173 = arith.constant 0 : index
    %c0_174 = arith.constant 0 : index
    %371 = vector.load %arg20[%c1_172, %c0_173, %c0_174] : memref<6x1x32xf32, #tpu.memory_space<vmem>>, vector<1x1x32xf32>
    %372 = vector.shape_cast %371 : vector<1x1x32xf32> to vector<1x32xf32>
    %cst_175 = arith.constant dense<0.000000e+00> : vector<8x32xf32>
    %373 = tpu.matmul %333, %368, %cst_175 {dimension_numbers = #tpu.dot_dimension_numbers<[1], [0], [0], [1], [0, 0, 1, 1], [], []>} : vector<8x32xf32>, vector<32x32xf32>, vector<8x32xf32> -> vector<8x32xf32>
    %cst_176 = arith.constant dense<0.000000e+00> : vector<32xf32>
    %374 = vector.multi_reduction <add>, %373, %cst_176 [0] : vector<8x32xf32> to vector<32xf32>
    %375 = vector.shape_cast %374 : vector<32xf32> to vector<1x32xf32>
    %cst_177 = arith.constant 8.000000e+00 : f32
    %376 = vector.broadcast %cst_177 : f32 to vector<1x32xf32>
    %377 = arith.divf %375, %376 : vector<1x32xf32>
    %378 = vector.broadcast %377 : vector<1x32xf32> to vector<8x32xf32>
    %379 = arith.subf %373, %378 : vector<8x32xf32>
    %380 = arith.mulf %379, %379 : vector<8x32xf32>
    %cst_178 = arith.constant dense<0.000000e+00> : vector<32xf32>
    %381 = vector.multi_reduction <add>, %380, %cst_178 [0] : vector<8x32xf32> to vector<32xf32>
    %382 = vector.shape_cast %381 : vector<32xf32> to vector<1x32xf32>
    %cst_179 = arith.constant 8.000000e+00 : f32
    %383 = vector.broadcast %cst_179 : f32 to vector<1x32xf32>
    %384 = arith.divf %382, %383 : vector<1x32xf32>
    %cst_180 = arith.constant 9.99999974E-6 : f32
    %385 = vector.broadcast %cst_180 : f32 to vector<1x32xf32>
    %386 = arith.addf %384, %385 : vector<1x32xf32>
    %387 = math.rsqrt %386 : vector<1x32xf32>
    %388 = vector.broadcast %387 : vector<1x32xf32> to vector<8x32xf32>
    %389 = arith.mulf %379, %388 : vector<8x32xf32>
    %390 = vector.broadcast %370 : vector<1x32xf32> to vector<8x32xf32>
    %391 = arith.mulf %389, %390 : vector<8x32xf32>
    %392 = vector.broadcast %372 : vector<1x32xf32> to vector<8x32xf32>
    %393 = arith.addf %391, %392 : vector<8x32xf32>
    %394 = arith.negf %393 : vector<8x32xf32>
    %395 = math.exp %394 : vector<8x32xf32>
    %cst_181 = arith.constant 1.000000e+00 : f32
    %396 = vector.broadcast %cst_181 : f32 to vector<8x32xf32>
    %397 = arith.addf %396, %395 : vector<8x32xf32>
    %398 = arith.divf %396, %397 : vector<8x32xf32>
    %399 = arith.mulf %393, %398 : vector<8x32xf32>
    %400 = arith.addf %366, %399 : vector<8x32xf32>
    %c2_182 = arith.constant 2 : index
    %c0_183 = arith.constant 0 : index
    %c0_184 = arith.constant 0 : index
    %401 = vector.load %arg18[%c2_182, %c0_183, %c0_184] : memref<6x32x32xf32, #tpu.memory_space<vmem>>, vector<1x32x32xf32>
    %402 = vector.shape_cast %401 : vector<1x32x32xf32> to vector<32x32xf32>
    %c2_185 = arith.constant 2 : index
    %c0_186 = arith.constant 0 : index
    %c0_187 = arith.constant 0 : index
    %403 = vector.load %arg19[%c2_185, %c0_186, %c0_187] : memref<6x1x32xf32, #tpu.memory_space<vmem>>, vector<1x1x32xf32>
    %404 = vector.shape_cast %403 : vector<1x1x32xf32> to vector<1x32xf32>
    %c2_188 = arith.constant 2 : index
    %c0_189 = arith.constant 0 : index
    %c0_190 = arith.constant 0 : index
    %405 = vector.load %arg20[%c2_188, %c0_189, %c0_190] : memref<6x1x32xf32, #tpu.memory_space<vmem>>, vector<1x1x32xf32>
    %406 = vector.shape_cast %405 : vector<1x1x32xf32> to vector<1x32xf32>
    %cst_191 = arith.constant dense<0.000000e+00> : vector<8x32xf32>
    %407 = tpu.matmul %299, %402, %cst_191 {dimension_numbers = #tpu.dot_dimension_numbers<[1], [0], [0], [1], [0, 0, 1, 1], [], []>} : vector<8x32xf32>, vector<32x32xf32>, vector<8x32xf32> -> vector<8x32xf32>
    %cst_192 = arith.constant dense<0.000000e+00> : vector<32xf32>
    %408 = vector.multi_reduction <add>, %407, %cst_192 [0] : vector<8x32xf32> to vector<32xf32>
    %409 = vector.shape_cast %408 : vector<32xf32> to vector<1x32xf32>
    %cst_193 = arith.constant 8.000000e+00 : f32
    %410 = vector.broadcast %cst_193 : f32 to vector<1x32xf32>
    %411 = arith.divf %409, %410 : vector<1x32xf32>
    %412 = vector.broadcast %411 : vector<1x32xf32> to vector<8x32xf32>
    %413 = arith.subf %407, %412 : vector<8x32xf32>
    %414 = arith.mulf %413, %413 : vector<8x32xf32>
    %cst_194 = arith.constant dense<0.000000e+00> : vector<32xf32>
    %415 = vector.multi_reduction <add>, %414, %cst_194 [0] : vector<8x32xf32> to vector<32xf32>
    %416 = vector.shape_cast %415 : vector<32xf32> to vector<1x32xf32>
    %cst_195 = arith.constant 8.000000e+00 : f32
    %417 = vector.broadcast %cst_195 : f32 to vector<1x32xf32>
    %418 = arith.divf %416, %417 : vector<1x32xf32>
    %cst_196 = arith.constant 9.99999974E-6 : f32
    %419 = vector.broadcast %cst_196 : f32 to vector<1x32xf32>
    %420 = arith.addf %418, %419 : vector<1x32xf32>
    %421 = math.rsqrt %420 : vector<1x32xf32>
    %422 = vector.broadcast %421 : vector<1x32xf32> to vector<8x32xf32>
    %423 = arith.mulf %413, %422 : vector<8x32xf32>
    %424 = vector.broadcast %404 : vector<1x32xf32> to vector<8x32xf32>
    %425 = arith.mulf %423, %424 : vector<8x32xf32>
    %426 = vector.broadcast %406 : vector<1x32xf32> to vector<8x32xf32>
    %427 = arith.addf %425, %426 : vector<8x32xf32>
    %428 = arith.negf %427 : vector<8x32xf32>
    %429 = math.exp %428 : vector<8x32xf32>
    %cst_197 = arith.constant 1.000000e+00 : f32
    %430 = vector.broadcast %cst_197 : f32 to vector<8x32xf32>
    %431 = arith.addf %430, %429 : vector<8x32xf32>
    %432 = arith.divf %430, %431 : vector<8x32xf32>
    %433 = arith.mulf %427, %432 : vector<8x32xf32>
    %c3_198 = arith.constant 3 : index
    %c0_199 = arith.constant 0 : index
    %c0_200 = arith.constant 0 : index
    %434 = vector.load %arg18[%c3_198, %c0_199, %c0_200] : memref<6x32x32xf32, #tpu.memory_space<vmem>>, vector<1x32x32xf32>
    %435 = vector.shape_cast %434 : vector<1x32x32xf32> to vector<32x32xf32>
    %c3_201 = arith.constant 3 : index
    %c0_202 = arith.constant 0 : index
    %c0_203 = arith.constant 0 : index
    %436 = vector.load %arg19[%c3_201, %c0_202, %c0_203] : memref<6x1x32xf32, #tpu.memory_space<vmem>>, vector<1x1x32xf32>
    %437 = vector.shape_cast %436 : vector<1x1x32xf32> to vector<1x32xf32>
    %c3_204 = arith.constant 3 : index
    %c0_205 = arith.constant 0 : index
    %c0_206 = arith.constant 0 : index
    %438 = vector.load %arg20[%c3_204, %c0_205, %c0_206] : memref<6x1x32xf32, #tpu.memory_space<vmem>>, vector<1x1x32xf32>
    %439 = vector.shape_cast %438 : vector<1x1x32xf32> to vector<1x32xf32>
    %cst_207 = arith.constant dense<0.000000e+00> : vector<8x32xf32>
    %440 = tpu.matmul %333, %435, %cst_207 {dimension_numbers = #tpu.dot_dimension_numbers<[1], [0], [0], [1], [0, 0, 1, 1], [], []>} : vector<8x32xf32>, vector<32x32xf32>, vector<8x32xf32> -> vector<8x32xf32>
    %cst_208 = arith.constant dense<0.000000e+00> : vector<32xf32>
    %441 = vector.multi_reduction <add>, %440, %cst_208 [0] : vector<8x32xf32> to vector<32xf32>
    %442 = vector.shape_cast %441 : vector<32xf32> to vector<1x32xf32>
    %cst_209 = arith.constant 8.000000e+00 : f32
    %443 = vector.broadcast %cst_209 : f32 to vector<1x32xf32>
    %444 = arith.divf %442, %443 : vector<1x32xf32>
    %445 = vector.broadcast %444 : vector<1x32xf32> to vector<8x32xf32>
    %446 = arith.subf %440, %445 : vector<8x32xf32>
    %447 = arith.mulf %446, %446 : vector<8x32xf32>
    %cst_210 = arith.constant dense<0.000000e+00> : vector<32xf32>
    %448 = vector.multi_reduction <add>, %447, %cst_210 [0] : vector<8x32xf32> to vector<32xf32>
    %449 = vector.shape_cast %448 : vector<32xf32> to vector<1x32xf32>
    %cst_211 = arith.constant 8.000000e+00 : f32
    %450 = vector.broadcast %cst_211 : f32 to vector<1x32xf32>
    %451 = arith.divf %449, %450 : vector<1x32xf32>
    %cst_212 = arith.constant 9.99999974E-6 : f32
    %452 = vector.broadcast %cst_212 : f32 to vector<1x32xf32>
    %453 = arith.addf %451, %452 : vector<1x32xf32>
    %454 = math.rsqrt %453 : vector<1x32xf32>
    %455 = vector.broadcast %454 : vector<1x32xf32> to vector<8x32xf32>
    %456 = arith.mulf %446, %455 : vector<8x32xf32>
    %457 = vector.broadcast %437 : vector<1x32xf32> to vector<8x32xf32>
    %458 = arith.mulf %456, %457 : vector<8x32xf32>
    %459 = vector.broadcast %439 : vector<1x32xf32> to vector<8x32xf32>
    %460 = arith.addf %458, %459 : vector<8x32xf32>
    %461 = arith.negf %460 : vector<8x32xf32>
    %462 = math.exp %461 : vector<8x32xf32>
    %cst_213 = arith.constant 1.000000e+00 : f32
    %463 = vector.broadcast %cst_213 : f32 to vector<8x32xf32>
    %464 = arith.addf %463, %462 : vector<8x32xf32>
    %465 = arith.divf %463, %464 : vector<8x32xf32>
    %466 = arith.mulf %460, %465 : vector<8x32xf32>
    %467 = arith.addf %433, %466 : vector<8x32xf32>
    %c4_214 = arith.constant 4 : index
    %c0_215 = arith.constant 0 : index
    %c0_216 = arith.constant 0 : index
    %468 = vector.load %arg18[%c4_214, %c0_215, %c0_216] : memref<6x32x32xf32, #tpu.memory_space<vmem>>, vector<1x32x32xf32>
    %469 = vector.shape_cast %468 : vector<1x32x32xf32> to vector<32x32xf32>
    %c4_217 = arith.constant 4 : index
    %c0_218 = arith.constant 0 : index
    %c0_219 = arith.constant 0 : index
    %470 = vector.load %arg19[%c4_217, %c0_218, %c0_219] : memref<6x1x32xf32, #tpu.memory_space<vmem>>, vector<1x1x32xf32>
    %471 = vector.shape_cast %470 : vector<1x1x32xf32> to vector<1x32xf32>
    %c4_220 = arith.constant 4 : index
    %c0_221 = arith.constant 0 : index
    %c0_222 = arith.constant 0 : index
    %472 = vector.load %arg20[%c4_220, %c0_221, %c0_222] : memref<6x1x32xf32, #tpu.memory_space<vmem>>, vector<1x1x32xf32>
    %473 = vector.shape_cast %472 : vector<1x1x32xf32> to vector<1x32xf32>
    %cst_223 = arith.constant dense<0.000000e+00> : vector<8x32xf32>
    %474 = tpu.matmul %299, %469, %cst_223 {dimension_numbers = #tpu.dot_dimension_numbers<[1], [0], [0], [1], [0, 0, 1, 1], [], []>} : vector<8x32xf32>, vector<32x32xf32>, vector<8x32xf32> -> vector<8x32xf32>
    %cst_224 = arith.constant dense<0.000000e+00> : vector<32xf32>
    %475 = vector.multi_reduction <add>, %474, %cst_224 [0] : vector<8x32xf32> to vector<32xf32>
    %476 = vector.shape_cast %475 : vector<32xf32> to vector<1x32xf32>
    %cst_225 = arith.constant 8.000000e+00 : f32
    %477 = vector.broadcast %cst_225 : f32 to vector<1x32xf32>
    %478 = arith.divf %476, %477 : vector<1x32xf32>
    %479 = vector.broadcast %478 : vector<1x32xf32> to vector<8x32xf32>
    %480 = arith.subf %474, %479 : vector<8x32xf32>
    %481 = arith.mulf %480, %480 : vector<8x32xf32>
    %cst_226 = arith.constant dense<0.000000e+00> : vector<32xf32>
    %482 = vector.multi_reduction <add>, %481, %cst_226 [0] : vector<8x32xf32> to vector<32xf32>
    %483 = vector.shape_cast %482 : vector<32xf32> to vector<1x32xf32>
    %cst_227 = arith.constant 8.000000e+00 : f32
    %484 = vector.broadcast %cst_227 : f32 to vector<1x32xf32>
    %485 = arith.divf %483, %484 : vector<1x32xf32>
    %cst_228 = arith.constant 9.99999974E-6 : f32
    %486 = vector.broadcast %cst_228 : f32 to vector<1x32xf32>
    %487 = arith.addf %485, %486 : vector<1x32xf32>
    %488 = math.rsqrt %487 : vector<1x32xf32>
    %489 = vector.broadcast %488 : vector<1x32xf32> to vector<8x32xf32>
    %490 = arith.mulf %480, %489 : vector<8x32xf32>
    %491 = vector.broadcast %471 : vector<1x32xf32> to vector<8x32xf32>
    %492 = arith.mulf %490, %491 : vector<8x32xf32>
    %493 = vector.broadcast %473 : vector<1x32xf32> to vector<8x32xf32>
    %494 = arith.addf %492, %493 : vector<8x32xf32>
    %495 = arith.negf %494 : vector<8x32xf32>
    %496 = math.exp %495 : vector<8x32xf32>
    %cst_229 = arith.constant 1.000000e+00 : f32
    %497 = vector.broadcast %cst_229 : f32 to vector<8x32xf32>
    %498 = arith.addf %497, %496 : vector<8x32xf32>
    %499 = arith.divf %497, %498 : vector<8x32xf32>
    %500 = arith.mulf %494, %499 : vector<8x32xf32>
    %c5_230 = arith.constant 5 : index
    %c0_231 = arith.constant 0 : index
    %c0_232 = arith.constant 0 : index
    %501 = vector.load %arg18[%c5_230, %c0_231, %c0_232] : memref<6x32x32xf32, #tpu.memory_space<vmem>>, vector<1x32x32xf32>
    %502 = vector.shape_cast %501 : vector<1x32x32xf32> to vector<32x32xf32>
    %c5_233 = arith.constant 5 : index
    %c0_234 = arith.constant 0 : index
    %c0_235 = arith.constant 0 : index
    %503 = vector.load %arg19[%c5_233, %c0_234, %c0_235] : memref<6x1x32xf32, #tpu.memory_space<vmem>>, vector<1x1x32xf32>
    %504 = vector.shape_cast %503 : vector<1x1x32xf32> to vector<1x32xf32>
    %c5_236 = arith.constant 5 : index
    %c0_237 = arith.constant 0 : index
    %c0_238 = arith.constant 0 : index
    %505 = vector.load %arg20[%c5_236, %c0_237, %c0_238] : memref<6x1x32xf32, #tpu.memory_space<vmem>>, vector<1x1x32xf32>
    %506 = vector.shape_cast %505 : vector<1x1x32xf32> to vector<1x32xf32>
    %cst_239 = arith.constant dense<0.000000e+00> : vector<8x32xf32>
    %507 = tpu.matmul %333, %502, %cst_239 {dimension_numbers = #tpu.dot_dimension_numbers<[1], [0], [0], [1], [0, 0, 1, 1], [], []>} : vector<8x32xf32>, vector<32x32xf32>, vector<8x32xf32> -> vector<8x32xf32>
    %cst_240 = arith.constant dense<0.000000e+00> : vector<32xf32>
    %508 = vector.multi_reduction <add>, %507, %cst_240 [0] : vector<8x32xf32> to vector<32xf32>
    %509 = vector.shape_cast %508 : vector<32xf32> to vector<1x32xf32>
    %cst_241 = arith.constant 8.000000e+00 : f32
    %510 = vector.broadcast %cst_241 : f32 to vector<1x32xf32>
    %511 = arith.divf %509, %510 : vector<1x32xf32>
    %512 = vector.broadcast %511 : vector<1x32xf32> to vector<8x32xf32>
    %513 = arith.subf %507, %512 : vector<8x32xf32>
    %514 = arith.mulf %513, %513 : vector<8x32xf32>
    %cst_242 = arith.constant dense<0.000000e+00> : vector<32xf32>
    %515 = vector.multi_reduction <add>, %514, %cst_242 [0] : vector<8x32xf32> to vector<32xf32>
    %516 = vector.shape_cast %515 : vector<32xf32> to vector<1x32xf32>
    %cst_243 = arith.constant 8.000000e+00 : f32
    %517 = vector.broadcast %cst_243 : f32 to vector<1x32xf32>
    %518 = arith.divf %516, %517 : vector<1x32xf32>
    %cst_244 = arith.constant 9.99999974E-6 : f32
    %519 = vector.broadcast %cst_244 : f32 to vector<1x32xf32>
    %520 = arith.addf %518, %519 : vector<1x32xf32>
    %521 = math.rsqrt %520 : vector<1x32xf32>
    %522 = vector.broadcast %521 : vector<1x32xf32> to vector<8x32xf32>
    %523 = arith.mulf %513, %522 : vector<8x32xf32>
    %524 = vector.broadcast %504 : vector<1x32xf32> to vector<8x32xf32>
    %525 = arith.mulf %523, %524 : vector<8x32xf32>
    %526 = vector.broadcast %506 : vector<1x32xf32> to vector<8x32xf32>
    %527 = arith.addf %525, %526 : vector<8x32xf32>
    %528 = arith.negf %527 : vector<8x32xf32>
    %529 = math.exp %528 : vector<8x32xf32>
    %cst_245 = arith.constant 1.000000e+00 : f32
    %530 = vector.broadcast %cst_245 : f32 to vector<8x32xf32>
    %531 = arith.addf %530, %529 : vector<8x32xf32>
    %532 = arith.divf %530, %531 : vector<8x32xf32>
    %533 = arith.mulf %527, %532 : vector<8x32xf32>
    %534 = arith.addf %500, %533 : vector<8x32xf32>
    %c0_246 = arith.constant 0 : index
    %c0_247 = arith.constant 0 : index
    %535 = vector.load %arg21[%c0_246, %c0_247] : memref<96x10xf32, #tpu.memory_space<vmem>>, vector<96x10xf32>
    %c0_248 = arith.constant 0 : index
    %c0_249 = arith.constant 0 : index
    %536 = vector.load %arg22[%c0_248, %c0_249] : memref<1x10xf32, #tpu.memory_space<vmem>>, vector<1x10xf32>
    %537 = vector.extract_strided_slice %535 {offsets = [0, 0], sizes = [32, 10], strides = [1, 1]} : vector<96x10xf32> to vector<32x10xf32>
    %cst_250 = arith.constant dense<0.000000e+00> : vector<8x10xf32>
    %538 = tpu.matmul %400, %537, %cst_250 {dimension_numbers = #tpu.dot_dimension_numbers<[1], [0], [0], [1], [0, 0, 1, 1], [], []>} : vector<8x32xf32>, vector<32x10xf32>, vector<8x10xf32> -> vector<8x10xf32>
    %539 = vector.extract_strided_slice %535 {offsets = [32, 0], sizes = [32, 10], strides = [1, 1]} : vector<96x10xf32> to vector<32x10xf32>
    %cst_251 = arith.constant dense<0.000000e+00> : vector<8x10xf32>
    %540 = tpu.matmul %467, %539, %cst_251 {dimension_numbers = #tpu.dot_dimension_numbers<[1], [0], [0], [1], [0, 0, 1, 1], [], []>} : vector<8x32xf32>, vector<32x10xf32>, vector<8x10xf32> -> vector<8x10xf32>
    %541 = arith.addf %538, %540 : vector<8x10xf32>
    %542 = vector.extract_strided_slice %535 {offsets = [64, 0], sizes = [32, 10], strides = [1, 1]} : vector<96x10xf32> to vector<32x10xf32>
    %cst_252 = arith.constant dense<0.000000e+00> : vector<8x10xf32>
    %543 = tpu.matmul %534, %542, %cst_252 {dimension_numbers = #tpu.dot_dimension_numbers<[1], [0], [0], [1], [0, 0, 1, 1], [], []>} : vector<8x32xf32>, vector<32x10xf32>, vector<8x10xf32> -> vector<8x10xf32>
    %544 = arith.addf %541, %543 : vector<8x10xf32>
    %545 = vector.broadcast %536 : vector<1x10xf32> to vector<8x10xf32>
    %546 = arith.addf %544, %545 : vector<8x10xf32>
    %547 = arith.negf %546 : vector<8x10xf32>
    %548 = math.exp %547 : vector<8x10xf32>
    %cst_253 = arith.constant 1.000000e+00 : f32
    %549 = vector.broadcast %cst_253 : f32 to vector<8x10xf32>
    %550 = arith.addf %549, %548 : vector<8x10xf32>
    %551 = arith.divf %549, %550 : vector<8x10xf32>
    %c0_254 = arith.constant 0 : index
    %c0_255 = arith.constant 0 : index
    %552 = vector.load %arg23[%c0_254, %c0_255] : memref<8x10xf32, #tpu.memory_space<vmem>>, vector<8x10xf32>
    tpu.vector_store %arg23[%c0_254, %c0_255], %551 {strides = array<i32>} : memref<8x10xf32, #tpu.memory_space<vmem>>, vector<8x10xf32>,
    return
  }
}

</mosaic_0001>

<llo_original>
// kernel: forward.1
$region0: #{forward.1}
  #allocation0 [shape = 'u32[]', space=smem, size = 0x4, offset = 0x4, fixed_abs, tag = 'smem constant byte address 0x4 - core index']
  #allocation1 [shape = 'u32[144,128]{1,0:T(1,128)}', space=vmem, size = 0x12000, scoped, tag = 'internal scratch']
  %s0 = inlined_call_operand.vmem [shape: f32[8,16], index: 0, kind: input, shape index: {}]
  %s1 = inlined_call_operand.hbm [shape: f32[16,32], index: 1, kind: input, shape index: {}]
  %s2 = inlined_call_operand.vmem [shape: f32[1,32], index: 2, kind: input, shape index: {}]
  %s3 = inlined_call_operand.vmem [shape: f32[32,32], index: 3, kind: input, shape index: {}]
  %s4 = inlined_call_operand.hbm [shape: f32[1,32], index: 4, kind: input, shape index: {}]
  %s5 = inlined_call_operand.hbm [shape: f32[1,32], index: 5, kind: input, shape index: {}]
  %s6 = inlined_call_operand.vmem [shape: f32[32,32], index: 6, kind: input, shape index: {}]
  %s7 = inlined_call_operand.hbm [shape: f32[1,32], index: 7, kind: input, shape index: {}]
  %s8 = inlined_call_operand.hbm [shape: f32[1,32], index: 8, kind: input, shape index: {}]
  %s9 = inlined_call_operand.vmem [shape: f32[6,32,32], index: 9, kind: input, shape index: {}]
  %s10 = inlined_call_operand.hbm [shape: f32[6,1,32], index: 10, kind: input, shape index: {}]
  %s11 = inlined_call_operand.hbm [shape: f32[6,1,32], index: 11, kind: input, shape index: {}]
  %s12 = inlined_call_operand.vmem [shape: f32[32,32], index: 12, kind: input, shape index: {}]
  %s13 = inlined_call_operand.hbm [shape: f32[1,32], index: 13, kind: input, shape index: {}]
  %s14 = inlined_call_operand.hbm [shape: f32[1,32], index: 14, kind: input, shape index: {}]
  %s15 = inlined_call_operand.vmem [shape: f32[96,32], index: 15, kind: input, shape index: {}]
  %s16 = inlined_call_operand.hbm [shape: f32[1,32], index: 16, kind: input, shape index: {}]
  %s17 = inlined_call_operand.hbm [shape: f32[1,32], index: 17, kind: input, shape index: {}]
  %s18 = inlined_call_operand.hbm [shape: f32[6,32,32], index: 18, kind: input, shape index: {}]
  %s19 = inlined_call_operand.hbm [shape: f32[6,1,32], index: 19, kind: input, shape index: {}]
  %s20 = inlined_call_operand.hbm [shape: f32[6,1,32], index: 20, kind: input, shape index: {}]
  %s21 = inlined_call_operand.vmem [shape: f32[96,10], index: 21, kind: input, shape index: {}]
  %s22 = inlined_call_operand.vmem [shape: f32[1,10], index: 22, kind: input, shape index: {}]
  %s23 = inlined_call_operand.hbm [shape: f32[8,10], index: 23, kind: output, shape index: {}]
  %s24 = sld [smem:[#allocation0]]
  $region158: #{forward.1} parent=0
    _
  %s26 = ssub.s32 1, %s24
  %s27 = scalar_select 0, %s26, %s24
  $region1: #{forward.1} parent=0
    #allocation2 [shape = 'u8[8192]{0}', space=vmem, size = 0x2000, scoped, tag = 'input window, operand 1, single buffered']
    #allocation3 [shape = 's32[1]{0}', space=sflag, size = 0x4, scoped, tag = 'scoped memory for forward.1']
    #allocation4 [shape = 's32[1]{0}', space=sflag, size = 0x4, scoped, tag = 'scoped memory for forward.1']
    #allocation5 [shape = 'u8[512]{0}', space=vmem, size = 0x400, scoped, tag = 'input window, operand 4, single buffered']
    #allocation6 [shape = 's32[1]{0}', space=sflag, size = 0x4, scoped, tag = 'scoped memory for forward.1']
    #allocation7 [shape = 'u8[512]{0}', space=vmem, size = 0x400, scoped, tag = 'input window, operand 5, single buffered']
    #allocation8 [shape = 'u8[512]{0}', space=vmem, size = 0x400, scoped, tag = 'input window, operand 7, single buffered']
    #allocation9 [shape = 's32[1]{0}', space=sflag, size = 0x4, scoped, tag = 'scoped memory for forward.1']
    #allocation10 [shape = 'u8[512]{0}', space=vmem, size = 0x400, scoped, tag = 'input window, operand 8, single buffered']
    #allocation11 [shape = 'u8[3072]{0}', space=vmem, size = 0xc00, scoped, tag = 'input window, operand 10, single buffered']
    #allocation12 [shape = 's32[1]{0}', space=sflag, size = 0x4, scoped, tag = 'scoped memory for forward.1']
    #allocation13 [shape = 'u8[3072]{0}', space=vmem, size = 0xc00, scoped, tag = 'input window, operand 11, single buffered']
    #allocation14 [shape = 'u8[512]{0}', space=vmem, size = 0x400, scoped, tag = 'input window, operand 13, single buffered']
    #allocation15 [shape = 's32[1]{0}', space=sflag, size = 0x4, scoped, tag = 'scoped memory for forward.1']
    #allocation16 [shape = 'u8[512]{0}', space=vmem, size = 0x400, scoped, tag = 'input window, operand 14, single buffered']
    #allocation17 [shape = 'u8[512]{0}', space=vmem, size = 0x400, scoped, tag = 'input window, operand 16, single buffered']
    #allocation18 [shape = 's32[1]{0}', space=sflag, size = 0x4, scoped, tag = 'scoped memory for forward.1']
    #allocation19 [shape = 'u8[512]{0}', space=vmem, size = 0x400, scoped, tag = 'input window, operand 17, single buffered']
    #allocation20 [shape = 'u8[98304]{0}', space=vmem, size = 0x18000, scoped, tag = 'input window, operand 18, single buffered']
    #allocation21 [shape = 's32[1]{0}', space=sflag, size = 0x4, scoped, tag = 'scoped memory for forward.1']
    #allocation22 [shape = 'u8[3072]{0}', space=vmem, size = 0xc00, scoped, tag = 'input window, operand 19, single buffered']
    #allocation23 [shape = 'u8[3072]{0}', space=vmem, size = 0xc00, scoped, tag = 'input window, operand 20, single buffered']
    #allocation24 [shape = 's32[1]{0}', space=sflag, size = 0x4, scoped, tag = 'scoped memory for forward.1']
    #allocation25 [shape = 'u8[4096]{0}', space=vmem, size = 0x1000, scoped, tag = 'output window, operand 0, single buffered']
    %28 = vsyncpa [#allocation3], 0
    %29 = vsyncpa [#allocation6], 0
    %30 = vsyncpa [#allocation9], 0
    %31 = vsyncpa [#allocation12], 0
    %32 = vsyncpa [#allocation15], 0
    %33 = vsyncpa [#allocation18], 0
    %34 = vsyncpa [#allocation21], 0
    %35 = vsyncpa [#allocation24], 0
    %36 = vsyncpa [#allocation4], 0
    // Predicated region
    $region2: #{forward.1} parent=1 // pred_check
      _
    $region3: #{forward.1} parent=1 // pred_check_branch
      %38 = sbr.rel (0) target = $region5
    $region4: #{forward.1} parent=1 // pred_region
      _
    $region5: #{forward.1} parent=1 // pred_fallthru
      _
    // Predicated region
    $region6: #{forward.1} parent=1 // pred_check
      _
    $region7: #{forward.1} parent=1 // pred_check_branch
      %40 = sbr.rel (0) target = $region9
    $region8: #{forward.1} parent=1 // pred_region
      %s42 = ssub.s32 256, 256
      %43 = vsyncadd [#allocation3], %s42
      %s44 = sshll.u32 [#allocation2], 4
      %s45 = int_to_ptr.vmem [resolvable:$true] %s44
      %50 = dma.hbm_to_vmem [thread:$0]  %s1, 256, %s45, [#allocation3], 128, 128, 8
    $region9: #{forward.1} parent=1 // pred_fallthru
      _
    // Predicated region
    $region10: #{forward.1} parent=1 // pred_check
      _
    $region11: #{forward.1} parent=1 // pred_check_branch
      %52 = sbr.rel (0) target = $region13
    $region12: #{forward.1} parent=1 // pred_region
      _
    $region13: #{forward.1} parent=1 // pred_fallthru
      _
    // Predicated region
    $region14: #{forward.1} parent=1 // pred_check
      _
    $region15: #{forward.1} parent=1 // pred_check_branch
      %54 = sbr.rel (0) target = $region17
    $region16: #{forward.1} parent=1 // pred_region
      _
    $region17: #{forward.1} parent=1 // pred_fallthru
      _
    // Predicated region
    $region18: #{forward.1} parent=1 // pred_check
      _
    $region19: #{forward.1} parent=1 // pred_check_branch
      %56 = sbr.rel (0) target = $region21
    $region20: #{forward.1} parent=1 // pred_region
      %s58 = ssub.s32 16, 16
      %59 = vsyncadd [#allocation6], %s58
      %s61 = sshll.u32 [#allocation5], 4
      %s62 = int_to_ptr.vmem [resolvable:$true] %s61
      %64 = dma.hbm_to_vmem [thread:$0]  %s4, 16, %s62, [#allocation6]
    $region21: #{forward.1} parent=1 // pred_fallthru
      _
    // Predicated region
    $region22: #{forward.1} parent=1 // pred_check
      _
    $region23: #{forward.1} parent=1 // pred_check_branch
      %66 = sbr.rel (0) target = $region25
    $region24: #{forward.1} parent=1 // pred_region
      %s68 = ssub.s32 16, 16
      %69 = vsyncadd [#allocation6], %s68
      %s71 = sshll.u32 [#allocation7], 4
      %s72 = int_to_ptr.vmem [resolvable:$true] %s71
      %74 = dma.hbm_to_vmem [thread:$0]  %s5, 16, %s72, [#allocation6]
    $region25: #{forward.1} parent=1 // pred_fallthru
      _
    // Predicated region
    $region26: #{forward.1} parent=1 // pred_check
      _
    $region27: #{forward.1} parent=1 // pred_check_branch
      %76 = sbr.rel (0) target = $region29
    $region28: #{forward.1} parent=1 // pred_region
      _
    $region29: #{forward.1} parent=1 // pred_fallthru
      _
    // Predicated region
    $region30: #{forward.1} parent=1 // pred_check
      _
    $region31: #{forward.1} parent=1 // pred_check_branch
      %78 = sbr.rel (0) target = $region33
    $region32: #{forward.1} parent=1 // pred_region
      %s80 = ssub.s32 16, 16
      %81 = vsyncadd [#allocation9], %s80
      %s83 = sshll.u32 [#allocation8], 4
      %s84 = int_to_ptr.vmem [resolvable:$true] %s83
      %86 = dma.hbm_to_vmem [thread:$0]  %s7, 16, %s84, [#allocation9]
    $region33: #{forward.1} parent=1 // pred_fallthru
      _
    // Predicated region
    $region34: #{forward.1} parent=1 // pred_check
      _
    $region35: #{forward.1} parent=1 // pred_check_branch
      %88 = sbr.rel (0) target = $region37
    $region36: #{forward.1} parent=1 // pred_region
      %s90 = ssub.s32 16, 16
      %91 = vsyncadd [#allocation9], %s90
      %s93 = sshll.u32 [#allocation10], 4
      %s94 = int_to_ptr.vmem [resolvable:$true] %s93
      %96 = dma.hbm_to_vmem [thread:$0]  %s8, 16, %s94, [#allocation9]
    $region37: #{forward.1} parent=1 // pred_fallthru
      _
    // Predicated region
    $region38: #{forward.1} parent=1 // pred_check
      _
    $region39: #{forward.1} parent=1 // pred_check_branch
      %98 = sbr.rel (0) target = $region41
    $region40: #{forward.1} parent=1 // pred_region
      _
    $region41: #{forward.1} parent=1 // pred_fallthru
      _
    // Predicated region
    $region42: #{forward.1} parent=1 // pred_check
      _
    $region43: #{forward.1} parent=1 // pred_check_branch
      %100 = sbr.rel (0) target = $region45
    $region44: #{forward.1} parent=1 // pred_region
      %s102 = ssub.s32 96, 96
      %103 = vsyncadd [#allocation12], %s102
      %s104 = sshll.u32 [#allocation11], 4
      %s105 = int_to_ptr.vmem [resolvable:$true] %s104
      %110 = dma.hbm_to_vmem [thread:$0]  %s10, 96, %s105, [#allocation12], 16, 16, 1
    $region45: #{forward.1} parent=1 // pred_fallthru
      _
    // Predicated region
    $region46: #{forward.1} parent=1 // pred_check
      _
    $region47: #{forward.1} parent=1 // pred_check_branch
      %112 = sbr.rel (0) target = $region49
    $region48: #{forward.1} parent=1 // pred_region
      %s114 = ssub.s32 96, 96
      %115 = vsyncadd [#allocation12], %s114
      %s116 = sshll.u32 [#allocation13], 4
      %s117 = int_to_ptr.vmem [resolvable:$true] %s116
      %122 = dma.hbm_to_vmem [thread:$0]  %s11, 96, %s117, [#allocation12], 16, 16, 1
    $region49: #{forward.1} parent=1 // pred_fallthru
      _
    // Predicated region
    $region50: #{forward.1} parent=1 // pred_check
      _
    $region51: #{forward.1} parent=1 // pred_check_branch
      %124 = sbr.rel (0) target = $region53
    $region52: #{forward.1} parent=1 // pred_region
      _
    $region53: #{forward.1} parent=1 // pred_fallthru
      _
    // Predicated region
    $region54: #{forward.1} parent=1 // pred_check
      _
    $region55: #{forward.1} parent=1 // pred_check_branch
      %126 = sbr.rel (0) target = $region57
    $region56: #{forward.1} parent=1 // pred_region
      %s128 = ssub.s32 16, 16
      %129 = vsyncadd [#allocation15], %s128
      %s131 = sshll.u32 [#allocation14], 4
      %s132 = int_to_ptr.vmem [resolvable:$true] %s131
      %134 = dma.hbm_to_vmem [thread:$0]  %s13, 16, %s132, [#allocation15]
    $region57: #{forward.1} parent=1 // pred_fallthru
      _
    // Predicated region
    $region58: #{forward.1} parent=1 // pred_check
      _
    $region59: #{forward.1} parent=1 // pred_check_branch
      %136 = sbr.rel (0) target = $region61
    $region60: #{forward.1} parent=1 // pred_region
      %s138 = ssub.s32 16, 16
      %139 = vsyncadd [#allocation15], %s138
      %s141 = sshll.u32 [#allocation16], 4
      %s142 = int_to_ptr.vmem [resolvable:$true] %s141
      %144 = dma.hbm_to_vmem [thread:$0]  %s14, 16, %s142, [#allocation15]
    $region61: #{forward.1} parent=1 // pred_fallthru
      _
    // Predicated region
    $region62: #{forward.1} parent=1 // pred_check
      _
    $region63: #{forward.1} parent=1 // pred_check_branch
      %146 = sbr.rel (0) target = $region65
    $region64: #{forward.1} parent=1 // pred_region
      _
    $region65: #{forward.1} parent=1 // pred_fallthru
      _
    // Predicated region
    $region66: #{forward.1} parent=1 // pred_check
      _
    $region67: #{forward.1} parent=1 // pred_check_branch
      %148 = sbr.rel (0) target = $region69
    $region68: #{forward.1} parent=1 // pred_region
      %s150 = ssub.s32 16, 16
      %151 = vsyncadd [#allocation18], %s150
      %s153 = sshll.u32 [#allocation17], 4
      %s154 = int_to_ptr.vmem [resolvable:$true] %s153
      %156 = dma.hbm_to_vmem [thread:$0]  %s16, 16, %s154, [#allocation18]
    $region69: #{forward.1} parent=1 // pred_fallthru
      _
    // Predicated region
    $region70: #{forward.1} parent=1 // pred_check
      _
    $region71: #{forward.1} parent=1 // pred_check_branch
      %158 = sbr.rel (0) target = $region73
    $region72: #{forward.1} parent=1 // pred_region
      %s160 = ssub.s32 16, 16
      %161 = vsyncadd [#allocation18], %s160
      %s163 = sshll.u32 [#allocation19], 4
      %s164 = int_to_ptr.vmem [resolvable:$true] %s163
      %166 = dma.hbm_to_vmem [thread:$0]  %s17, 16, %s164, [#allocation18]
    $region73: #{forward.1} parent=1 // pred_fallthru
      _
    // Predicated region
    $region74: #{forward.1} parent=1 // pred_check
      _
    $region75: #{forward.1} parent=1 // pred_check_branch
      %168 = sbr.rel (0) target = $region77
    $region76: #{forward.1} parent=1 // pred_region
      %s170 = ssub.s32 3072, 3072
      %171 = vsyncadd [#allocation21], %s170
      %s172 = sshll.u32 [#allocation20], 4
      %s173 = int_to_ptr.vmem [resolvable:$true] %s172
      %178 = dma.hbm_to_vmem [thread:$0]  %s18, 3072, %s173, [#allocation21], 128, 128, 8
    $region77: #{forward.1} parent=1 // pred_fallthru
      _
    // Predicated region
    $region78: #{forward.1} parent=1 // pred_check
      _
    $region79: #{forward.1} parent=1 // pred_check_branch
      %180 = sbr.rel (0) target = $region81
    $region80: #{forward.1} parent=1 // pred_region
      %s182 = ssub.s32 96, 96
      %183 = vsyncadd [#allocation21], %s182
      %s184 = sshll.u32 [#allocation22], 4
      %s185 = int_to_ptr.vmem [resolvable:$true] %s184
      %190 = dma.hbm_to_vmem [thread:$0]  %s19, 96, %s185, [#allocation21], 16, 16, 1
    $region81: #{forward.1} parent=1 // pred_fallthru
      _
    // Predicated region
    $region82: #{forward.1} parent=1 // pred_check
      _
    $region83: #{forward.1} parent=1 // pred_check_branch
      %192 = sbr.rel (0) target = $region85
    $region84: #{forward.1} parent=1 // pred_region
      %s194 = ssub.s32 96, 96
      %195 = vsyncadd [#allocation24], %s194
      %s196 = sshll.u32 [#allocation23], 4
      %s197 = int_to_ptr.vmem [resolvable:$true] %s196
      %202 = dma.hbm_to_vmem [thread:$0]  %s20, 96, %s197, [#allocation24], 16, 16, 1
    $region85: #{forward.1} parent=1 // pred_fallthru
      _
    // Predicated region
    $region86: #{forward.1} parent=1 // pred_check
      _
    $region87: #{forward.1} parent=1 // pred_check_branch
      %204 = sbr.rel (0) target = $region89
    $region88: #{forward.1} parent=1 // pred_region
      _
    $region89: #{forward.1} parent=1 // pred_fallthru
      _
    // Predicated region
    $region90: #{forward.1} parent=1 // pred_check
      _
    $region91: #{forward.1} parent=1 // pred_check_branch
      %206 = sbr.rel (0) target = $region93
    $region92: #{forward.1} parent=1 // pred_region
      _
    $region93: #{forward.1} parent=1 // pred_fallthru
      _
    // Predicated region
    $region94: #{forward.1} parent=1 // pred_check
      _
    $region95: #{forward.1} parent=1 // pred_check_branch
      %208 = sbr.rel (0) target = $region97
    $region96: #{forward.1} parent=1 // pred_region
      %209 = dma.done [#allocation3], 256
    $region97: #{forward.1} parent=1 // pred_fallthru
      _
    // Predicated region
    $region98: #{forward.1} parent=1 // pred_check
      _
    $region99: #{forward.1} parent=1 // pred_check_branch
      %211 = sbr.rel (0) target = $region101
    $region100: #{forward.1} parent=1 // pred_region
      %212 = dma.done [#allocation6], 16
    $region101: #{forward.1} parent=1 // pred_fallthru
      _
    // Predicated region
    $region102: #{forward.1} parent=1 // pred_check
      _
    $region103: #{forward.1} parent=1 // pred_check_branch
      %214 = sbr.rel (0) target = $region105
    $region104: #{forward.1} parent=1 // pred_region
      %215 = dma.done [#allocation6], 16
    $region105: #{forward.1} parent=1 // pred_fallthru
      _
    // Predicated region
    $region106: #{forward.1} parent=1 // pred_check
      _
    $region107: #{forward.1} parent=1 // pred_check_branch
      %217 = sbr.rel (0) target = $region109
    $region108: #{forward.1} parent=1 // pred_region
      %218 = dma.done [#allocation9], 16
    $region109: #{forward.1} parent=1 // pred_fallthru
      _
    // Predicated region
    $region110: #{forward.1} parent=1 // pred_check
      _
    $region111: #{forward.1} parent=1 // pred_check_branch
      %220 = sbr.rel (0) target = $region113
    $region112: #{forward.1} parent=1 // pred_region
      %221 = dma.done [#allocation9], 16
    $region113: #{forward.1} parent=1 // pred_fallthru
      _
    // Predicated region
    $region114: #{forward.1} parent=1 // pred_check
      _
    $region115: #{forward.1} parent=1 // pred_check_branch
      %223 = sbr.rel (0) target = $region117
    $region116: #{forward.1} parent=1 // pred_region
      %224 = dma.done [#allocation12], 96
    $region117: #{forward.1} parent=1 // pred_fallthru
      _
    // Predicated region
    $region118: #{forward.1} parent=1 // pred_check
      _
    $region119: #{forward.1} parent=1 // pred_check_branch
      %226 = sbr.rel (0) target = $region121
    $region120: #{forward.1} parent=1 // pred_region
      %227 = dma.done [#allocation12], 96
    $region121: #{forward.1} parent=1 // pred_fallthru
      _
    // Predicated region
    $region122: #{forward.1} parent=1 // pred_check
      _
    $region123: #{forward.1} parent=1 // pred_check_branch
      %229 = sbr.rel (0) target = $region125
    $region124: #{forward.1} parent=1 // pred_region
      %230 = dma.done [#allocation15], 16
    $region125: #{forward.1} parent=1 // pred_fallthru
      _
    // Predicated region
    $region126: #{forward.1} parent=1 // pred_check
      _
    $region127: #{forward.1} parent=1 // pred_check_branch
      %232 = sbr.rel (0) target = $region129
    $region128: #{forward.1} parent=1 // pred_region
      %233 = dma.done [#allocation15], 16
    $region129: #{forward.1} parent=1 // pred_fallthru
      _
    // Predicated region
    $region130: #{forward.1} parent=1 // pred_check
      _
    $region131: #{forward.1} parent=1 // pred_check_branch
      %235 = sbr.rel (0) target = $region133
    $region132: #{forward.1} parent=1 // pred_region
      %236 = dma.done [#allocation18], 16
    $region133: #{forward.1} parent=1 // pred_fallthru
      _
    // Predicated region
    $region134: #{forward.1} parent=1 // pred_check
      _
    $region135: #{forward.1} parent=1 // pred_check_branch
      %238 = sbr.rel (0) target = $region137
    $region136: #{forward.1} parent=1 // pred_region
      %239 = dma.done [#allocation18], 16
    $region137: #{forward.1} parent=1 // pred_fallthru
      _
    // Predicated region
    $region138: #{forward.1} parent=1 // pred_check
      _
    $region139: #{forward.1} parent=1 // pred_check_branch
      %241 = sbr.rel (0) target = $region141
    $region140: #{forward.1} parent=1 // pred_region
      %242 = dma.done [#allocation21], 3072
    $region141: #{forward.1} parent=1 // pred_fallthru
      _
    // Predicated region
    $region142: #{forward.1} parent=1 // pred_check
      _
    $region143: #{forward.1} parent=1 // pred_check_branch
      %244 = sbr.rel (0) target = $region145
    $region144: #{forward.1} parent=1 // pred_region
      %245 = dma.done [#allocation21], 96
    $region145: #{forward.1} parent=1 // pred_fallthru
      _
    // Predicated region
    $region146: #{forward.1} parent=1 // pred_check
      _
    $region147: #{forward.1} parent=1 // pred_check_branch
      %247 = sbr.rel (0) target = $region149
    $region148: #{forward.1} parent=1 // pred_region
      %248 = dma.done [#allocation24], 96
    $region149: #{forward.1} parent=1 // pred_fallthru
      _
    %v249 = vld [vmem:[%s0] sm:$0xff]
    %v250 = vld [vmem:[#allocation2] sm:$0xff]
    %v251 = vld [vmem:[#allocation2 + $0x8] sm:$0xff]
    %v252 = vld [vmem:[%s2] sm:$0x1]
    %v254 = vlaneseq
    %v255 = vshrl.u32 %v254, 7
    %v256 = vsub.s32 0, %v255
    %v257 = vrot.slane %v252, %v256
    %vm259 = vcmask 130048
    %v261 = vsel %vm259, %v249, 0
    %263 = vmatprep.subr.mxu0 0.0
    %264 = vmatpush1.msra.mxu0 %v250
    %265 = vmatprep.subr.mxu0 0.0
    %266 = vmatpush1.msra.mxu0 %v251
    %267 = vmatprep.subr.mxu0 0.0
    %268 = vmatpush1.msra.mxu0 0.0
    %269 = vmatprep.subr.mxu0 0.0
    %270 = vmatpush1.msra.mxu0 0.0
    %271 = vmatprep.subr.mxu0 0.0
    %272 = vmatpush1.msra.mxu0 0.0
    %273 = vmatprep.subr.mxu0 0.0
    %274 = vmatpush1.msra.mxu0 0.0
    %275 = vmatprep.subr.mxu0 0.0
    %276 = vmatpush1.msra.mxu0 0.0
    %277 = vmatprep.subr.mxu0 0.0
    %278 = vmatpush1.msra.mxu0 0.0
    %279 = vmatprep.subr.mxu0 0.0
    %280 = vmatpush1.msra.mxu0 0.0
    %281 = vmatprep.subr.mxu0 0.0
    %282 = vmatpush1.msra.mxu0 0.0
    %283 = vmatprep.subr.mxu0 0.0
    %284 = vmatpush1.msra.mxu0 0.0
    %285 = vmatprep.subr.mxu0 0.0
    %286 = vmatpush1.msra.mxu0 0.0
    %287 = vmatprep.subr.mxu0 0.0
    %288 = vmatpush1.msra.mxu0 0.0
    %289 = vmatprep.subr.mxu0 0.0
    %290 = vmatpush1.msra.mxu0 0.0
    %291 = vmatprep.subr.mxu0 0.0
    %292 = vmatpush1.msra.mxu0 0.0
    %293 = vmatprep.subr.mxu0 0.0
    %294 = vmatpush1.msra.mxu0 0.0
    %295 = vmatprep.subr.mxu0 0.0
    %296 = vmatpush1.msra.mxu0 0.0
    %297 = vmatprep.subr.mxu0 0.0
    %298 = vmatpush1.msra.mxu0 0.0
    %299 = vmatprep.subr.mxu0 0.0
    %300 = vmatpush1.msra.mxu0 0.0
    %301 = vmatprep.subr.mxu0 0.0
    %302 = vmatpush1.msra.mxu0 0.0
    %303 = vmatprep.subr.mxu0 0.0
    %304 = vmatpush1.msra.mxu0 0.0
    %305 = vmatprep.subr.mxu0 0.0
    %306 = vmatpush1.msra.mxu0 0.0
    %307 = vmatprep.subr.mxu0 0.0
    %308 = vmatpush1.msra.mxu0 0.0
    %309 = vmatprep.subr.mxu0 0.0
    %310 = vmatpush1.msra.mxu0 0.0
    %311 = vmatprep.subr.mxu0 0.0
    %312 = vmatpush1.msra.mxu0 0.0
    %313 = vmatprep.subr.mxu0 0.0
    %314 = vmatpush1.msra.mxu0 0.0
    %315 = vmatprep.subr.mxu0 0.0
    %316 = vmatpush1.msra.mxu0 0.0
    %317 = vmatprep.subr.mxu0 0.0
    %318 = vmatpush1.msra.mxu0 0.0
    %319 = vmatprep.subr.mxu0 0.0
    %320 = vmatpush1.msra.mxu0 0.0
    %321 = vmatprep.subr.mxu0 0.0
    %322 = vmatpush1.msra.mxu0 0.0
    %323 = vmatprep.subr.mxu0 0.0
    %324 = vmatpush1.msra.mxu0 0.0
    %325 = vmatprep.subr.mxu0 0.0
    %326 = vmatpush1.msra.mxu0 0.0
    %327 = vmatprep.mubr.f32.mxu0 0.0
    %328 = vmatmul.mubr.f32.gmra.mrb[0].mxu0 %v261
    %v329 = vpop.f32.mrb[0].mxu0
    %v330 = vadd.f32 %v257, %v329
    %v331 = vpop.f32.mrb[0].mxu0
    %332 = vdwg.mxu0
    %v333 = vld [vmem:[%s3] sm:$0xff]
    %v334 = vld [vmem:[%s3 + $0x8] sm:$0xff]
    %v335 = vld [vmem:[%s3 + $0x10] sm:$0xff]
    %v336 = vld [vmem:[%s3 + $0x18] sm:$0xff]
    %v337 = vld [vmem:[#allocation5] sm:$0x1]
    %v338 = vld [vmem:[#allocation7] sm:$0x1]
    %v339 = vld [vmem:[%s6] sm:$0xff]
    %v340 = vld [vmem:[%s6 + $0x8] sm:$0xff]
    %v341 = vld [vmem:[%s6 + $0x10] sm:$0xff]
    %v342 = vld [vmem:[%s6 + $0x18] sm:$0xff]
    %v343 = vld [vmem:[#allocation8] sm:$0x1]
    %v344 = vld [vmem:[#allocation10] sm:$0x1]
    %vm345 = vcmask 261120
    %v347 = vsel %vm345, %v330, 0
    %349 = vmatprep.subr.mxu0 0.0
    %350 = vmatpush1.msra.mxu0 %v333
    %351 = vmatprep.subr.mxu0 0.0
    %352 = vmatpush1.msra.mxu0 %v334
    %353 = vmatprep.subr.mxu0 0.0
    %354 = vmatpush1.msra.mxu0 %v335
    %355 = vmatprep.subr.mxu0 0.0
    %356 = vmatpush1.msra.mxu0 %v336
    %357 = vmatprep.subr.mxu0 0.0
    %358 = vmatpush1.msra.mxu0 0.0
    %359 = vmatprep.subr.mxu0 0.0
    %360 = vmatpush1.msra.mxu0 0.0
    %361 = vmatprep.subr.mxu0 0.0
    %362 = vmatpush1.msra.mxu0 0.0
    %363 = vmatprep.subr.mxu0 0.0
    %364 = vmatpush1.msra.mxu0 0.0
    %365 = vmatprep.subr.mxu0 0.0
    %366 = vmatpush1.msra.mxu0 0.0
    %367 = vmatprep.subr.mxu0 0.0
    %368 = vmatpush1.msra.mxu0 0.0
    %369 = vmatprep.subr.mxu0 0.0
    %370 = vmatpush1.msra.mxu0 0.0
    %371 = vmatprep.subr.mxu0 0.0
    %372 = vmatpush1.msra.mxu0 0.0
    %373 = vmatprep.subr.mxu0 0.0
    %374 = vmatpush1.msra.mxu0 0.0
    %375 = vmatprep.subr.mxu0 0.0
    %376 = vmatpush1.msra.mxu0 0.0
    %377 = vmatprep.subr.mxu0 0.0
    %378 = vmatpush1.msra.mxu0 0.0
    %379 = vmatprep.subr.mxu0 0.0
    %380 = vmatpush1.msra.mxu0 0.0
    %381 = vmatprep.subr.mxu0 0.0
    %382 = vmatpush1.msra.mxu0 0.0
    %383 = vmatprep.subr.mxu0 0.0
    %384 = vmatpush1.msra.mxu0 0.0
    %385 = vmatprep.subr.mxu0 0.0
    %386 = vmatpush1.msra.mxu0 0.0
    %387 = vmatprep.subr.mxu0 0.0
    %388 = vmatpush1.msra.mxu0 0.0
    %389 = vmatprep.subr.mxu0 0.0
    %390 = vmatpush1.msra.mxu0 0.0
    %391 = vmatprep.subr.mxu0 0.0
    %392 = vmatpush1.msra.mxu0 0.0
    %393 = vmatprep.subr.mxu0 0.0
    %394 = vmatpush1.msra.mxu0 0.0
    %395 = vmatprep.subr.mxu0 0.0
    %396 = vmatpush1.msra.mxu0 0.0
    %397 = vmatprep.subr.mxu0 0.0
    %398 = vmatpush1.msra.mxu0 0.0
    %399 = vmatprep.subr.mxu0 0.0
    %400 = vmatpush1.msra.mxu0 0.0
    %401 = vmatprep.subr.mxu0 0.0
    %402 = vmatpush1.msra.mxu0 0.0
    %403 = vmatprep.subr.mxu0 0.0
    %404 = vmatpush1.msra.mxu0 0.0
    %405 = vmatprep.subr.mxu0 0.0
    %406 = vmatpush1.msra.mxu0 0.0
    %407 = vmatprep.subr.mxu0 0.0
    %408 = vmatpush1.msra.mxu0 0.0
    %409 = vmatprep.subr.mxu0 0.0
    %410 = vmatpush1.msra.mxu0 0.0
    %411 = vmatprep.subr.mxu0 0.0
    %412 = vmatpush1.msra.mxu0 0.0
    %413 = vmatprep.mubr.f32.mxu0 0.0
    %414 = vmatmul.mubr.f32.gmra.mrb[0].mxu0 %v347
    %v415 = vpop.f32.mrb[0].mxu0
    %v416 = vadd.f32 0.0, %v415
    %v417 = vpop.f32.mrb[0].mxu0
    %418 = vdwg.mxu0
    %v419 = vsel %vm345, %v416, 0.0
    %v420 = vrot.slane %v419, 4
    %v421 = vadd.f32 %v419, %v420
    %v422 = vrot.slane %v421, 2
    %v423 = vadd.f32 %v421, %v422
    %v424 = vrot.slane %v423, 1
    %v425 = vadd.f32 %v423, %v424
    %v426 = vrcp.pop 8.0
    %v427 = vmul.f32 %v425, %v426
    %v428 = vsub.f32 %v416, %v427
    %v429 = vmul.f32 %v428, %v428
    %v430 = vsel %vm345, %v429, 0.0
    %v431 = vrot.slane %v430, 4
    %v432 = vadd.f32 %v430, %v431
    %v433 = vrot.slane %v432, 2
    %v434 = vadd.f32 %v432, %v433
    %v435 = vrot.slane %v434, 1
    %v436 = vadd.f32 %v434, %v435
    %v437 = vmul.f32 %v436, %v426
    %v438 = vadd.f32 %v437, 1e-05
    %v439 = vrsqrt.pop %v438
    %v440 = vmul.f32 %v428, %v439
    %v442 = vlaneseq
    %v443 = vshrl.u32 %v442, 7
    %v444 = vsub.s32 0, %v443
    %v445 = vrot.slane %v337, %v444
    %v447 = vmul.f32 %v440, %v445
    %v449 = vlaneseq
    %v450 = vshrl.u32 %v449, 7
    %v451 = vsub.s32 0, %v450
    %v452 = vrot.slane %v338, %v451
    %v454 = vadd.f32 %v447, %v452
    %v455 = vxor.u32 %v454, 2147483648
    %v456 = vmul.f32 %v455, 1.442695
    %v457 = vpow.pop %v456
    %v458 = vadd.f32 %v457, 1.0
    %v459 = vrcp.pop %v458
    %v460 = vmul.f32 1.0, %v459
    %v461 = vmul.f32 %v454, %v460
    %462 = vmatprep.subr.mxu0 0.0
    %463 = vmatpush1.msra.mxu0 %v339
    %464 = vmatprep.subr.mxu0 0.0
    %465 = vmatpush1.msra.mxu0 %v340
    %466 = vmatprep.subr.mxu0 0.0
    %467 = vmatpush1.msra.mxu0 %v341
    %468 = vmatprep.subr.mxu0 0.0
    %469 = vmatpush1.msra.mxu0 %v342
    %470 = vmatprep.subr.mxu0 0.0
    %471 = vmatpush1.msra.mxu0 0.0
    %472 = vmatprep.subr.mxu0 0.0
    %473 = vmatpush1.msra.mxu0 0.0
    %474 = vmatprep.subr.mxu0 0.0
    %475 = vmatpush1.msra.mxu0 0.0
    %476 = vmatprep.subr.mxu0 0.0
    %477 = vmatpush1.msra.mxu0 0.0
    %478 = vmatprep.subr.mxu0 0.0
    %479 = vmatpush1.msra.mxu0 0.0
    %480 = vmatprep.subr.mxu0 0.0
    %481 = vmatpush1.msra.mxu0 0.0
    %482 = vmatprep.subr.mxu0 0.0
    %483 = vmatpush1.msra.mxu0 0.0
    %484 = vmatprep.subr.mxu0 0.0
    %485 = vmatpush1.msra.mxu0 0.0
    %486 = vmatprep.subr.mxu0 0.0
    %487 = vmatpush1.msra.mxu0 0.0
    %488 = vmatprep.subr.mxu0 0.0
    %489 = vmatpush1.msra.mxu0 0.0
    %490 = vmatprep.subr.mxu0 0.0
    %491 = vmatpush1.msra.mxu0 0.0
    %492 = vmatprep.subr.mxu0 0.0
    %493 = vmatpush1.msra.mxu0 0.0
    %494 = vmatprep.subr.mxu0 0.0
    %495 = vmatpush1.msra.mxu0 0.0
    %496 = vmatprep.subr.mxu0 0.0
    %497 = vmatpush1.msra.mxu0 0.0
    %498 = vmatprep.subr.mxu0 0.0
    %499 = vmatpush1.msra.mxu0 0.0
    %500 = vmatprep.subr.mxu0 0.0
    %501 = vmatpush1.msra.mxu0 0.0
    %502 = vmatprep.subr.mxu0 0.0
    %503 = vmatpush1.msra.mxu0 0.0
    %504 = vmatprep.subr.mxu0 0.0
    %505 = vmatpush1.msra.mxu0 0.0
    %506 = vmatprep.subr.mxu0 0.0
    %507 = vmatpush1.msra.mxu0 0.0
    %508 = vmatprep.subr.mxu0 0.0
    %509 = vmatpush1.msra.mxu0 0.0
    %510 = vmatprep.subr.mxu0 0.0
    %511 = vmatpush1.msra.mxu0 0.0
    %512 = vmatprep.subr.mxu0 0.0
    %513 = vmatpush1.msra.mxu0 0.0
    %514 = vmatprep.subr.mxu0 0.0
    %515 = vmatpush1.msra.mxu0 0.0
    %516 = vmatprep.subr.mxu0 0.0
    %517 = vmatpush1.msra.mxu0 0.0
    %518 = vmatprep.subr.mxu0 0.0
    %519 = vmatpush1.msra.mxu0 0.0
    %520 = vmatprep.subr.mxu0 0.0
    %521 = vmatpush1.msra.mxu0 0.0
    %522 = vmatprep.subr.mxu0 0.0
    %523 = vmatpush1.msra.mxu0 0.0
    %524 = vmatprep.subr.mxu0 0.0
    %525 = vmatpush1.msra.mxu0 0.0
    %526 = vmatprep.mubr.f32.mxu0 0.0
    %527 = vmatmul.mubr.f32.gmra.mrb[0].mxu0 %v347
    %v528 = vpop.f32.mrb[0].mxu0
    %v529 = vadd.f32 0.0, %v528
    %v530 = vpop.f32.mrb[0].mxu0
    %531 = vdwg.mxu0
    %v532 = vsel %vm345, %v529, 0.0
    %v533 = vrot.slane %v532, 4
    %v534 = vadd.f32 %v532, %v533
    %v535 = vrot.slane %v534, 2
    %v536 = vadd.f32 %v534, %v535
    %v537 = vrot.slane %v536, 1
    %v538 = vadd.f32 %v536, %v537
    %v539 = vmul.f32 %v538, %v426
    %v540 = vsub.f32 %v529, %v539
    %v541 = vmul.f32 %v540, %v540
    %v542 = vsel %vm345, %v541, 0.0
    %v543 = vrot.slane %v542, 4
    %v544 = vadd.f32 %v542, %v543
    %v545 = vrot.slane %v544, 2
    %v546 = vadd.f32 %v544, %v545
    %v547 = vrot.slane %v546, 1
    %v548 = vadd.f32 %v546, %v547
    %v549 = vmul.f32 %v548, %v426
    %v550 = vadd.f32 %v549, 1e-05
    %v551 = vrsqrt.pop %v550
    %v552 = vmul.f32 %v540, %v551
    %v554 = vlaneseq
    %v555 = vshrl.u32 %v554, 7
    %v556 = vsub.s32 0, %v555
    %v557 = vrot.slane %v343, %v556
    %v559 = vmul.f32 %v552, %v557
    %v561 = vlaneseq
    %v562 = vshrl.u32 %v561, 7
    %v563 = vsub.s32 0, %v562
    %v564 = vrot.slane %v344, %v563
    %v566 = vadd.f32 %v559, %v564
    %v567 = vxor.u32 %v566, 2147483648
    %v568 = vmul.f32 %v567, 1.442695
    %v569 = vpow.pop %v568
    %v570 = vadd.f32 %v569, 1.0
    %v571 = vrcp.pop %v570
    %v572 = vmul.f32 1.0, %v571
    %v573 = vmul.f32 %v566, %v572
    %v574 = vld [vmem:[%s9] sm:$0xff]
    %v575 = vld [vmem:[%s9 + $0x8] sm:$0xff]
    %v576 = vld [vmem:[%s9 + $0x10] sm:$0xff]
    %v577 = vld [vmem:[%s9 + $0x18] sm:$0xff]
    %v578 = vld [vmem:[#allocation11] sm:$0x1]
    %v579 = vld [vmem:[#allocation13] sm:$0x1]
    %v581 = vsel %vm345, %v461, 0
    %583 = vmatprep.subr.mxu0 0.0
    %584 = vmatpush1.msra.mxu0 %v574
    %585 = vmatprep.subr.mxu0 0.0
    %586 = vmatpush1.msra.mxu0 %v575
    %587 = vmatprep.subr.mxu0 0.0
    %588 = vmatpush1.msra.mxu0 %v576
    %589 = vmatprep.subr.mxu0 0.0
    %590 = vmatpush1.msra.mxu0 %v577
    %591 = vmatprep.subr.mxu0 0.0
    %592 = vmatpush1.msra.mxu0 0.0
    %593 = vmatprep.subr.mxu0 0.0
    %594 = vmatpush1.msra.mxu0 0.0
    %595 = vmatprep.subr.mxu0 0.0
    %596 = vmatpush1.msra.mxu0 0.0
    %597 = vmatprep.subr.mxu0 0.0
    %598 = vmatpush1.msra.mxu0 0.0
    %599 = vmatprep.subr.mxu0 0.0
    %600 = vmatpush1.msra.mxu0 0.0
    %601 = vmatprep.subr.mxu0 0.0
    %602 = vmatpush1.msra.mxu0 0.0
    %603 = vmatprep.subr.mxu0 0.0
    %604 = vmatpush1.msra.mxu0 0.0
    %605 = vmatprep.subr.mxu0 0.0
    %606 = vmatpush1.msra.mxu0 0.0
    %607 = vmatprep.subr.mxu0 0.0
    %608 = vmatpush1.msra.mxu0 0.0
    %609 = vmatprep.subr.mxu0 0.0
    %610 = vmatpush1.msra.mxu0 0.0
    %611 = vmatprep.subr.mxu0 0.0
    %612 = vmatpush1.msra.mxu0 0.0
    %613 = vmatprep.subr.mxu0 0.0
    %614 = vmatpush1.msra.mxu0 0.0
    %615 = vmatprep.subr.mxu0 0.0
    %616 = vmatpush1.msra.mxu0 0.0
    %617 = vmatprep.subr.mxu0 0.0
    %618 = vmatpush1.msra.mxu0 0.0
    %619 = vmatprep.subr.mxu0 0.0
    %620 = vmatpush1.msra.mxu0 0.0
    %621 = vmatprep.subr.mxu0 0.0
    %622 = vmatpush1.msra.mxu0 0.0
    %623 = vmatprep.subr.mxu0 0.0
    %624 = vmatpush1.msra.mxu0 0.0
    %625 = vmatprep.subr.mxu0 0.0
    %626 = vmatpush1.msra.mxu0 0.0
    %627 = vmatprep.subr.mxu0 0.0
    %628 = vmatpush1.msra.mxu0 0.0
    %629 = vmatprep.subr.mxu0 0.0
    %630 = vmatpush1.msra.mxu0 0.0
    %631 = vmatprep.subr.mxu0 0.0
    %632 = vmatpush1.msra.mxu0 0.0
    %633 = vmatprep.subr.mxu0 0.0
    %634 = vmatpush1.msra.mxu0 0.0
    %635 = vmatprep.subr.mxu0 0.0
    %636 = vmatpush1.msra.mxu0 0.0
    %637 = vmatprep.subr.mxu0 0.0
    %638 = vmatpush1.msra.mxu0 0.0
    %639 = vmatprep.subr.mxu0 0.0
    %640 = vmatpush1.msra.mxu0 0.0
    %641 = vmatprep.subr.mxu0 0.0
    %642 = vmatpush1.msra.mxu0 0.0
    %643 = vmatprep.subr.mxu0 0.0
    %644 = vmatpush1.msra.mxu0 0.0
    %645 = vmatprep.subr.mxu0 0.0
    %646 = vmatpush1.msra.mxu0 0.0
    %647 = vmatprep.mubr.f32.mxu0 0.0
    %648 = vmatmul.mubr.f32.gmra.mrb[0].mxu0 %v581
    %v649 = vpop.f32.mrb[0].mxu0
    %v650 = vadd.f32 0.0, %v649
    %v651 = vpop.f32.mrb[0].mxu0
    %652 = vdwg.mxu0
    %v653 = vsel %vm345, %v650, 0.0
    %v654 = vrot.slane %v653, 4
    %v655 = vadd.f32 %v653, %v654
    %v656 = vrot.slane %v655, 2
    %v657 = vadd.f32 %v655, %v656
    %v658 = vrot.slane %v657, 1
    %v659 = vadd.f32 %v657, %v658
    %v660 = vmul.f32 %v659, %v426
    %v661 = vsub.f32 %v650, %v660
    %v662 = vmul.f32 %v661, %v661
    %v663 = vsel %vm345, %v662, 0.0
    %v664 = vrot.slane %v663, 4
    %v665 = vadd.f32 %v663, %v664
    %v666 = vrot.slane %v665, 2
    %v667 = vadd.f32 %v665, %v666
    %v668 = vrot.slane %v667, 1
    %v669 = vadd.f32 %v667, %v668
    %v670 = vmul.f32 %v669, %v426
    %v671 = vadd.f32 %v670, 1e-05
    %v672 = vrsqrt.pop %v671
    %v673 = vmul.f32 %v661, %v672
    %v675 = vlaneseq
    %v676 = vshrl.u32 %v675, 7
    %v677 = vsub.s32 0, %v676
    %v678 = vrot.slane %v578, %v677
    %v680 = vmul.f32 %v673, %v678
    %v682 = vlaneseq
    %v683 = vshrl.u32 %v682, 7
    %v684 = vsub.s32 0, %v683
    %v685 = vrot.slane %v579, %v684
    %v687 = vadd.f32 %v680, %v685
    %v688 = vxor.u32 %v687, 2147483648
    %v689 = vmul.f32 %v688, 1.442695
    %v690 = vpow.pop %v689
    %v691 = vadd.f32 %v690, 1.0
    %v692 = vrcp.pop %v691
    %v693 = vmul.f32 1.0, %v692
    %v694 = vmul.f32 %v687, %v693
    %s695 = scalar_lea.vmem %s9, 32
    %v696 = vld [vmem:[%s695] sm:$0xff]
    %v697 = vld [vmem:[%s695 + $0x8] sm:$0xff]
    %v698 = vld [vmem:[%s695 + $0x10] sm:$0xff]
    %v699 = vld [vmem:[%s695 + $0x18] sm:$0xff]
    %s700 = scalar_lea.vmem [#allocation11], 1
    %v701 = vld [vmem:[%s700] sm:$0x1]
    %s702 = scalar_lea.vmem [#allocation13], 1
    %v703 = vld [vmem:[%s702] sm:$0x1]
    %v705 = vsel %vm345, %v573, 0
    %707 = vmatprep.subr.mxu0 0.0
    %708 = vmatpush1.msra.mxu0 %v696
    %709 = vmatprep.subr.mxu0 0.0
    %710 = vmatpush1.msra.mxu0 %v697
    %711 = vmatprep.subr.mxu0 0.0
    %712 = vmatpush1.msra.mxu0 %v698
    %713 = vmatprep.subr.mxu0 0.0
    %714 = vmatpush1.msra.mxu0 %v699
    %715 = vmatprep.subr.mxu0 0.0
    %716 = vmatpush1.msra.mxu0 0.0
    %717 = vmatprep.subr.mxu0 0.0
    %718 = vmatpush1.msra.mxu0 0.0
    %719 = vmatprep.subr.mxu0 0.0
    %720 = vmatpush1.msra.mxu0 0.0
    %721 = vmatprep.subr.mxu0 0.0
    %722 = vmatpush1.msra.mxu0 0.0
    %723 = vmatprep.subr.mxu0 0.0
    %724 = vmatpush1.msra.mxu0 0.0
    %725 = vmatprep.subr.mxu0 0.0
    %726 = vmatpush1.msra.mxu0 0.0
    %727 = vmatprep.subr.mxu0 0.0
    %728 = vmatpush1.msra.mxu0 0.0
    %729 = vmatprep.subr.mxu0 0.0
    %730 = vmatpush1.msra.mxu0 0.0
    %731 = vmatprep.subr.mxu0 0.0
    %732 = vmatpush1.msra.mxu0 0.0
    %733 = vmatprep.subr.mxu0 0.0
    %734 = vmatpush1.msra.mxu0 0.0
    %735 = vmatprep.subr.mxu0 0.0
    %736 = vmatpush1.msra.mxu0 0.0
    %737 = vmatprep.subr.mxu0 0.0
    %738 = vmatpush1.msra.mxu0 0.0
    %739 = vmatprep.subr.mxu0 0.0
    %740 = vmatpush1.msra.mxu0 0.0
    %741 = vmatprep.subr.mxu0 0.0
    %742 = vmatpush1.msra.mxu0 0.0
    %743 = vmatprep.subr.mxu0 0.0
    %744 = vmatpush1.msra.mxu0 0.0
    %745 = vmatprep.subr.mxu0 0.0
    %746 = vmatpush1.msra.mxu0 0.0
    %747 = vmatprep.subr.mxu0 0.0
    %748 = vmatpush1.msra.mxu0 0.0
    %749 = vmatprep.subr.mxu0 0.0
    %750 = vmatpush1.msra.mxu0 0.0
    %751 = vmatprep.subr.mxu0 0.0
    %752 = vmatpush1.msra.mxu0 0.0
    %753 = vmatprep.subr.mxu0 0.0
    %754 = vmatpush1.msra.mxu0 0.0
    %755 = vmatprep.subr.mxu0 0.0
    %756 = vmatpush1.msra.mxu0 0.0
    %757 = vmatprep.subr.mxu0 0.0
    %758 = vmatpush1.msra.mxu0 0.0
    %759 = vmatprep.subr.mxu0 0.0
    %760 = vmatpush1.msra.mxu0 0.0
    %761 = vmatprep.subr.mxu0 0.0
    %762 = vmatpush1.msra.mxu0 0.0
    %763 = vmatprep.subr.mxu0 0.0
    %764 = vmatpush1.msra.mxu0 0.0
    %765 = vmatprep.subr.mxu0 0.0
    %766 = vmatpush1.msra.mxu0 0.0
    %767 = vmatprep.subr.mxu0 0.0
    %768 = vmatpush1.msra.mxu0 0.0
    %769 = vmatprep.subr.mxu0 0.0
    %770 = vmatpush1.msra.mxu0 0.0
    %771 = vmatprep.mubr.f32.mxu0 0.0
    %772 = vmatmul.mubr.f32.gmra.mrb[0].mxu0 %v705
    %v773 = vpop.f32.mrb[0].mxu0
    %v774 = vadd.f32 0.0, %v773
    %v775 = vpop.f32.mrb[0].mxu0
    %776 = vdwg.mxu0
    %v777 = vsel %vm345, %v774, 0.0
    %v778 = vrot.slane %v777, 4
    %v779 = vadd.f32 %v777, %v778
    %v780 = vrot.slane %v779, 2
    %v781 = vadd.f32 %v779, %v780
    %v782 = vrot.slane %v781, 1
    %v783 = vadd.f32 %v781, %v782
    %v784 = vmul.f32 %v783, %v426
    %v785 = vsub.f32 %v774, %v784
    %v786 = vmul.f32 %v785, %v785
    %v787 = vsel %vm345, %v786, 0.0
    %v788 = vrot.slane %v787, 4
    %v789 = vadd.f32 %v787, %v788
    %v790 = vrot.slane %v789, 2
    %v791 = vadd.f32 %v789, %v790
    %v792 = vrot.slane %v791, 1
    %v793 = vadd.f32 %v791, %v792
    %v794 = vmul.f32 %v793, %v426
    %v795 = vadd.f32 %v794, 1e-05
    %v796 = vrsqrt.pop %v795
    %v797 = vmul.f32 %v785, %v796
    %v799 = vlaneseq
    %v800 = vshrl.u32 %v799, 7
    %v801 = vsub.s32 0, %v800
    %v802 = vrot.slane %v701, %v801
    %v804 = vmul.f32 %v797, %v802
    %v806 = vlaneseq
    %v807 = vshrl.u32 %v806, 7
    %v808 = vsub.s32 0, %v807
    %v809 = vrot.slane %v703, %v808
    %v811 = vadd.f32 %v804, %v809
    %v812 = vxor.u32 %v811, 2147483648
    %v813 = vmul.f32 %v812, 1.442695
    %v814 = vpow.pop %v813
    %v815 = vadd.f32 %v814, 1.0
    %v816 = vrcp.pop %v815
    %v817 = vmul.f32 1.0, %v816
    %v818 = vmul.f32 %v811, %v817
    %v819 = vadd.f32 %v694, %v818
    %s820 = scalar_lea.vmem %s9, 64
    %v821 = vld [vmem:[%s820] sm:$0xff]
    %v822 = vld [vmem:[%s820 + $0x8] sm:$0xff]
    %v823 = vld [vmem:[%s820 + $0x10] sm:$0xff]
    %v824 = vld [vmem:[%s820 + $0x18] sm:$0xff]
    %s825 = scalar_lea.vmem [#allocation11], 2
    %v826 = vld [vmem:[%s825] sm:$0x1]
    %s827 = scalar_lea.vmem [#allocation13], 2
    %v828 = vld [vmem:[%s827] sm:$0x1]
    %829 = vmatprep.subr.mxu0 0.0
    %830 = vmatpush1.msra.mxu0 %v821
    %831 = vmatprep.subr.mxu0 0.0
    %832 = vmatpush1.msra.mxu0 %v822
    %833 = vmatprep.subr.mxu0 0.0
    %834 = vmatpush1.msra.mxu0 %v823
    %835 = vmatprep.subr.mxu0 0.0
    %836 = vmatpush1.msra.mxu0 %v824
    %837 = vmatprep.subr.mxu0 0.0
    %838 = vmatpush1.msra.mxu0 0.0
    %839 = vmatprep.subr.mxu0 0.0
    %840 = vmatpush1.msra.mxu0 0.0
    %841 = vmatprep.subr.mxu0 0.0
    %842 = vmatpush1.msra.mxu0 0.0
    %843 = vmatprep.subr.mxu0 0.0
    %844 = vmatpush1.msra.mxu0 0.0
    %845 = vmatprep.subr.mxu0 0.0
    %846 = vmatpush1.msra.mxu0 0.0
    %847 = vmatprep.subr.mxu0 0.0
    %848 = vmatpush1.msra.mxu0 0.0
    %849 = vmatprep.subr.mxu0 0.0
    %850 = vmatpush1.msra.mxu0 0.0
    %851 = vmatprep.subr.mxu0 0.0
    %852 = vmatpush1.msra.mxu0 0.0
    %853 = vmatprep.subr.mxu0 0.0
    %854 = vmatpush1.msra.mxu0 0.0
    %855 = vmatprep.subr.mxu0 0.0
    %856 = vmatpush1.msra.mxu0 0.0
    %857 = vmatprep.subr.mxu0 0.0
    %858 = vmatpush1.msra.mxu0 0.0
    %859 = vmatprep.subr.mxu0 0.0
    %860 = vmatpush1.msra.mxu0 0.0
    %861 = vmatprep.subr.mxu0 0.0
    %862 = vmatpush1.msra.mxu0 0.0
    %863 = vmatprep.subr.mxu0 0.0
    %864 = vmatpush1.msra.mxu0 0.0
    %865 = vmatprep.subr.mxu0 0.0
    %866 = vmatpush1.msra.mxu0 0.0
    %867 = vmatprep.subr.mxu0 0.0
    %868 = vmatpush1.msra.mxu0 0.0
    %869 = vmatprep.subr.mxu0 0.0
    %870 = vmatpush1.msra.mxu0 0.0
    %871 = vmatprep.subr.mxu0 0.0
    %872 = vmatpush1.msra.mxu0 0.0
    %873 = vmatprep.subr.mxu0 0.0
    %874 = vmatpush1.msra.mxu0 0.0
    %875 = vmatprep.subr.mxu0 0.0
    %876 = vmatpush1.msra.mxu0 0.0
    %877 = vmatprep.subr.mxu0 0.0
    %878 = vmatpush1.msra.mxu0 0.0
    %879 = vmatprep.subr.mxu0 0.0
    %880 = vmatpush1.msra.mxu0 0.0
    %881 = vmatprep.subr.mxu0 0.0
    %882 = vmatpush1.msra.mxu0 0.0
    %883 = vmatprep.subr.mxu0 0.0
    %884 = vmatpush1.msra.mxu0 0.0
    %885 = vmatprep.subr.mxu0 0.0
    %886 = vmatpush1.msra.mxu0 0.0
    %887 = vmatprep.subr.mxu0 0.0
    %888 = vmatpush1.msra.mxu0 0.0
    %889 = vmatprep.subr.mxu0 0.0
    %890 = vmatpush1.msra.mxu0 0.0
    %891 = vmatprep.subr.mxu0 0.0
    %892 = vmatpush1.msra.mxu0 0.0
    %893 = vmatprep.mubr.f32.mxu0 0.0
    %894 = vmatmul.mubr.f32.gmra.mrb[0].mxu0 %v581
    %v895 = vpop.f32.mrb[0].mxu0
    %v896 = vadd.f32 0.0, %v895
    %v897 = vpop.f32.mrb[0].mxu0
    %898 = vdwg.mxu0
    %v899 = vsel %vm345, %v896, 0.0
    %v900 = vrot.slane %v899, 4
    %v901 = vadd.f32 %v899, %v900
    %v902 = vrot.slane %v901, 2
    %v903 = vadd.f32 %v901, %v902
    %v904 = vrot.slane %v903, 1
    %v905 = vadd.f32 %v903, %v904
    %v906 = vmul.f32 %v905, %v426
    %v907 = vsub.f32 %v896, %v906
    %v908 = vmul.f32 %v907, %v907
    %v909 = vsel %vm345, %v908, 0.0
    %v910 = vrot.slane %v909, 4
    %v911 = vadd.f32 %v909, %v910
    %v912 = vrot.slane %v911, 2
    %v913 = vadd.f32 %v911, %v912
    %v914 = vrot.slane %v913, 1
    %v915 = vadd.f32 %v913, %v914
    %v916 = vmul.f32 %v915, %v426
    %v917 = vadd.f32 %v916, 1e-05
    %v918 = vrsqrt.pop %v917
    %v919 = vmul.f32 %v907, %v918
    %v921 = vlaneseq
    %v922 = vshrl.u32 %v921, 7
    %v923 = vsub.s32 0, %v922
    %v924 = vrot.slane %v826, %v923
    %v926 = vmul.f32 %v919, %v924
    %v928 = vlaneseq
    %v929 = vshrl.u32 %v928, 7
    %v930 = vsub.s32 0, %v929
    %v931 = vrot.slane %v828, %v930
    %v933 = vadd.f32 %v926, %v931
    %v934 = vxor.u32 %v933, 2147483648
    %v935 = vmul.f32 %v934, 1.442695
    %v936 = vpow.pop %v935
    %v937 = vadd.f32 %v936, 1.0
    %v938 = vrcp.pop %v937
    %v939 = vmul.f32 1.0, %v938
    %v940 = vmul.f32 %v933, %v939
    %s941 = scalar_lea.vmem %s9, 96
    %v942 = vld [vmem:[%s941] sm:$0xff]
    %v943 = vld [vmem:[%s941 + $0x8] sm:$0xff]
    %v944 = vld [vmem:[%s941 + $0x10] sm:$0xff]
    %v945 = vld [vmem:[%s941 + $0x18] sm:$0xff]
    %s946 = scalar_lea.vmem [#allocation11], 3
    %v947 = vld [vmem:[%s946] sm:$0x1]
    %s948 = scalar_lea.vmem [#allocation13], 3
    %v949 = vld [vmem:[%s948] sm:$0x1]
    %950 = vmatprep.subr.mxu0 0.0
    %951 = vmatpush1.msra.mxu0 %v942
    %952 = vmatprep.subr.mxu0 0.0
    %953 = vmatpush1.msra.mxu0 %v943
    %954 = vmatprep.subr.mxu0 0.0
    %955 = vmatpush1.msra.mxu0 %v944
    %956 = vmatprep.subr.mxu0 0.0
    %957 = vmatpush1.msra.mxu0 %v945
    %958 = vmatprep.subr.mxu0 0.0
    %959 = vmatpush1.msra.mxu0 0.0
    %960 = vmatprep.subr.mxu0 0.0
    %961 = vmatpush1.msra.mxu0 0.0
    %962 = vmatprep.subr.mxu0 0.0
    %963 = vmatpush1.msra.mxu0 0.0
    %964 = vmatprep.subr.mxu0 0.0
    %965 = vmatpush1.msra.mxu0 0.0
    %966 = vmatprep.subr.mxu0 0.0
    %967 = vmatpush1.msra.mxu0 0.0
    %968 = vmatprep.subr.mxu0 0.0
    %969 = vmatpush1.msra.mxu0 0.0
    %970 = vmatprep.subr.mxu0 0.0
    %971 = vmatpush1.msra.mxu0 0.0
    %972 = vmatprep.subr.mxu0 0.0
    %973 = vmatpush1.msra.mxu0 0.0
    %974 = vmatprep.subr.mxu0 0.0
    %975 = vmatpush1.msra.mxu0 0.0
    %976 = vmatprep.subr.mxu0 0.0
    %977 = vmatpush1.msra.mxu0 0.0
    %978 = vmatprep.subr.mxu0 0.0
    %979 = vmatpush1.msra.mxu0 0.0
    %980 = vmatprep.subr.mxu0 0.0
    %981 = vmatpush1.msra.mxu0 0.0
    %982 = vmatprep.subr.mxu0 0.0
    %983 = vmatpush1.msra.mxu0 0.0
    %984 = vmatprep.subr.mxu0 0.0
    %985 = vmatpush1.msra.mxu0 0.0
    %986 = vmatprep.subr.mxu0 0.0
    %987 = vmatpush1.msra.mxu0 0.0
    %988 = vmatprep.subr.mxu0 0.0
    %989 = vmatpush1.msra.mxu0 0.0
    %990 = vmatprep.subr.mxu0 0.0
    %991 = vmatpush1.msra.mxu0 0.0
    %992 = vmatprep.subr.mxu0 0.0
    %993 = vmatpush1.msra.mxu0 0.0
    %994 = vmatprep.subr.mxu0 0.0
    %995 = vmatpush1.msra.mxu0 0.0
    %996 = vmatprep.subr.mxu0 0.0
    %997 = vmatpush1.msra.mxu0 0.0
    %998 = vmatprep.subr.mxu0 0.0
    %999 = vmatpush1.msra.mxu0 0.0
    %1000 = vmatprep.subr.mxu0 0.0
    %1001 = vmatpush1.msra.mxu0 0.0
    %1002 = vmatprep.subr.mxu0 0.0
    %1003 = vmatpush1.msra.mxu0 0.0
    %1004 = vmatprep.subr.mxu0 0.0
    %1005 = vmatpush1.msra.mxu0 0.0
    %1006 = vmatprep.subr.mxu0 0.0
    %1007 = vmatpush1.msra.mxu0 0.0
    %1008 = vmatprep.subr.mxu0 0.0
    %1009 = vmatpush1.msra.mxu0 0.0
    %1010 = vmatprep.subr.mxu0 0.0
    %1011 = vmatpush1.msra.mxu0 0.0
    %1012 = vmatprep.subr.mxu0 0.0
    %1013 = vmatpush1.msra.mxu0 0.0
    %1014 = vmatprep.mubr.f32.mxu0 0.0
    %1015 = vmatmul.mubr.f32.gmra.mrb[0].mxu0 %v705
    %v1016 = vpop.f32.mrb[0].mxu0
    %v1017 = vadd.f32 0.0, %v1016
    %v1018 = vpop.f32.mrb[0].mxu0
    %1019 = vdwg.mxu0
    %v1020 = vsel %vm345, %v1017, 0.0
    %v1021 = vrot.slane %v1020, 4
    %v1022 = vadd.f32 %v1020, %v1021
    %v1023 = vrot.slane %v1022, 2
    %v1024 = vadd.f32 %v1022, %v1023
    %v1025 = vrot.slane %v1024, 1
    %v1026 = vadd.f32 %v1024, %v1025
    %v1027 = vmul.f32 %v1026, %v426
    %v1028 = vsub.f32 %v1017, %v1027
    %v1029 = vmul.f32 %v1028, %v1028
    %v1030 = vsel %vm345, %v1029, 0.0
    %v1031 = vrot.slane %v1030, 4
    %v1032 = vadd.f32 %v1030, %v1031
    %v1033 = vrot.slane %v1032, 2
    %v1034 = vadd.f32 %v1032, %v1033
    %v1035 = vrot.slane %v1034, 1
    %v1036 = vadd.f32 %v1034, %v1035
    %v1037 = vmul.f32 %v1036, %v426
    %v1038 = vadd.f32 %v1037, 1e-05
    %v1039 = vrsqrt.pop %v1038
    %v1040 = vmul.f32 %v1028, %v1039
    %v1042 = vlaneseq
    %v1043 = vshrl.u32 %v1042, 7
    %v1044 = vsub.s32 0, %v1043
    %v1045 = vrot.slane %v947, %v1044
    %v1047 = vmul.f32 %v1040, %v1045
    %v1049 = vlaneseq
    %v1050 = vshrl.u32 %v1049, 7
    %v1051 = vsub.s32 0, %v1050
    %v1052 = vrot.slane %v949, %v1051
    %v1054 = vadd.f32 %v1047, %v1052
    %v1055 = vxor.u32 %v1054, 2147483648
    %v1056 = vmul.f32 %v1055, 1.442695
    %v1057 = vpow.pop %v1056
    %v1058 = vadd.f32 %v1057, 1.0
    %v1059 = vrcp.pop %v1058
    %v1060 = vmul.f32 1.0, %v1059
    %v1061 = vmul.f32 %v1054, %v1060
    %v1062 = vadd.f32 %v940, %v1061
    %s1063 = scalar_lea.vmem %s9, 128
    %v1064 = vld [vmem:[%s1063] sm:$0xff]
    %v1065 = vld [vmem:[%s1063 + $0x8] sm:$0xff]
    %v1066 = vld [vmem:[%s1063 + $0x10] sm:$0xff]
    %v1067 = vld [vmem:[%s1063 + $0x18] sm:$0xff]
    %s1068 = scalar_lea.vmem [#allocation11], 4
    %v1069 = vld [vmem:[%s1068] sm:$0x1]
    %s1070 = scalar_lea.vmem [#allocation13], 4
    %v1071 = vld [vmem:[%s1070] sm:$0x1]
    %1072 = vmatprep.subr.mxu0 0.0
    %1073 = vmatpush1.msra.mxu0 %v1064
    %1074 = vmatprep.subr.mxu0 0.0
    %1075 = vmatpush1.msra.mxu0 %v1065
    %1076 = vmatprep.subr.mxu0 0.0
    %1077 = vmatpush1.msra.mxu0 %v1066
    %1078 = vmatprep.subr.mxu0 0.0
    %1079 = vmatpush1.msra.mxu0 %v1067
    %1080 = vmatprep.subr.mxu0 0.0
    %1081 = vmatpush1.msra.mxu0 0.0
    %1082 = vmatprep.subr.mxu0 0.0
    %1083 = vmatpush1.msra.mxu0 0.0
    %1084 = vmatprep.subr.mxu0 0.0
    %1085 = vmatpush1.msra.mxu0 0.0
    %1086 = vmatprep.subr.mxu0 0.0
    %1087 = vmatpush1.msra.mxu0 0.0
    %1088 = vmatprep.subr.mxu0 0.0
    %1089 = vmatpush1.msra.mxu0 0.0
    %1090 = vmatprep.subr.mxu0 0.0
    %1091 = vmatpush1.msra.mxu0 0.0
    %1092 = vmatprep.subr.mxu0 0.0
    %1093 = vmatpush1.msra.mxu0 0.0
    %1094 = vmatprep.subr.mxu0 0.0
    %1095 = vmatpush1.msra.mxu0 0.0
    %1096 = vmatprep.subr.mxu0 0.0
    %1097 = vmatpush1.msra.mxu0 0.0
    %1098 = vmatprep.subr.mxu0 0.0
    %1099 = vmatpush1.msra.mxu0 0.0
    %1100 = vmatprep.subr.mxu0 0.0
    %1101 = vmatpush1.msra.mxu0 0.0
    %1102 = vmatprep.subr.mxu0 0.0
    %1103 = vmatpush1.msra.mxu0 0.0
    %1104 = vmatprep.subr.mxu0 0.0
    %1105 = vmatpush1.msra.mxu0 0.0
    %1106 = vmatprep.subr.mxu0 0.0
    %1107 = vmatpush1.msra.mxu0 0.0
    %1108 = vmatprep.subr.mxu0 0.0
    %1109 = vmatpush1.msra.mxu0 0.0
    %1110 = vmatprep.subr.mxu0 0.0
    %1111 = vmatpush1.msra.mxu0 0.0
    %1112 = vmatprep.subr.mxu0 0.0
    %1113 = vmatpush1.msra.mxu0 0.0
    %1114 = vmatprep.subr.mxu0 0.0
    %1115 = vmatpush1.msra.mxu0 0.0
    %1116 = vmatprep.subr.mxu0 0.0
    %1117 = vmatpush1.msra.mxu0 0.0
    %1118 = vmatprep.subr.mxu0 0.0
    %1119 = vmatpush1.msra.mxu0 0.0
    %1120 = vmatprep.subr.mxu0 0.0
    %1121 = vmatpush1.msra.mxu0 0.0
    %1122 = vmatprep.subr.mxu0 0.0
    %1123 = vmatpush1.msra.mxu0 0.0
    %1124 = vmatprep.subr.mxu0 0.0
    %1125 = vmatpush1.msra.mxu0 0.0
    %1126 = vmatprep.subr.mxu0 0.0
    %1127 = vmatpush1.msra.mxu0 0.0
    %1128 = vmatprep.subr.mxu0 0.0
    %1129 = vmatpush1.msra.mxu0 0.0
    %1130 = vmatprep.subr.mxu0 0.0
    %1131 = vmatpush1.msra.mxu0 0.0
    %1132 = vmatprep.subr.mxu0 0.0
    %1133 = vmatpush1.msra.mxu0 0.0
    %1134 = vmatprep.subr.mxu0 0.0
    %1135 = vmatpush1.msra.mxu0 0.0
    %1136 = vmatprep.mubr.f32.mxu0 0.0
    %1137 = vmatmul.mubr.f32.gmra.mrb[0].mxu0 %v581
    %v1138 = vpop.f32.mrb[0].mxu0
    %v1139 = vadd.f32 0.0, %v1138
    %v1140 = vpop.f32.mrb[0].mxu0
    %1141 = vdwg.mxu0
    %v1142 = vsel %vm345, %v1139, 0.0
    %v1143 = vrot.slane %v1142, 4
    %v1144 = vadd.f32 %v1142, %v1143
    %v1145 = vrot.slane %v1144, 2
    %v1146 = vadd.f32 %v1144, %v1145
    %v1147 = vrot.slane %v1146, 1
    %v1148 = vadd.f32 %v1146, %v1147
    %v1149 = vmul.f32 %v1148, %v426
    %v1150 = vsub.f32 %v1139, %v1149
    %v1151 = vmul.f32 %v1150, %v1150
    %v1152 = vsel %vm345, %v1151, 0.0
    %v1153 = vrot.slane %v1152, 4
    %v1154 = vadd.f32 %v1152, %v1153
    %v1155 = vrot.slane %v1154, 2
    %v1156 = vadd.f32 %v1154, %v1155
    %v1157 = vrot.slane %v1156, 1
    %v1158 = vadd.f32 %v1156, %v1157
    %v1159 = vmul.f32 %v1158, %v426
    %v1160 = vadd.f32 %v1159, 1e-05
    %v1161 = vrsqrt.pop %v1160
    %v1162 = vmul.f32 %v1150, %v1161
    %v1164 = vlaneseq
    %v1165 = vshrl.u32 %v1164, 7
    %v1166 = vsub.s32 0, %v1165
    %v1167 = vrot.slane %v1069, %v1166
    %v1169 = vmul.f32 %v1162, %v1167
    %v1171 = vlaneseq
    %v1172 = vshrl.u32 %v1171, 7
    %v1173 = vsub.s32 0, %v1172
    %v1174 = vrot.slane %v1071, %v1173
    %v1176 = vadd.f32 %v1169, %v1174
    %v1177 = vxor.u32 %v1176, 2147483648
    %v1178 = vmul.f32 %v1177, 1.442695
    %v1179 = vpow.pop %v1178
    %v1180 = vadd.f32 %v1179, 1.0
    %v1181 = vrcp.pop %v1180
    %v1182 = vmul.f32 1.0, %v1181
    %v1183 = vmul.f32 %v1176, %v1182
    %s1184 = scalar_lea.vmem %s9, 160
    %v1185 = vld [vmem:[%s1184] sm:$0xff]
    %v1186 = vld [vmem:[%s1184 + $0x8] sm:$0xff]
    %v1187 = vld [vmem:[%s1184 + $0x10] sm:$0xff]
    %v1188 = vld [vmem:[%s1184 + $0x18] sm:$0xff]
    %s1189 = scalar_lea.vmem [#allocation11], 5
    %v1190 = vld [vmem:[%s1189] sm:$0x1]
    %s1191 = scalar_lea.vmem [#allocation13], 5
    %v1192 = vld [vmem:[%s1191] sm:$0x1]
    %1193 = vmatprep.subr.mxu0 0.0
    %1194 = vmatpush1.msra.mxu0 %v1185
    %1195 = vmatprep.subr.mxu0 0.0
    %1196 = vmatpush1.msra.mxu0 %v1186
    %1197 = vmatprep.subr.mxu0 0.0
    %1198 = vmatpush1.msra.mxu0 %v1187
    %1199 = vmatprep.subr.mxu0 0.0
    %1200 = vmatpush1.msra.mxu0 %v1188
    %1201 = vmatprep.subr.mxu0 0.0
    %1202 = vmatpush1.msra.mxu0 0.0
    %1203 = vmatprep.subr.mxu0 0.0
    %1204 = vmatpush1.msra.mxu0 0.0
    %1205 = vmatprep.subr.mxu0 0.0
    %1206 = vmatpush1.msra.mxu0 0.0
    %1207 = vmatprep.subr.mxu0 0.0
    %1208 = vmatpush1.msra.mxu0 0.0
    %1209 = vmatprep.subr.mxu0 0.0
    %1210 = vmatpush1.msra.mxu0 0.0
    %1211 = vmatprep.subr.mxu0 0.0
    %1212 = vmatpush1.msra.mxu0 0.0
    %1213 = vmatprep.subr.mxu0 0.0
    %1214 = vmatpush1.msra.mxu0 0.0
    %1215 = vmatprep.subr.mxu0 0.0
    %1216 = vmatpush1.msra.mxu0 0.0
    %1217 = vmatprep.subr.mxu0 0.0
    %1218 = vmatpush1.msra.mxu0 0.0
    %1219 = vmatprep.subr.mxu0 0.0
    %1220 = vmatpush1.msra.mxu0 0.0
    %1221 = vmatprep.subr.mxu0 0.0
    %1222 = vmatpush1.msra.mxu0 0.0
    %1223 = vmatprep.subr.mxu0 0.0
    %1224 = vmatpush1.msra.mxu0 0.0
    %1225 = vmatprep.subr.mxu0 0.0
    %1226 = vmatpush1.msra.mxu0 0.0
    %1227 = vmatprep.subr.mxu0 0.0
    %1228 = vmatpush1.msra.mxu0 0.0
    %1229 = vmatprep.subr.mxu0 0.0
    %1230 = vmatpush1.msra.mxu0 0.0
    %1231 = vmatprep.subr.mxu0 0.0
    %1232 = vmatpush1.msra.mxu0 0.0
    %1233 = vmatprep.subr.mxu0 0.0
    %1234 = vmatpush1.msra.mxu0 0.0
    %1235 = vmatprep.subr.mxu0 0.0
    %1236 = vmatpush1.msra.mxu0 0.0
    %1237 = vmatprep.subr.mxu0 0.0
    %1238 = vmatpush1.msra.mxu0 0.0
    %1239 = vmatprep.subr.mxu0 0.0
    %1240 = vmatpush1.msra.mxu0 0.0
    %1241 = vmatprep.subr.mxu0 0.0
    %1242 = vmatpush1.msra.mxu0 0.0
    %1243 = vmatprep.subr.mxu0 0.0
    %1244 = vmatpush1.msra.mxu0 0.0
    %1245 = vmatprep.subr.mxu0 0.0
    %1246 = vmatpush1.msra.mxu0 0.0
    %1247 = vmatprep.subr.mxu0 0.0
    %1248 = vmatpush1.msra.mxu0 0.0
    %1249 = vmatprep.subr.mxu0 0.0
    %1250 = vmatpush1.msra.mxu0 0.0
    %1251 = vmatprep.subr.mxu0 0.0
    %1252 = vmatpush1.msra.mxu0 0.0
    %1253 = vmatprep.subr.mxu0 0.0
    %1254 = vmatpush1.msra.mxu0 0.0
    %1255 = vmatprep.subr.mxu0 0.0
    %1256 = vmatpush1.msra.mxu0 0.0
    %1257 = vmatprep.mubr.f32.mxu0 0.0
    %1258 = vmatmul.mubr.f32.gmra.mrb[0].mxu0 %v705
    %v1259 = vpop.f32.mrb[0].mxu0
    %v1260 = vadd.f32 0.0, %v1259
    %v1261 = vpop.f32.mrb[0].mxu0
    %1262 = vdwg.mxu0
    %v1263 = vsel %vm345, %v1260, 0.0
    %v1264 = vrot.slane %v1263, 4
    %v1265 = vadd.f32 %v1263, %v1264
    %v1266 = vrot.slane %v1265, 2
    %v1267 = vadd.f32 %v1265, %v1266
    %v1268 = vrot.slane %v1267, 1
    %v1269 = vadd.f32 %v1267, %v1268
    %v1270 = vmul.f32 %v1269, %v426
    %v1271 = vsub.f32 %v1260, %v1270
    %v1272 = vmul.f32 %v1271, %v1271
    %v1273 = vsel %vm345, %v1272, 0.0
    %v1274 = vrot.slane %v1273, 4
    %v1275 = vadd.f32 %v1273, %v1274
    %v1276 = vrot.slane %v1275, 2
    %v1277 = vadd.f32 %v1275, %v1276
    %v1278 = vrot.slane %v1277, 1
    %v1279 = vadd.f32 %v1277, %v1278
    %v1280 = vmul.f32 %v1279, %v426
    %v1281 = vadd.f32 %v1280, 1e-05
    %v1282 = vrsqrt.pop %v1281
    %v1283 = vmul.f32 %v1271, %v1282
    %v1285 = vlaneseq
    %v1286 = vshrl.u32 %v1285, 7
    %v1287 = vsub.s32 0, %v1286
    %v1288 = vrot.slane %v1190, %v1287
    %v1290 = vmul.f32 %v1283, %v1288
    %v1292 = vlaneseq
    %v1293 = vshrl.u32 %v1292, 7
    %v1294 = vsub.s32 0, %v1293
    %v1295 = vrot.slane %v1192, %v1294
    %v1297 = vadd.f32 %v1290, %v1295
    %v1298 = vxor.u32 %v1297, 2147483648
    %v1299 = vmul.f32 %v1298, 1.442695
    %v1300 = vpow.pop %v1299
    %v1301 = vadd.f32 %v1300, 1.0
    %v1302 = vrcp.pop %v1301
    %v1303 = vmul.f32 1.0, %v1302
    %v1304 = vmul.f32 %v1297, %v1303
    %v1305 = vadd.f32 %v1183, %v1304
    %v1306 = vld [vmem:[%s12] sm:$0xff]
    %v1307 = vld [vmem:[%s12 + $0x8] sm:$0xff]
    %v1308 = vld [vmem:[%s12 + $0x10] sm:$0xff]
    %v1309 = vld [vmem:[%s12 + $0x18] sm:$0xff]
    %v1310 = vld [vmem:[#allocation14] sm:$0x1]
    %v1311 = vld [vmem:[#allocation16] sm:$0x1]
    %v1312 = vld [vmem:[%s15] sm:$0xff]
    %v1313 = vld [vmem:[%s15 + $0x8] sm:$0xff]
    %v1314 = vld [vmem:[%s15 + $0x10] sm:$0xff]
    %v1315 = vld [vmem:[%s15 + $0x18] sm:$0xff]
    %v1316 = vld [vmem:[%s15 + $0x20] sm:$0xff]
    %v1317 = vld [vmem:[%s15 + $0x28] sm:$0xff]
    %v1318 = vld [vmem:[%s15 + $0x30] sm:$0xff]
    %v1319 = vld [vmem:[%s15 + $0x38] sm:$0xff]
    %v1320 = vld [vmem:[%s15 + $0x40] sm:$0xff]
    %v1321 = vld [vmem:[%s15 + $0x48] sm:$0xff]
    %v1322 = vld [vmem:[%s15 + $0x50] sm:$0xff]
    %v1323 = vld [vmem:[%s15 + $0x58] sm:$0xff]
    %v1324 = vld [vmem:[#allocation17] sm:$0x1]
    %v1325 = vld [vmem:[#allocation19] sm:$0x1]
    %1326 = vmatprep.subr.mxu0 0.0
    %1327 = vmatpush1.msra.mxu0 %v1306
    %1328 = vmatprep.subr.mxu0 0.0
    %1329 = vmatpush1.msra.mxu0 %v1307
    %1330 = vmatprep.subr.mxu0 0.0
    %1331 = vmatpush1.msra.mxu0 %v1308
    %1332 = vmatprep.subr.mxu0 0.0
    %1333 = vmatpush1.msra.mxu0 %v1309
    %1334 = vmatprep.subr.mxu0 0.0
    %1335 = vmatpush1.msra.mxu0 0.0
    %1336 = vmatprep.subr.mxu0 0.0
    %1337 = vmatpush1.msra.mxu0 0.0
    %1338 = vmatprep.subr.mxu0 0.0
    %1339 = vmatpush1.msra.mxu0 0.0
    %1340 = vmatprep.subr.mxu0 0.0
    %1341 = vmatpush1.msra.mxu0 0.0
    %1342 = vmatprep.subr.mxu0 0.0
    %1343 = vmatpush1.msra.mxu0 0.0
    %1344 = vmatprep.subr.mxu0 0.0
    %1345 = vmatpush1.msra.mxu0 0.0
    %1346 = vmatprep.subr.mxu0 0.0
    %1347 = vmatpush1.msra.mxu0 0.0
    %1348 = vmatprep.subr.mxu0 0.0
    %1349 = vmatpush1.msra.mxu0 0.0
    %1350 = vmatprep.subr.mxu0 0.0
    %1351 = vmatpush1.msra.mxu0 0.0
    %1352 = vmatprep.subr.mxu0 0.0
    %1353 = vmatpush1.msra.mxu0 0.0
    %1354 = vmatprep.subr.mxu0 0.0
    %1355 = vmatpush1.msra.mxu0 0.0
    %1356 = vmatprep.subr.mxu0 0.0
    %1357 = vmatpush1.msra.mxu0 0.0
    %1358 = vmatprep.subr.mxu0 0.0
    %1359 = vmatpush1.msra.mxu0 0.0
    %1360 = vmatprep.subr.mxu0 0.0
    %1361 = vmatpush1.msra.mxu0 0.0
    %1362 = vmatprep.subr.mxu0 0.0
    %1363 = vmatpush1.msra.mxu0 0.0
    %1364 = vmatprep.subr.mxu0 0.0
    %1365 = vmatpush1.msra.mxu0 0.0
    %1366 = vmatprep.subr.mxu0 0.0
    %1367 = vmatpush1.msra.mxu0 0.0
    %1368 = vmatprep.subr.mxu0 0.0
    %1369 = vmatpush1.msra.mxu0 0.0
    %1370 = vmatprep.subr.mxu0 0.0
    %1371 = vmatpush1.msra.mxu0 0.0
    %1372 = vmatprep.subr.mxu0 0.0
    %1373 = vmatpush1.msra.mxu0 0.0
    %1374 = vmatprep.subr.mxu0 0.0
    %1375 = vmatpush1.msra.mxu0 0.0
    %1376 = vmatprep.subr.mxu0 0.0
    %1377 = vmatpush1.msra.mxu0 0.0
    %1378 = vmatprep.subr.mxu0 0.0
    %1379 = vmatpush1.msra.mxu0 0.0
    %1380 = vmatprep.subr.mxu0 0.0
    %1381 = vmatpush1.msra.mxu0 0.0
    %1382 = vmatprep.subr.mxu0 0.0
    %1383 = vmatpush1.msra.mxu0 0.0
    %1384 = vmatprep.subr.mxu0 0.0
    %1385 = vmatpush1.msra.mxu0 0.0
    %1386 = vmatprep.subr.mxu0 0.0
    %1387 = vmatpush1.msra.mxu0 0.0
    %1388 = vmatprep.subr.mxu0 0.0
    %1389 = vmatpush1.msra.mxu0 0.0
    %1390 = vmatprep.mubr.f32.mxu0 0.0
    %1391 = vmatmul.mubr.f32.gmra.mrb[0].mxu0 %v347
    %v1392 = vpop.f32.mrb[0].mxu0
    %v1393 = vadd.f32 0.0, %v1392
    %v1394 = vpop.f32.mrb[0].mxu0
    %1395 = vdwg.mxu0
    %v1396 = vsel %vm345, %v1393, 0.0
    %v1397 = vrot.slane %v1396, 4
    %v1398 = vadd.f32 %v1396, %v1397
    %v1399 = vrot.slane %v1398, 2
    %v1400 = vadd.f32 %v1398, %v1399
    %v1401 = vrot.slane %v1400, 1
    %v1402 = vadd.f32 %v1400, %v1401
    %v1403 = vmul.f32 %v1402, %v426
    %v1404 = vsub.f32 %v1393, %v1403
    %v1405 = vmul.f32 %v1404, %v1404
    %v1406 = vsel %vm345, %v1405, 0.0
    %v1407 = vrot.slane %v1406, 4
    %v1408 = vadd.f32 %v1406, %v1407
    %v1409 = vrot.slane %v1408, 2
    %v1410 = vadd.f32 %v1408, %v1409
    %v1411 = vrot.slane %v1410, 1
    %v1412 = vadd.f32 %v1410, %v1411
    %v1413 = vmul.f32 %v1412, %v426
    %v1414 = vadd.f32 %v1413, 1e-05
    %v1415 = vrsqrt.pop %v1414
    %v1416 = vmul.f32 %v1404, %v1415
    %v1418 = vlaneseq
    %v1419 = vshrl.u32 %v1418, 7
    %v1420 = vsub.s32 0, %v1419
    %v1421 = vrot.slane %v1310, %v1420
    %v1423 = vmul.f32 %v1416, %v1421
    %v1425 = vlaneseq
    %v1426 = vshrl.u32 %v1425, 7
    %v1427 = vsub.s32 0, %v1426
    %v1428 = vrot.slane %v1311, %v1427
    %v1430 = vadd.f32 %v1423, %v1428
    %v1431 = vxor.u32 %v1430, 2147483648
    %v1432 = vmul.f32 %v1431, 1.442695
    %v1433 = vpow.pop %v1432
    %v1434 = vadd.f32 %v1433, 1.0
    %v1435 = vrcp.pop %v1434
    %v1436 = vmul.f32 1.0, %v1435
    %v1437 = vmul.f32 %v1430, %v1436
    %v1439 = vsel %vm345, %v1062, 0
    %1441 = vmatprep.subr.mxu0 0.0
    %1442 = vmatpush1.msra.mxu0 %v1316
    %1443 = vmatprep.subr.mxu0 0.0
    %1444 = vmatpush1.msra.mxu0 %v1317
    %1445 = vmatprep.subr.mxu0 0.0
    %1446 = vmatpush1.msra.mxu0 %v1318
    %1447 = vmatprep.subr.mxu0 0.0
    %1448 = vmatpush1.msra.mxu0 %v1319
    %1449 = vmatprep.subr.mxu0 0.0
    %1450 = vmatpush1.msra.mxu0 0.0
    %1451 = vmatprep.subr.mxu0 0.0
    %1452 = vmatpush1.msra.mxu0 0.0
    %1453 = vmatprep.subr.mxu0 0.0
    %1454 = vmatpush1.msra.mxu0 0.0
    %1455 = vmatprep.subr.mxu0 0.0
    %1456 = vmatpush1.msra.mxu0 0.0
    %1457 = vmatprep.subr.mxu0 0.0
    %1458 = vmatpush1.msra.mxu0 0.0
    %1459 = vmatprep.subr.mxu0 0.0
    %1460 = vmatpush1.msra.mxu0 0.0
    %1461 = vmatprep.subr.mxu0 0.0
    %1462 = vmatpush1.msra.mxu0 0.0
    %1463 = vmatprep.subr.mxu0 0.0
    %1464 = vmatpush1.msra.mxu0 0.0
    %1465 = vmatprep.subr.mxu0 0.0
    %1466 = vmatpush1.msra.mxu0 0.0
    %1467 = vmatprep.subr.mxu0 0.0
    %1468 = vmatpush1.msra.mxu0 0.0
    %1469 = vmatprep.subr.mxu0 0.0
    %1470 = vmatpush1.msra.mxu0 0.0
    %1471 = vmatprep.subr.mxu0 0.0
    %1472 = vmatpush1.msra.mxu0 0.0
    %1473 = vmatprep.subr.mxu0 0.0
    %1474 = vmatpush1.msra.mxu0 0.0
    %1475 = vmatprep.subr.mxu0 0.0
    %1476 = vmatpush1.msra.mxu0 0.0
    %1477 = vmatprep.subr.mxu0 0.0
    %1478 = vmatpush1.msra.mxu0 0.0
    %1479 = vmatprep.subr.mxu0 0.0
    %1480 = vmatpush1.msra.mxu0 0.0
    %1481 = vmatprep.subr.mxu0 0.0
    %1482 = vmatpush1.msra.mxu0 0.0
    %1483 = vmatprep.subr.mxu0 0.0
    %1484 = vmatpush1.msra.mxu0 0.0
    %1485 = vmatprep.subr.mxu0 0.0
    %1486 = vmatpush1.msra.mxu0 0.0
    %1487 = vmatprep.subr.mxu0 0.0
    %1488 = vmatpush1.msra.mxu0 0.0
    %1489 = vmatprep.subr.mxu0 0.0
    %1490 = vmatpush1.msra.mxu0 0.0
    %1491 = vmatprep.subr.mxu0 0.0
    %1492 = vmatpush1.msra.mxu0 0.0
    %1493 = vmatprep.subr.mxu0 0.0
    %1494 = vmatpush1.msra.mxu0 0.0
    %1495 = vmatprep.subr.mxu0 0.0
    %1496 = vmatpush1.msra.mxu0 0.0
    %1497 = vmatprep.subr.mxu0 0.0
    %1498 = vmatpush1.msra.mxu0 0.0
    %1499 = vmatprep.subr.mxu0 0.0
    %1500 = vmatpush1.msra.mxu0 0.0
    %1501 = vmatprep.subr.mxu0 0.0
    %1502 = vmatpush1.msra.mxu0 0.0
    %1503 = vmatprep.subr.mxu0 0.0
    %1504 = vmatpush1.msra.mxu0 0.0
    %1505 = vmatprep.mubr.f32.mxu0 0.0
    %1506 = vmatmul.mubr.f32.gmra.mrb[0].mxu0 %v1439
    %v1507 = vpop.f32.mrb[0].mxu0
    %v1508 = vadd.f32 0.0, %v1507
    %v1509 = vpop.f32.mrb[0].mxu0
    %1510 = vdwg.mxu0
    %v1512 = vsel %vm345, %v819, 0
    %1514 = vmatprep.subr.mxu0 0.0
    %1515 = vmatpush1.msra.mxu0 %v1312
    %1516 = vmatprep.subr.mxu0 0.0
    %1517 = vmatpush1.msra.mxu0 %v1313
    %1518 = vmatprep.subr.mxu0 0.0
    %1519 = vmatpush1.msra.mxu0 %v1314
    %1520 = vmatprep.subr.mxu0 0.0
    %1521 = vmatpush1.msra.mxu0 %v1315
    %1522 = vmatprep.subr.mxu0 0.0
    %1523 = vmatpush1.msra.mxu0 0.0
    %1524 = vmatprep.subr.mxu0 0.0
    %1525 = vmatpush1.msra.mxu0 0.0
    %1526 = vmatprep.subr.mxu0 0.0
    %1527 = vmatpush1.msra.mxu0 0.0
    %1528 = vmatprep.subr.mxu0 0.0
    %1529 = vmatpush1.msra.mxu0 0.0
    %1530 = vmatprep.subr.mxu0 0.0
    %1531 = vmatpush1.msra.mxu0 0.0
    %1532 = vmatprep.subr.mxu0 0.0
    %1533 = vmatpush1.msra.mxu0 0.0
    %1534 = vmatprep.subr.mxu0 0.0
    %1535 = vmatpush1.msra.mxu0 0.0
    %1536 = vmatprep.subr.mxu0 0.0
    %1537 = vmatpush1.msra.mxu0 0.0
    %1538 = vmatprep.subr.mxu0 0.0
    %1539 = vmatpush1.msra.mxu0 0.0
    %1540 = vmatprep.subr.mxu0 0.0
    %1541 = vmatpush1.msra.mxu0 0.0
    %1542 = vmatprep.subr.mxu0 0.0
    %1543 = vmatpush1.msra.mxu0 0.0
    %1544 = vmatprep.subr.mxu0 0.0
    %1545 = vmatpush1.msra.mxu0 0.0
    %1546 = vmatprep.subr.mxu0 0.0
    %1547 = vmatpush1.msra.mxu0 0.0
    %1548 = vmatprep.subr.mxu0 0.0
    %1549 = vmatpush1.msra.mxu0 0.0
    %1550 = vmatprep.subr.mxu0 0.0
    %1551 = vmatpush1.msra.mxu0 0.0
    %1552 = vmatprep.subr.mxu0 0.0
    %1553 = vmatpush1.msra.mxu0 0.0
    %1554 = vmatprep.subr.mxu0 0.0
    %1555 = vmatpush1.msra.mxu0 0.0
    %1556 = vmatprep.subr.mxu0 0.0
    %1557 = vmatpush1.msra.mxu0 0.0
    %1558 = vmatprep.subr.mxu0 0.0
    %1559 = vmatpush1.msra.mxu0 0.0
    %1560 = vmatprep.subr.mxu0 0.0
    %1561 = vmatpush1.msra.mxu0 0.0
    %1562 = vmatprep.subr.mxu0 0.0
    %1563 = vmatpush1.msra.mxu0 0.0
    %1564 = vmatprep.subr.mxu0 0.0
    %1565 = vmatpush1.msra.mxu0 0.0
    %1566 = vmatprep.subr.mxu0 0.0
    %1567 = vmatpush1.msra.mxu0 0.0
    %1568 = vmatprep.subr.mxu0 0.0
    %1569 = vmatpush1.msra.mxu0 0.0
    %1570 = vmatprep.subr.mxu0 0.0
    %1571 = vmatpush1.msra.mxu0 0.0
    %1572 = vmatprep.subr.mxu0 0.0
    %1573 = vmatpush1.msra.mxu0 0.0
    %1574 = vmatprep.subr.mxu0 0.0
    %1575 = vmatpush1.msra.mxu0 0.0
    %1576 = vmatprep.subr.mxu0 0.0
    %1577 = vmatpush1.msra.mxu0 0.0
    %1578 = vmatprep.mubr.f32.mxu0 0.0
    %1579 = vmatmul.mubr.f32.gmra.mrb[0].mxu0 %v1512
    %v1580 = vpop.f32.mrb[0].mxu0
    %v1581 = vadd.f32 %v1508, %v1580
    %v1582 = vpop.f32.mrb[0].mxu0
    %1583 = vdwg.mxu0
    %v1585 = vsel %vm345, %v1305, 0
    %1587 = vmatprep.subr.mxu0 0.0
    %1588 = vmatpush1.msra.mxu0 %v1320
    %1589 = vmatprep.subr.mxu0 0.0
    %1590 = vmatpush1.msra.mxu0 %v1321
    %1591 = vmatprep.subr.mxu0 0.0
    %1592 = vmatpush1.msra.mxu0 %v1322
    %1593 = vmatprep.subr.mxu0 0.0
    %1594 = vmatpush1.msra.mxu0 %v1323
    %1595 = vmatprep.subr.mxu0 0.0
    %1596 = vmatpush1.msra.mxu0 0.0
    %1597 = vmatprep.subr.mxu0 0.0
    %1598 = vmatpush1.msra.mxu0 0.0
    %1599 = vmatprep.subr.mxu0 0.0
    %1600 = vmatpush1.msra.mxu0 0.0
    %1601 = vmatprep.subr.mxu0 0.0
    %1602 = vmatpush1.msra.mxu0 0.0
    %1603 = vmatprep.subr.mxu0 0.0
    %1604 = vmatpush1.msra.mxu0 0.0
    %1605 = vmatprep.subr.mxu0 0.0
    %1606 = vmatpush1.msra.mxu0 0.0
    %1607 = vmatprep.subr.mxu0 0.0
    %1608 = vmatpush1.msra.mxu0 0.0
    %1609 = vmatprep.subr.mxu0 0.0
    %1610 = vmatpush1.msra.mxu0 0.0
    %1611 = vmatprep.subr.mxu0 0.0
    %1612 = vmatpush1.msra.mxu0 0.0
    %1613 = vmatprep.subr.mxu0 0.0
    %1614 = vmatpush1.msra.mxu0 0.0
    %1615 = vmatprep.subr.mxu0 0.0
    %1616 = vmatpush1.msra.mxu0 0.0
    %1617 = vmatprep.subr.mxu0 0.0
    %1618 = vmatpush1.msra.mxu0 0.0
    %1619 = vmatprep.subr.mxu0 0.0
    %1620 = vmatpush1.msra.mxu0 0.0
    %1621 = vmatprep.subr.mxu0 0.0
    %1622 = vmatpush1.msra.mxu0 0.0
    %1623 = vmatprep.subr.mxu0 0.0
    %1624 = vmatpush1.msra.mxu0 0.0
    %1625 = vmatprep.subr.mxu0 0.0
    %1626 = vmatpush1.msra.mxu0 0.0
    %1627 = vmatprep.subr.mxu0 0.0
    %1628 = vmatpush1.msra.mxu0 0.0
    %1629 = vmatprep.subr.mxu0 0.0
    %1630 = vmatpush1.msra.mxu0 0.0
    %1631 = vmatprep.subr.mxu0 0.0
    %1632 = vmatpush1.msra.mxu0 0.0
    %1633 = vmatprep.subr.mxu0 0.0
    %1634 = vmatpush1.msra.mxu0 0.0
    %1635 = vmatprep.subr.mxu0 0.0
    %1636 = vmatpush1.msra.mxu0 0.0
    %1637 = vmatprep.subr.mxu0 0.0
    %1638 = vmatpush1.msra.mxu0 0.0
    %1639 = vmatprep.subr.mxu0 0.0
    %1640 = vmatpush1.msra.mxu0 0.0
    %1641 = vmatprep.subr.mxu0 0.0
    %1642 = vmatpush1.msra.mxu0 0.0
    %1643 = vmatprep.subr.mxu0 0.0
    %1644 = vmatpush1.msra.mxu0 0.0
    %1645 = vmatprep.subr.mxu0 0.0
    %1646 = vmatpush1.msra.mxu0 0.0
    %1647 = vmatprep.subr.mxu0 0.0
    %1648 = vmatpush1.msra.mxu0 0.0
    %1649 = vmatprep.subr.mxu0 0.0
    %1650 = vmatpush1.msra.mxu0 0.0
    %1651 = vmatprep.mubr.f32.mxu0 0.0
    %1652 = vmatmul.mubr.f32.gmra.mrb[0].mxu0 %v1585
    %v1653 = vpop.f32.mrb[0].mxu0
    %v1654 = vadd.f32 0.0, %v1653
    %v1655 = vpop.f32.mrb[0].mxu0
    %1656 = vdwg.mxu0
    %v1657 = vadd.f32 %v1581, %v1654
    %v1658 = vsel %vm345, %v1657, 0.0
    %v1659 = vrot.slane %v1658, 4
    %v1660 = vadd.f32 %v1658, %v1659
    %v1661 = vrot.slane %v1660, 2
    %v1662 = vadd.f32 %v1660, %v1661
    %v1663 = vrot.slane %v1662, 1
    %v1664 = vadd.f32 %v1662, %v1663
    %v1665 = vmul.f32 %v1664, %v426
    %v1666 = vsub.f32 %v1657, %v1665
    %v1667 = vmul.f32 %v1666, %v1666
    %v1668 = vsel %vm345, %v1667, 0.0
    %v1669 = vrot.slane %v1668, 4
    %v1670 = vadd.f32 %v1668, %v1669
    %v1671 = vrot.slane %v1670, 2
    %v1672 = vadd.f32 %v1670, %v1671
    %v1673 = vrot.slane %v1672, 1
    %v1674 = vadd.f32 %v1672, %v1673
    %v1675 = vmul.f32 %v1674, %v426
    %v1676 = vadd.f32 %v1675, 1e-05
    %v1677 = vrsqrt.pop %v1676
    %v1678 = vmul.f32 %v1666, %v1677
    %v1680 = vlaneseq
    %v1681 = vshrl.u32 %v1680, 7
    %v1682 = vsub.s32 0, %v1681
    %v1683 = vrot.slane %v1324, %v1682
    %v1685 = vmul.f32 %v1678, %v1683
    %v1687 = vlaneseq
    %v1688 = vshrl.u32 %v1687, 7
    %v1689 = vsub.s32 0, %v1688
    %v1690 = vrot.slane %v1325, %v1689
    %v1692 = vadd.f32 %v1685, %v1690
    %v1693 = vxor.u32 %v1692, 2147483648
    %v1694 = vmul.f32 %v1693, 1.442695
    %v1695 = vpow.pop %v1694
    %v1696 = vadd.f32 %v1695, 1.0
    %v1697 = vrcp.pop %v1696
    %v1698 = vmul.f32 1.0, %v1697
    %v1699 = vmul.f32 %v1692, %v1698
    %v1700 = vld [vmem:[#allocation20] sm:$0xff]
    %v1701 = vld [vmem:[#allocation20 + $0x8] sm:$0xff]
    %v1702 = vld [vmem:[#allocation20 + $0x10] sm:$0xff]
    %v1703 = vld [vmem:[#allocation20 + $0x18] sm:$0xff]
    %v1704 = vld [vmem:[#allocation22] sm:$0x1]
    %v1705 = vld [vmem:[#allocation23] sm:$0x1]
    %v1707 = vsel %vm345, %v1437, 0
    %1709 = vmatprep.subr.mxu0 0.0
    %1710 = vmatpush1.msra.mxu0 %v1700
    %1711 = vmatprep.subr.mxu0 0.0
    %1712 = vmatpush1.msra.mxu0 %v1701
    %1713 = vmatprep.subr.mxu0 0.0
    %1714 = vmatpush1.msra.mxu0 %v1702
    %1715 = vmatprep.subr.mxu0 0.0
    %1716 = vmatpush1.msra.mxu0 %v1703
    %1717 = vmatprep.subr.mxu0 0.0
    %1718 = vmatpush1.msra.mxu0 0.0
    %1719 = vmatprep.subr.mxu0 0.0
    %1720 = vmatpush1.msra.mxu0 0.0
    %1721 = vmatprep.subr.mxu0 0.0
    %1722 = vmatpush1.msra.mxu0 0.0
    %1723 = vmatprep.subr.mxu0 0.0
    %1724 = vmatpush1.msra.mxu0 0.0
    %1725 = vmatprep.subr.mxu0 0.0
    %1726 = vmatpush1.msra.mxu0 0.0
    %1727 = vmatprep.subr.mxu0 0.0
    %1728 = vmatpush1.msra.mxu0 0.0
    %1729 = vmatprep.subr.mxu0 0.0
    %1730 = vmatpush1.msra.mxu0 0.0
    %1731 = vmatprep.subr.mxu0 0.0
    %1732 = vmatpush1.msra.mxu0 0.0
    %1733 = vmatprep.subr.mxu0 0.0
    %1734 = vmatpush1.msra.mxu0 0.0
    %1735 = vmatprep.subr.mxu0 0.0
    %1736 = vmatpush1.msra.mxu0 0.0
    %1737 = vmatprep.subr.mxu0 0.0
    %1738 = vmatpush1.msra.mxu0 0.0
    %1739 = vmatprep.subr.mxu0 0.0
    %1740 = vmatpush1.msra.mxu0 0.0
    %1741 = vmatprep.subr.mxu0 0.0
    %1742 = vmatpush1.msra.mxu0 0.0
    %1743 = vmatprep.subr.mxu0 0.0
    %1744 = vmatpush1.msra.mxu0 0.0
    %1745 = vmatprep.subr.mxu0 0.0
    %1746 = vmatpush1.msra.mxu0 0.0
    %1747 = vmatprep.subr.mxu0 0.0
    %1748 = vmatpush1.msra.mxu0 0.0
    %1749 = vmatprep.subr.mxu0 0.0
    %1750 = vmatpush1.msra.mxu0 0.0
    %1751 = vmatprep.subr.mxu0 0.0
    %1752 = vmatpush1.msra.mxu0 0.0
    %1753 = vmatprep.subr.mxu0 0.0
    %1754 = vmatpush1.msra.mxu0 0.0
    %1755 = vmatprep.subr.mxu0 0.0
    %1756 = vmatpush1.msra.mxu0 0.0
    %1757 = vmatprep.subr.mxu0 0.0
    %1758 = vmatpush1.msra.mxu0 0.0
    %1759 = vmatprep.subr.mxu0 0.0
    %1760 = vmatpush1.msra.mxu0 0.0
    %1761 = vmatprep.subr.mxu0 0.0
    %1762 = vmatpush1.msra.mxu0 0.0
    %1763 = vmatprep.subr.mxu0 0.0
    %1764 = vmatpush1.msra.mxu0 0.0
    %1765 = vmatprep.subr.mxu0 0.0
    %1766 = vmatpush1.msra.mxu0 0.0
    %1767 = vmatprep.subr.mxu0 0.0
    %1768 = vmatpush1.msra.mxu0 0.0
    %1769 = vmatprep.subr.mxu0 0.0
    %1770 = vmatpush1.msra.mxu0 0.0
    %1771 = vmatprep.subr.mxu0 0.0
    %1772 = vmatpush1.msra.mxu0 0.0
    %1773 = vmatprep.mubr.f32.mxu0 0.0
    %1774 = vmatmul.mubr.f32.gmra.mrb[0].mxu0 %v1707
    %v1775 = vpop.f32.mrb[0].mxu0
    %v1776 = vadd.f32 0.0, %v1775
    %v1777 = vpop.f32.mrb[0].mxu0
    %1778 = vdwg.mxu0
    %v1779 = vsel %vm345, %v1776, 0.0
    %v1780 = vrot.slane %v1779, 4
    %v1781 = vadd.f32 %v1779, %v1780
    %v1782 = vrot.slane %v1781, 2
    %v1783 = vadd.f32 %v1781, %v1782
    %v1784 = vrot.slane %v1783, 1
    %v1785 = vadd.f32 %v1783, %v1784
    %v1786 = vmul.f32 %v1785, %v426
    %v1787 = vsub.f32 %v1776, %v1786
    %v1788 = vmul.f32 %v1787, %v1787
    %v1789 = vsel %vm345, %v1788, 0.0
    %v1790 = vrot.slane %v1789, 4
    %v1791 = vadd.f32 %v1789, %v1790
    %v1792 = vrot.slane %v1791, 2
    %v1793 = vadd.f32 %v1791, %v1792
    %v1794 = vrot.slane %v1793, 1
    %v1795 = vadd.f32 %v1793, %v1794
    %v1796 = vmul.f32 %v1795, %v426
    %v1797 = vadd.f32 %v1796, 1e-05
    %v1798 = vrsqrt.pop %v1797
    %v1799 = vmul.f32 %v1787, %v1798
    %v1801 = vlaneseq
    %v1802 = vshrl.u32 %v1801, 7
    %v1803 = vsub.s32 0, %v1802
    %v1804 = vrot.slane %v1704, %v1803
    %v1806 = vmul.f32 %v1799, %v1804
    %v1808 = vlaneseq
    %v1809 = vshrl.u32 %v1808, 7
    %v1810 = vsub.s32 0, %v1809
    %v1811 = vrot.slane %v1705, %v1810
    %v1813 = vadd.f32 %v1806, %v1811
    %v1814 = vxor.u32 %v1813, 2147483648
    %v1815 = vmul.f32 %v1814, 1.442695
    %v1816 = vpow.pop %v1815
    %v1817 = vadd.f32 %v1816, 1.0
    %v1818 = vrcp.pop %v1817
    %v1819 = vmul.f32 1.0, %v1818
    %v1820 = vmul.f32 %v1813, %v1819
    %s1821 = scalar_lea.vmem [#allocation20], 32
    %v1822 = vld [vmem:[%s1821] sm:$0xff]
    %v1823 = vld [vmem:[%s1821 + $0x8] sm:$0xff]
    %v1824 = vld [vmem:[%s1821 + $0x10] sm:$0xff]
    %v1825 = vld [vmem:[%s1821 + $0x18] sm:$0xff]
    %s1826 = scalar_lea.vmem [#allocation22], 1
    %v1827 = vld [vmem:[%s1826] sm:$0x1]
    %s1828 = scalar_lea.vmem [#allocation23], 1
    %v1829 = vld [vmem:[%s1828] sm:$0x1]
    %v1831 = vsel %vm345, %v1699, 0
    %1833 = vmatprep.subr.mxu0 0.0
    %1834 = vmatpush1.msra.mxu0 %v1822
    %1835 = vmatprep.subr.mxu0 0.0
    %1836 = vmatpush1.msra.mxu0 %v1823
    %1837 = vmatprep.subr.mxu0 0.0
    %1838 = vmatpush1.msra.mxu0 %v1824
    %1839 = vmatprep.subr.mxu0 0.0
    %1840 = vmatpush1.msra.mxu0 %v1825
    %1841 = vmatprep.subr.mxu0 0.0
    %1842 = vmatpush1.msra.mxu0 0.0
    %1843 = vmatprep.subr.mxu0 0.0
    %1844 = vmatpush1.msra.mxu0 0.0
    %1845 = vmatprep.subr.mxu0 0.0
    %1846 = vmatpush1.msra.mxu0 0.0
    %1847 = vmatprep.subr.mxu0 0.0
    %1848 = vmatpush1.msra.mxu0 0.0
    %1849 = vmatprep.subr.mxu0 0.0
    %1850 = vmatpush1.msra.mxu0 0.0
    %1851 = vmatprep.subr.mxu0 0.0
    %1852 = vmatpush1.msra.mxu0 0.0
    %1853 = vmatprep.subr.mxu0 0.0
    %1854 = vmatpush1.msra.mxu0 0.0
    %1855 = vmatprep.subr.mxu0 0.0
    %1856 = vmatpush1.msra.mxu0 0.0
    %1857 = vmatprep.subr.mxu0 0.0
    %1858 = vmatpush1.msra.mxu0 0.0
    %1859 = vmatprep.subr.mxu0 0.0
    %1860 = vmatpush1.msra.mxu0 0.0
    %1861 = vmatprep.subr.mxu0 0.0
    %1862 = vmatpush1.msra.mxu0 0.0
    %1863 = vmatprep.subr.mxu0 0.0
    %1864 = vmatpush1.msra.mxu0 0.0
    %1865 = vmatprep.subr.mxu0 0.0
    %1866 = vmatpush1.msra.mxu0 0.0
    %1867 = vmatprep.subr.mxu0 0.0
    %1868 = vmatpush1.msra.mxu0 0.0
    %1869 = vmatprep.subr.mxu0 0.0
    %1870 = vmatpush1.msra.mxu0 0.0
    %1871 = vmatprep.subr.mxu0 0.0
    %1872 = vmatpush1.msra.mxu0 0.0
    %1873 = vmatprep.subr.mxu0 0.0
    %1874 = vmatpush1.msra.mxu0 0.0
    %1875 = vmatprep.subr.mxu0 0.0
    %1876 = vmatpush1.msra.mxu0 0.0
    %1877 = vmatprep.subr.mxu0 0.0
    %1878 = vmatpush1.msra.mxu0 0.0
    %1879 = vmatprep.subr.mxu0 0.0
    %1880 = vmatpush1.msra.mxu0 0.0
    %1881 = vmatprep.subr.mxu0 0.0
    %1882 = vmatpush1.msra.mxu0 0.0
    %1883 = vmatprep.subr.mxu0 0.0
    %1884 = vmatpush1.msra.mxu0 0.0
    %1885 = vmatprep.subr.mxu0 0.0
    %1886 = vmatpush1.msra.mxu0 0.0
    %1887 = vmatprep.subr.mxu0 0.0
    %1888 = vmatpush1.msra.mxu0 0.0
    %1889 = vmatprep.subr.mxu0 0.0
    %1890 = vmatpush1.msra.mxu0 0.0
    %1891 = vmatprep.subr.mxu0 0.0
    %1892 = vmatpush1.msra.mxu0 0.0
    %1893 = vmatprep.subr.mxu0 0.0
    %1894 = vmatpush1.msra.mxu0 0.0
    %1895 = vmatprep.subr.mxu0 0.0
    %1896 = vmatpush1.msra.mxu0 0.0
    %1897 = vmatprep.mubr.f32.mxu0 0.0
    %1898 = vmatmul.mubr.f32.gmra.mrb[0].mxu0 %v1831
    %v1899 = vpop.f32.mrb[0].mxu0
    %v1900 = vadd.f32 0.0, %v1899
    %v1901 = vpop.f32.mrb[0].mxu0
    %1902 = vdwg.mxu0
    %v1903 = vsel %vm345, %v1900, 0.0
    %v1904 = vrot.slane %v1903, 4
    %v1905 = vadd.f32 %v1903, %v1904
    %v1906 = vrot.slane %v1905, 2
    %v1907 = vadd.f32 %v1905, %v1906
    %v1908 = vrot.slane %v1907, 1
    %v1909 = vadd.f32 %v1907, %v1908
    %v1910 = vmul.f32 %v1909, %v426
    %v1911 = vsub.f32 %v1900, %v1910
    %v1912 = vmul.f32 %v1911, %v1911
    %v1913 = vsel %vm345, %v1912, 0.0
    %v1914 = vrot.slane %v1913, 4
    %v1915 = vadd.f32 %v1913, %v1914
    %v1916 = vrot.slane %v1915, 2
    %v1917 = vadd.f32 %v1915, %v1916
    %v1918 = vrot.slane %v1917, 1
    %v1919 = vadd.f32 %v1917, %v1918
    %v1920 = vmul.f32 %v1919, %v426
    %v1921 = vadd.f32 %v1920, 1e-05
    %v1922 = vrsqrt.pop %v1921
    %v1923 = vmul.f32 %v1911, %v1922
    %v1925 = vlaneseq
    %v1926 = vshrl.u32 %v1925, 7
    %v1927 = vsub.s32 0, %v1926
    %v1928 = vrot.slane %v1827, %v1927
    %v1930 = vmul.f32 %v1923, %v1928
    %v1932 = vlaneseq
    %v1933 = vshrl.u32 %v1932, 7
    %v1934 = vsub.s32 0, %v1933
    %v1935 = vrot.slane %v1829, %v1934
    %v1937 = vadd.f32 %v1930, %v1935
    %v1938 = vxor.u32 %v1937, 2147483648
    %v1939 = vmul.f32 %v1938, 1.442695
    %v1940 = vpow.pop %v1939
    %v1941 = vadd.f32 %v1940, 1.0
    %v1942 = vrcp.pop %v1941
    %v1943 = vmul.f32 1.0, %v1942
    %v1944 = vmul.f32 %v1937, %v1943
    %v1945 = vadd.f32 %v1820, %v1944
    %s1946 = scalar_lea.vmem [#allocation20], 64
    %v1947 = vld [vmem:[%s1946] sm:$0xff]
    %v1948 = vld [vmem:[%s1946 + $0x8] sm:$0xff]
    %v1949 = vld [vmem:[%s1946 + $0x10] sm:$0xff]
    %v1950 = vld [vmem:[%s1946 + $0x18] sm:$0xff]
    %s1951 = scalar_lea.vmem [#allocation22], 2
    %v1952 = vld [vmem:[%s1951] sm:$0x1]
    %s1953 = scalar_lea.vmem [#allocation23], 2
    %v1954 = vld [vmem:[%s1953] sm:$0x1]
    %1955 = vmatprep.subr.mxu0 0.0
    %1956 = vmatpush1.msra.mxu0 %v1947
    %1957 = vmatprep.subr.mxu0 0.0
    %1958 = vmatpush1.msra.mxu0 %v1948
    %1959 = vmatprep.subr.mxu0 0.0
    %1960 = vmatpush1.msra.mxu0 %v1949
    %1961 = vmatprep.subr.mxu0 0.0
    %1962 = vmatpush1.msra.mxu0 %v1950
    %1963 = vmatprep.subr.mxu0 0.0
    %1964 = vmatpush1.msra.mxu0 0.0
    %1965 = vmatprep.subr.mxu0 0.0
    %1966 = vmatpush1.msra.mxu0 0.0
    %1967 = vmatprep.subr.mxu0 0.0
    %1968 = vmatpush1.msra.mxu0 0.0
    %1969 = vmatprep.subr.mxu0 0.0
    %1970 = vmatpush1.msra.mxu0 0.0
    %1971 = vmatprep.subr.mxu0 0.0
    %1972 = vmatpush1.msra.mxu0 0.0
    %1973 = vmatprep.subr.mxu0 0.0
    %1974 = vmatpush1.msra.mxu0 0.0
    %1975 = vmatprep.subr.mxu0 0.0
    %1976 = vmatpush1.msra.mxu0 0.0
    %1977 = vmatprep.subr.mxu0 0.0
    %1978 = vmatpush1.msra.mxu0 0.0
    %1979 = vmatprep.subr.mxu0 0.0
    %1980 = vmatpush1.msra.mxu0 0.0
    %1981 = vmatprep.subr.mxu0 0.0
    %1982 = vmatpush1.msra.mxu0 0.0
    %1983 = vmatprep.subr.mxu0 0.0
    %1984 = vmatpush1.msra.mxu0 0.0
    %1985 = vmatprep.subr.mxu0 0.0
    %1986 = vmatpush1.msra.mxu0 0.0
    %1987 = vmatprep.subr.mxu0 0.0
    %1988 = vmatpush1.msra.mxu0 0.0
    %1989 = vmatprep.subr.mxu0 0.0
    %1990 = vmatpush1.msra.mxu0 0.0
    %1991 = vmatprep.subr.mxu0 0.0
    %1992 = vmatpush1.msra.mxu0 0.0
    %1993 = vmatprep.subr.mxu0 0.0
    %1994 = vmatpush1.msra.mxu0 0.0
    %1995 = vmatprep.subr.mxu0 0.0
    %1996 = vmatpush1.msra.mxu0 0.0
    %1997 = vmatprep.subr.mxu0 0.0
    %1998 = vmatpush1.msra.mxu0 0.0
    %1999 = vmatprep.subr.mxu0 0.0
    %2000 = vmatpush1.msra.mxu0 0.0
    %2001 = vmatprep.subr.mxu0 0.0
    %2002 = vmatpush1.msra.mxu0 0.0
    %2003 = vmatprep.subr.mxu0 0.0
    %2004 = vmatpush1.msra.mxu0 0.0
    %2005 = vmatprep.subr.mxu0 0.0
    %2006 = vmatpush1.msra.mxu0 0.0
    %2007 = vmatprep.subr.mxu0 0.0
    %2008 = vmatpush1.msra.mxu0 0.0
    %2009 = vmatprep.subr.mxu0 0.0
    %2010 = vmatpush1.msra.mxu0 0.0
    %2011 = vmatprep.subr.mxu0 0.0
    %2012 = vmatpush1.msra.mxu0 0.0
    %2013 = vmatprep.subr.mxu0 0.0
    %2014 = vmatpush1.msra.mxu0 0.0
    %2015 = vmatprep.subr.mxu0 0.0
    %2016 = vmatpush1.msra.mxu0 0.0
    %2017 = vmatprep.subr.mxu0 0.0
    %2018 = vmatpush1.msra.mxu0 0.0
    %2019 = vmatprep.mubr.f32.mxu0 0.0
    %2020 = vmatmul.mubr.f32.gmra.mrb[0].mxu0 %v1707
    %v2021 = vpop.f32.mrb[0].mxu0
    %v2022 = vadd.f32 0.0, %v2021
    %v2023 = vpop.f32.mrb[0].mxu0
    %2024 = vdwg.mxu0
    %v2025 = vsel %vm345, %v2022, 0.0
    %v2026 = vrot.slane %v2025, 4
    %v2027 = vadd.f32 %v2025, %v2026
    %v2028 = vrot.slane %v2027, 2
    %v2029 = vadd.f32 %v2027, %v2028
    %v2030 = vrot.slane %v2029, 1
    %v2031 = vadd.f32 %v2029, %v2030
    %v2032 = vmul.f32 %v2031, %v426
    %v2033 = vsub.f32 %v2022, %v2032
    %v2034 = vmul.f32 %v2033, %v2033
    %v2035 = vsel %vm345, %v2034, 0.0
    %v2036 = vrot.slane %v2035, 4
    %v2037 = vadd.f32 %v2035, %v2036
    %v2038 = vrot.slane %v2037, 2
    %v2039 = vadd.f32 %v2037, %v2038
    %v2040 = vrot.slane %v2039, 1
    %v2041 = vadd.f32 %v2039, %v2040
    %v2042 = vmul.f32 %v2041, %v426
    %v2043 = vadd.f32 %v2042, 1e-05
    %v2044 = vrsqrt.pop %v2043
    %v2045 = vmul.f32 %v2033, %v2044
    %v2047 = vlaneseq
    %v2048 = vshrl.u32 %v2047, 7
    %v2049 = vsub.s32 0, %v2048
    %v2050 = vrot.slane %v1952, %v2049
    %v2052 = vmul.f32 %v2045, %v2050
    %v2054 = vlaneseq
    %v2055 = vshrl.u32 %v2054, 7
    %v2056 = vsub.s32 0, %v2055
    %v2057 = vrot.slane %v1954, %v2056
    %v2059 = vadd.f32 %v2052, %v2057
    %v2060 = vxor.u32 %v2059, 2147483648
    %v2061 = vmul.f32 %v2060, 1.442695
    %v2062 = vpow.pop %v2061
    %v2063 = vadd.f32 %v2062, 1.0
    %v2064 = vrcp.pop %v2063
    %v2065 = vmul.f32 1.0, %v2064
    %v2066 = vmul.f32 %v2059, %v2065
    %s2067 = scalar_lea.vmem [#allocation20], 96
    %v2068 = vld [vmem:[%s2067] sm:$0xff]
    %v2069 = vld [vmem:[%s2067 + $0x8] sm:$0xff]
    %v2070 = vld [vmem:[%s2067 + $0x10] sm:$0xff]
    %v2071 = vld [vmem:[%s2067 + $0x18] sm:$0xff]
    %s2072 = scalar_lea.vmem [#allocation22], 3
    %v2073 = vld [vmem:[%s2072] sm:$0x1]
    %s2074 = scalar_lea.vmem [#allocation23], 3
    %v2075 = vld [vmem:[%s2074] sm:$0x1]
    %2076 = vmatprep.subr.mxu0 0.0
    %2077 = vmatpush1.msra.mxu0 %v2068
    %2078 = vmatprep.subr.mxu0 0.0
    %2079 = vmatpush1.msra.mxu0 %v2069
    %2080 = vmatprep.subr.mxu0 0.0
    %2081 = vmatpush1.msra.mxu0 %v2070
    %2082 = vmatprep.subr.mxu0 0.0
    %2083 = vmatpush1.msra.mxu0 %v2071
    %2084 = vmatprep.subr.mxu0 0.0
    %2085 = vmatpush1.msra.mxu0 0.0
    %2086 = vmatprep.subr.mxu0 0.0
    %2087 = vmatpush1.msra.mxu0 0.0
    %2088 = vmatprep.subr.mxu0 0.0
    %2089 = vmatpush1.msra.mxu0 0.0
    %2090 = vmatprep.subr.mxu0 0.0
    %2091 = vmatpush1.msra.mxu0 0.0
    %2092 = vmatprep.subr.mxu0 0.0
    %2093 = vmatpush1.msra.mxu0 0.0
    %2094 = vmatprep.subr.mxu0 0.0
    %2095 = vmatpush1.msra.mxu0 0.0
    %2096 = vmatprep.subr.mxu0 0.0
    %2097 = vmatpush1.msra.mxu0 0.0
    %2098 = vmatprep.subr.mxu0 0.0
    %2099 = vmatpush1.msra.mxu0 0.0
    %2100 = vmatprep.subr.mxu0 0.0
    %2101 = vmatpush1.msra.mxu0 0.0
    %2102 = vmatprep.subr.mxu0 0.0
    %2103 = vmatpush1.msra.mxu0 0.0
    %2104 = vmatprep.subr.mxu0 0.0
    %2105 = vmatpush1.msra.mxu0 0.0
    %2106 = vmatprep.subr.mxu0 0.0
    %2107 = vmatpush1.msra.mxu0 0.0
    %2108 = vmatprep.subr.mxu0 0.0
    %2109 = vmatpush1.msra.mxu0 0.0
    %2110 = vmatprep.subr.mxu0 0.0
    %2111 = vmatpush1.msra.mxu0 0.0
    %2112 = vmatprep.subr.mxu0 0.0
    %2113 = vmatpush1.msra.mxu0 0.0
    %2114 = vmatprep.subr.mxu0 0.0
    %2115 = vmatpush1.msra.mxu0 0.0
    %2116 = vmatprep.subr.mxu0 0.0
    %2117 = vmatpush1.msra.mxu0 0.0
    %2118 = vmatprep.subr.mxu0 0.0
    %2119 = vmatpush1.msra.mxu0 0.0
    %2120 = vmatprep.subr.mxu0 0.0
    %2121 = vmatpush1.msra.mxu0 0.0
    %2122 = vmatprep.subr.mxu0 0.0
    %2123 = vmatpush1.msra.mxu0 0.0
    %2124 = vmatprep.subr.mxu0 0.0
    %2125 = vmatpush1.msra.mxu0 0.0
    %2126 = vmatprep.subr.mxu0 0.0
    %2127 = vmatpush1.msra.mxu0 0.0
    %2128 = vmatprep.subr.mxu0 0.0
    %2129 = vmatpush1.msra.mxu0 0.0
    %2130 = vmatprep.subr.mxu0 0.0
    %2131 = vmatpush1.msra.mxu0 0.0
    %2132 = vmatprep.subr.mxu0 0.0
    %2133 = vmatpush1.msra.mxu0 0.0
    %2134 = vmatprep.subr.mxu0 0.0
    %2135 = vmatpush1.msra.mxu0 0.0
    %2136 = vmatprep.subr.mxu0 0.0
    %2137 = vmatpush1.msra.mxu0 0.0
    %2138 = vmatprep.subr.mxu0 0.0
    %2139 = vmatpush1.msra.mxu0 0.0
    %2140 = vmatprep.mubr.f32.mxu0 0.0
    %2141 = vmatmul.mubr.f32.gmra.mrb[0].mxu0 %v1831
    %v2142 = vpop.f32.mrb[0].mxu0
    %v2143 = vadd.f32 0.0, %v2142
    %v2144 = vpop.f32.mrb[0].mxu0
    %2145 = vdwg.mxu0
    %v2146 = vsel %vm345, %v2143, 0.0
    %v2147 = vrot.slane %v2146, 4
    %v2148 = vadd.f32 %v2146, %v2147
    %v2149 = vrot.slane %v2148, 2
    %v2150 = vadd.f32 %v2148, %v2149
    %v2151 = vrot.slane %v2150, 1
    %v2152 = vadd.f32 %v2150, %v2151
    %v2153 = vmul.f32 %v2152, %v426
    %v2154 = vsub.f32 %v2143, %v2153
    %v2155 = vmul.f32 %v2154, %v2154
    %v2156 = vsel %vm345, %v2155, 0.0
    %v2157 = vrot.slane %v2156, 4
    %v2158 = vadd.f32 %v2156, %v2157
    %v2159 = vrot.slane %v2158, 2
    %v2160 = vadd.f32 %v2158, %v2159
    %v2161 = vrot.slane %v2160, 1
    %v2162 = vadd.f32 %v2160, %v2161
    %v2163 = vmul.f32 %v2162, %v426
    %v2164 = vadd.f32 %v2163, 1e-05
    %v2165 = vrsqrt.pop %v2164
    %v2166 = vmul.f32 %v2154, %v2165
    %v2168 = vlaneseq
    %v2169 = vshrl.u32 %v2168, 7
    %v2170 = vsub.s32 0, %v2169
    %v2171 = vrot.slane %v2073, %v2170
    %v2173 = vmul.f32 %v2166, %v2171
    %v2175 = vlaneseq
    %v2176 = vshrl.u32 %v2175, 7
    %v2177 = vsub.s32 0, %v2176
    %v2178 = vrot.slane %v2075, %v2177
    %v2180 = vadd.f32 %v2173, %v2178
    %v2181 = vxor.u32 %v2180, 2147483648
    %v2182 = vmul.f32 %v2181, 1.442695
    %v2183 = vpow.pop %v2182
    %v2184 = vadd.f32 %v2183, 1.0
    %v2185 = vrcp.pop %v2184
    %v2186 = vmul.f32 1.0, %v2185
    %v2187 = vmul.f32 %v2180, %v2186
    %v2188 = vadd.f32 %v2066, %v2187
    %s2189 = scalar_lea.vmem [#allocation20], 128
    %v2190 = vld [vmem:[%s2189] sm:$0xff]
    %v2191 = vld [vmem:[%s2189 + $0x8] sm:$0xff]
    %v2192 = vld [vmem:[%s2189 + $0x10] sm:$0xff]
    %v2193 = vld [vmem:[%s2189 + $0x18] sm:$0xff]
    %s2194 = scalar_lea.vmem [#allocation22], 4
    %v2195 = vld [vmem:[%s2194] sm:$0x1]
    %s2196 = scalar_lea.vmem [#allocation23], 4
    %v2197 = vld [vmem:[%s2196] sm:$0x1]
    %2198 = vmatprep.subr.mxu0 0.0
    %2199 = vmatpush1.msra.mxu0 %v2190
    %2200 = vmatprep.subr.mxu0 0.0
    %2201 = vmatpush1.msra.mxu0 %v2191
    %2202 = vmatprep.subr.mxu0 0.0
    %2203 = vmatpush1.msra.mxu0 %v2192
    %2204 = vmatprep.subr.mxu0 0.0
    %2205 = vmatpush1.msra.mxu0 %v2193
    %2206 = vmatprep.subr.mxu0 0.0
    %2207 = vmatpush1.msra.mxu0 0.0
    %2208 = vmatprep.subr.mxu0 0.0
    %2209 = vmatpush1.msra.mxu0 0.0
    %2210 = vmatprep.subr.mxu0 0.0
    %2211 = vmatpush1.msra.mxu0 0.0
    %2212 = vmatprep.subr.mxu0 0.0
    %2213 = vmatpush1.msra.mxu0 0.0
    %2214 = vmatprep.subr.mxu0 0.0
    %2215 = vmatpush1.msra.mxu0 0.0
    %2216 = vmatprep.subr.mxu0 0.0
    %2217 = vmatpush1.msra.mxu0 0.0
    %2218 = vmatprep.subr.mxu0 0.0
    %2219 = vmatpush1.msra.mxu0 0.0
    %2220 = vmatprep.subr.mxu0 0.0
    %2221 = vmatpush1.msra.mxu0 0.0
    %2222 = vmatprep.subr.mxu0 0.0
    %2223 = vmatpush1.msra.mxu0 0.0
    %2224 = vmatprep.subr.mxu0 0.0
    %2225 = vmatpush1.msra.mxu0 0.0
    %2226 = vmatprep.subr.mxu0 0.0
    %2227 = vmatpush1.msra.mxu0 0.0
    %2228 = vmatprep.subr.mxu0 0.0
    %2229 = vmatpush1.msra.mxu0 0.0
    %2230 = vmatprep.subr.mxu0 0.0
    %2231 = vmatpush1.msra.mxu0 0.0
    %2232 = vmatprep.subr.mxu0 0.0
    %2233 = vmatpush1.msra.mxu0 0.0
    %2234 = vmatprep.subr.mxu0 0.0
    %2235 = vmatpush1.msra.mxu0 0.0
    %2236 = vmatprep.subr.mxu0 0.0
    %2237 = vmatpush1.msra.mxu0 0.0
    %2238 = vmatprep.subr.mxu0 0.0
    %2239 = vmatpush1.msra.mxu0 0.0
    %2240 = vmatprep.subr.mxu0 0.0
    %2241 = vmatpush1.msra.mxu0 0.0
    %2242 = vmatprep.subr.mxu0 0.0
    %2243 = vmatpush1.msra.mxu0 0.0
    %2244 = vmatprep.subr.mxu0 0.0
    %2245 = vmatpush1.msra.mxu0 0.0
    %2246 = vmatprep.subr.mxu0 0.0
    %2247 = vmatpush1.msra.mxu0 0.0
    %2248 = vmatprep.subr.mxu0 0.0
    %2249 = vmatpush1.msra.mxu0 0.0
    %2250 = vmatprep.subr.mxu0 0.0
    %2251 = vmatpush1.msra.mxu0 0.0
    %2252 = vmatprep.subr.mxu0 0.0
    %2253 = vmatpush1.msra.mxu0 0.0
    %2254 = vmatprep.subr.mxu0 0.0
    %2255 = vmatpush1.msra.mxu0 0.0
    %2256 = vmatprep.subr.mxu0 0.0
    %2257 = vmatpush1.msra.mxu0 0.0
    %2258 = vmatprep.subr.mxu0 0.0
    %2259 = vmatpush1.msra.mxu0 0.0
    %2260 = vmatprep.subr.mxu0 0.0
    %2261 = vmatpush1.msra.mxu0 0.0
    %2262 = vmatprep.mubr.f32.mxu0 0.0
    %2263 = vmatmul.mubr.f32.gmra.mrb[0].mxu0 %v1707
    %v2264 = vpop.f32.mrb[0].mxu0
    %v2265 = vadd.f32 0.0, %v2264
    %v2266 = vpop.f32.mrb[0].mxu0
    %2267 = vdwg.mxu0
    %v2268 = vsel %vm345, %v2265, 0.0
    %v2269 = vrot.slane %v2268, 4
    %v2270 = vadd.f32 %v2268, %v2269
    %v2271 = vrot.slane %v2270, 2
    %v2272 = vadd.f32 %v2270, %v2271
    %v2273 = vrot.slane %v2272, 1
    %v2274 = vadd.f32 %v2272, %v2273
    %v2275 = vmul.f32 %v2274, %v426
    %v2276 = vsub.f32 %v2265, %v2275
    %v2277 = vmul.f32 %v2276, %v2276
    %v2278 = vsel %vm345, %v2277, 0.0
    %v2279 = vrot.slane %v2278, 4
    %v2280 = vadd.f32 %v2278, %v2279
    %v2281 = vrot.slane %v2280, 2
    %v2282 = vadd.f32 %v2280, %v2281
    %v2283 = vrot.slane %v2282, 1
    %v2284 = vadd.f32 %v2282, %v2283
    %v2285 = vmul.f32 %v2284, %v426
    %v2286 = vadd.f32 %v2285, 1e-05
    %v2287 = vrsqrt.pop %v2286
    %v2288 = vmul.f32 %v2276, %v2287
    %v2290 = vlaneseq
    %v2291 = vshrl.u32 %v2290, 7
    %v2292 = vsub.s32 0, %v2291
    %v2293 = vrot.slane %v2195, %v2292
    %v2295 = vmul.f32 %v2288, %v2293
    %v2297 = vlaneseq
    %v2298 = vshrl.u32 %v2297, 7
    %v2299 = vsub.s32 0, %v2298
    %v2300 = vrot.slane %v2197, %v2299
    %v2302 = vadd.f32 %v2295, %v2300
    %v2303 = vxor.u32 %v2302, 2147483648
    %v2304 = vmul.f32 %v2303, 1.442695
    %v2305 = vpow.pop %v2304
    %v2306 = vadd.f32 %v2305, 1.0
    %v2307 = vrcp.pop %v2306
    %v2308 = vmul.f32 1.0, %v2307
    %v2309 = vmul.f32 %v2302, %v2308
    %s2310 = scalar_lea.vmem [#allocation20], 160
    %v2311 = vld [vmem:[%s2310] sm:$0xff]
    %v2312 = vld [vmem:[%s2310 + $0x8] sm:$0xff]
    %v2313 = vld [vmem:[%s2310 + $0x10] sm:$0xff]
    %v2314 = vld [vmem:[%s2310 + $0x18] sm:$0xff]
    %s2315 = scalar_lea.vmem [#allocation22], 5
    %v2316 = vld [vmem:[%s2315] sm:$0x1]
    %s2317 = scalar_lea.vmem [#allocation23], 5
    %v2318 = vld [vmem:[%s2317] sm:$0x1]
    %2319 = vmatprep.subr.mxu0 0.0
    %2320 = vmatpush1.msra.mxu0 %v2311
    %2321 = vmatprep.subr.mxu0 0.0
    %2322 = vmatpush1.msra.mxu0 %v2312
    %2323 = vmatprep.subr.mxu0 0.0
    %2324 = vmatpush1.msra.mxu0 %v2313
    %2325 = vmatprep.subr.mxu0 0.0
    %2326 = vmatpush1.msra.mxu0 %v2314
    %2327 = vmatprep.subr.mxu0 0.0
    %2328 = vmatpush1.msra.mxu0 0.0
    %2329 = vmatprep.subr.mxu0 0.0
    %2330 = vmatpush1.msra.mxu0 0.0
    %2331 = vmatprep.subr.mxu0 0.0
    %2332 = vmatpush1.msra.mxu0 0.0
    %2333 = vmatprep.subr.mxu0 0.0
    %2334 = vmatpush1.msra.mxu0 0.0
    %2335 = vmatprep.subr.mxu0 0.0
    %2336 = vmatpush1.msra.mxu0 0.0
    %2337 = vmatprep.subr.mxu0 0.0
    %2338 = vmatpush1.msra.mxu0 0.0
    %2339 = vmatprep.subr.mxu0 0.0
    %2340 = vmatpush1.msra.mxu0 0.0
    %2341 = vmatprep.subr.mxu0 0.0
    %2342 = vmatpush1.msra.mxu0 0.0
    %2343 = vmatprep.subr.mxu0 0.0
    %2344 = vmatpush1.msra.mxu0 0.0
    %2345 = vmatprep.subr.mxu0 0.0
    %2346 = vmatpush1.msra.mxu0 0.0
    %2347 = vmatprep.subr.mxu0 0.0
    %2348 = vmatpush1.msra.mxu0 0.0
    %2349 = vmatprep.subr.mxu0 0.0
    %2350 = vmatpush1.msra.mxu0 0.0
    %2351 = vmatprep.subr.mxu0 0.0
    %2352 = vmatpush1.msra.mxu0 0.0
    %2353 = vmatprep.subr.mxu0 0.0
    %2354 = vmatpush1.msra.mxu0 0.0
    %2355 = vmatprep.subr.mxu0 0.0
    %2356 = vmatpush1.msra.mxu0 0.0
    %2357 = vmatprep.subr.mxu0 0.0
    %2358 = vmatpush1.msra.mxu0 0.0
    %2359 = vmatprep.subr.mxu0 0.0
    %2360 = vmatpush1.msra.mxu0 0.0
    %2361 = vmatprep.subr.mxu0 0.0
    %2362 = vmatpush1.msra.mxu0 0.0
    %2363 = vmatprep.subr.mxu0 0.0
    %2364 = vmatpush1.msra.mxu0 0.0
    %2365 = vmatprep.subr.mxu0 0.0
    %2366 = vmatpush1.msra.mxu0 0.0
    %2367 = vmatprep.subr.mxu0 0.0
    %2368 = vmatpush1.msra.mxu0 0.0
    %2369 = vmatprep.subr.mxu0 0.0
    %2370 = vmatpush1.msra.mxu0 0.0
    %2371 = vmatprep.subr.mxu0 0.0
    %2372 = vmatpush1.msra.mxu0 0.0
    %2373 = vmatprep.subr.mxu0 0.0
    %2374 = vmatpush1.msra.mxu0 0.0
    %2375 = vmatprep.subr.mxu0 0.0
    %2376 = vmatpush1.msra.mxu0 0.0
    %2377 = vmatprep.subr.mxu0 0.0
    %2378 = vmatpush1.msra.mxu0 0.0
    %2379 = vmatprep.subr.mxu0 0.0
    %2380 = vmatpush1.msra.mxu0 0.0
    %2381 = vmatprep.subr.mxu0 0.0
    %2382 = vmatpush1.msra.mxu0 0.0
    %2383 = vmatprep.mubr.f32.mxu0 0.0
    %2384 = vmatmul.mubr.f32.gmra.mrb[0].mxu0 %v1831
    %v2385 = vpop.f32.mrb[0].mxu0
    %v2386 = vadd.f32 0.0, %v2385
    %v2387 = vpop.f32.mrb[0].mxu0
    %2388 = vdwg.mxu0
    %v2389 = vsel %vm345, %v2386, 0.0
    %v2390 = vrot.slane %v2389, 4
    %v2391 = vadd.f32 %v2389, %v2390
    %v2392 = vrot.slane %v2391, 2
    %v2393 = vadd.f32 %v2391, %v2392
    %v2394 = vrot.slane %v2393, 1
    %v2395 = vadd.f32 %v2393, %v2394
    %v2396 = vmul.f32 %v2395, %v426
    %v2397 = vsub.f32 %v2386, %v2396
    %v2398 = vmul.f32 %v2397, %v2397
    %v2399 = vsel %vm345, %v2398, 0.0
    %v2400 = vrot.slane %v2399, 4
    %v2401 = vadd.f32 %v2399, %v2400
    %v2402 = vrot.slane %v2401, 2
    %v2403 = vadd.f32 %v2401, %v2402
    %v2404 = vrot.slane %v2403, 1
    %v2405 = vadd.f32 %v2403, %v2404
    %v2406 = vmul.f32 %v2405, %v426
    %v2407 = vadd.f32 %v2406, 1e-05
    %v2408 = vrsqrt.pop %v2407
    %v2409 = vmul.f32 %v2397, %v2408
    %v2411 = vlaneseq
    %v2412 = vshrl.u32 %v2411, 7
    %v2413 = vsub.s32 0, %v2412
    %v2414 = vrot.slane %v2316, %v2413
    %v2416 = vmul.f32 %v2409, %v2414
    %v2418 = vlaneseq
    %v2419 = vshrl.u32 %v2418, 7
    %v2420 = vsub.s32 0, %v2419
    %v2421 = vrot.slane %v2318, %v2420
    %v2423 = vadd.f32 %v2416, %v2421
    %v2424 = vxor.u32 %v2423, 2147483648
    %v2425 = vmul.f32 %v2424, 1.442695
    %v2426 = vpow.pop %v2425
    %v2427 = vadd.f32 %v2426, 1.0
    %v2428 = vrcp.pop %v2427
    %v2429 = vmul.f32 1.0, %v2428
    %v2430 = vmul.f32 %v2423, %v2429
    %v2431 = vadd.f32 %v2309, %v2430
    %v2432 = vld [vmem:[%s21] sm:$0xff]
    %v2433 = vld [vmem:[%s21 + $0x8] sm:$0xff]
    %v2434 = vld [vmem:[%s21 + $0x10] sm:$0xff]
    %v2435 = vld [vmem:[%s21 + $0x18] sm:$0xff]
    %v2436 = vld [vmem:[%s21 + $0x20] sm:$0xff]
    %v2437 = vld [vmem:[%s21 + $0x28] sm:$0xff]
    %v2438 = vld [vmem:[%s21 + $0x30] sm:$0xff]
    %v2439 = vld [vmem:[%s21 + $0x38] sm:$0xff]
    %v2440 = vld [vmem:[%s21 + $0x40] sm:$0xff]
    %v2441 = vld [vmem:[%s21 + $0x48] sm:$0xff]
    %v2442 = vld [vmem:[%s21 + $0x50] sm:$0xff]
    %v2443 = vld [vmem:[%s21 + $0x58] sm:$0xff]
    %v2444 = vld [vmem:[%s22] sm:$0x1]
    %v2446 = vsel %vm345, %v2188, 0
    %2448 = vmatprep.subr.mxu0 0.0
    %2449 = vmatpush1.msra.mxu0 %v2436
    %2450 = vmatprep.subr.mxu0 0.0
    %2451 = vmatpush1.msra.mxu0 %v2437
    %2452 = vmatprep.subr.mxu0 0.0
    %2453 = vmatpush1.msra.mxu0 %v2438
    %2454 = vmatprep.subr.mxu0 0.0
    %2455 = vmatpush1.msra.mxu0 %v2439
    %2456 = vmatprep.subr.mxu0 0.0
    %2457 = vmatpush1.msra.mxu0 0.0
    %2458 = vmatprep.subr.mxu0 0.0
    %2459 = vmatpush1.msra.mxu0 0.0
    %2460 = vmatprep.subr.mxu0 0.0
    %2461 = vmatpush1.msra.mxu0 0.0
    %2462 = vmatprep.subr.mxu0 0.0
    %2463 = vmatpush1.msra.mxu0 0.0
    %2464 = vmatprep.subr.mxu0 0.0
    %2465 = vmatpush1.msra.mxu0 0.0
    %2466 = vmatprep.subr.mxu0 0.0
    %2467 = vmatpush1.msra.mxu0 0.0
    %2468 = vmatprep.subr.mxu0 0.0
    %2469 = vmatpush1.msra.mxu0 0.0
    %2470 = vmatprep.subr.mxu0 0.0
    %2471 = vmatpush1.msra.mxu0 0.0
    %2472 = vmatprep.subr.mxu0 0.0
    %2473 = vmatpush1.msra.mxu0 0.0
    %2474 = vmatprep.subr.mxu0 0.0
    %2475 = vmatpush1.msra.mxu0 0.0
    %2476 = vmatprep.subr.mxu0 0.0
    %2477 = vmatpush1.msra.mxu0 0.0
    %2478 = vmatprep.subr.mxu0 0.0
    %2479 = vmatpush1.msra.mxu0 0.0
    %2480 = vmatprep.subr.mxu0 0.0
    %2481 = vmatpush1.msra.mxu0 0.0
    %2482 = vmatprep.subr.mxu0 0.0
    %2483 = vmatpush1.msra.mxu0 0.0
    %2484 = vmatprep.subr.mxu0 0.0
    %2485 = vmatpush1.msra.mxu0 0.0
    %2486 = vmatprep.subr.mxu0 0.0
    %2487 = vmatpush1.msra.mxu0 0.0
    %2488 = vmatprep.subr.mxu0 0.0
    %2489 = vmatpush1.msra.mxu0 0.0
    %2490 = vmatprep.subr.mxu0 0.0
    %2491 = vmatpush1.msra.mxu0 0.0
    %2492 = vmatprep.subr.mxu0 0.0
    %2493 = vmatpush1.msra.mxu0 0.0
    %2494 = vmatprep.subr.mxu0 0.0
    %2495 = vmatpush1.msra.mxu0 0.0
    %2496 = vmatprep.subr.mxu0 0.0
    %2497 = vmatpush1.msra.mxu0 0.0
    %2498 = vmatprep.subr.mxu0 0.0
    %2499 = vmatpush1.msra.mxu0 0.0
    %2500 = vmatprep.subr.mxu0 0.0
    %2501 = vmatpush1.msra.mxu0 0.0
    %2502 = vmatprep.subr.mxu0 0.0
    %2503 = vmatpush1.msra.mxu0 0.0
    %2504 = vmatprep.subr.mxu0 0.0
    %2505 = vmatpush1.msra.mxu0 0.0
    %2506 = vmatprep.subr.mxu0 0.0
    %2507 = vmatpush1.msra.mxu0 0.0
    %2508 = vmatprep.subr.mxu0 0.0
    %2509 = vmatpush1.msra.mxu0 0.0
    %2510 = vmatprep.subr.mxu0 0.0
    %2511 = vmatpush1.msra.mxu0 0.0
    %2512 = vmatprep.mubr.f32.mxu0 0.0
    %2513 = vmatmul.mubr.f32.gmra.mrb[0].mxu0 %v2446
    %v2514 = vpop.f32.mrb[0].mxu0
    %v2515 = vadd.f32 0.0, %v2514
    %v2516 = vpop.f32.mrb[0].mxu0
    %2517 = vdwg.mxu0
    %v2519 = vsel %vm345, %v1945, 0
    %2521 = vmatprep.subr.mxu0 0.0
    %2522 = vmatpush1.msra.mxu0 %v2432
    %2523 = vmatprep.subr.mxu0 0.0
    %2524 = vmatpush1.msra.mxu0 %v2433
    %2525 = vmatprep.subr.mxu0 0.0
    %2526 = vmatpush1.msra.mxu0 %v2434
    %2527 = vmatprep.subr.mxu0 0.0
    %2528 = vmatpush1.msra.mxu0 %v2435
    %2529 = vmatprep.subr.mxu0 0.0
    %2530 = vmatpush1.msra.mxu0 0.0
    %2531 = vmatprep.subr.mxu0 0.0
    %2532 = vmatpush1.msra.mxu0 0.0
    %2533 = vmatprep.subr.mxu0 0.0
    %2534 = vmatpush1.msra.mxu0 0.0
    %2535 = vmatprep.subr.mxu0 0.0
    %2536 = vmatpush1.msra.mxu0 0.0
    %2537 = vmatprep.subr.mxu0 0.0
    %2538 = vmatpush1.msra.mxu0 0.0
    %2539 = vmatprep.subr.mxu0 0.0
    %2540 = vmatpush1.msra.mxu0 0.0
    %2541 = vmatprep.subr.mxu0 0.0
    %2542 = vmatpush1.msra.mxu0 0.0
    %2543 = vmatprep.subr.mxu0 0.0
    %2544 = vmatpush1.msra.mxu0 0.0
    %2545 = vmatprep.subr.mxu0 0.0
    %2546 = vmatpush1.msra.mxu0 0.0
    %2547 = vmatprep.subr.mxu0 0.0
    %2548 = vmatpush1.msra.mxu0 0.0
    %2549 = vmatprep.subr.mxu0 0.0
    %2550 = vmatpush1.msra.mxu0 0.0
    %2551 = vmatprep.subr.mxu0 0.0
    %2552 = vmatpush1.msra.mxu0 0.0
    %2553 = vmatprep.subr.mxu0 0.0
    %2554 = vmatpush1.msra.mxu0 0.0
    %2555 = vmatprep.subr.mxu0 0.0
    %2556 = vmatpush1.msra.mxu0 0.0
    %2557 = vmatprep.subr.mxu0 0.0
    %2558 = vmatpush1.msra.mxu0 0.0
    %2559 = vmatprep.subr.mxu0 0.0
    %2560 = vmatpush1.msra.mxu0 0.0
    %2561 = vmatprep.subr.mxu0 0.0
    %2562 = vmatpush1.msra.mxu0 0.0
    %2563 = vmatprep.subr.mxu0 0.0
    %2564 = vmatpush1.msra.mxu0 0.0
    %2565 = vmatprep.subr.mxu0 0.0
    %2566 = vmatpush1.msra.mxu0 0.0
    %2567 = vmatprep.subr.mxu0 0.0
    %2568 = vmatpush1.msra.mxu0 0.0
    %2569 = vmatprep.subr.mxu0 0.0
    %2570 = vmatpush1.msra.mxu0 0.0
    %2571 = vmatprep.subr.mxu0 0.0
    %2572 = vmatpush1.msra.mxu0 0.0
    %2573 = vmatprep.subr.mxu0 0.0
    %2574 = vmatpush1.msra.mxu0 0.0
    %2575 = vmatprep.subr.mxu0 0.0
    %2576 = vmatpush1.msra.mxu0 0.0
    %2577 = vmatprep.subr.mxu0 0.0
    %2578 = vmatpush1.msra.mxu0 0.0
    %2579 = vmatprep.subr.mxu0 0.0
    %2580 = vmatpush1.msra.mxu0 0.0
    %2581 = vmatprep.subr.mxu0 0.0
    %2582 = vmatpush1.msra.mxu0 0.0
    %2583 = vmatprep.subr.mxu0 0.0
    %2584 = vmatpush1.msra.mxu0 0.0
    %2585 = vmatprep.mubr.f32.mxu0 0.0
    %2586 = vmatmul.mubr.f32.gmra.mrb[0].mxu0 %v2519
    %v2587 = vpop.f32.mrb[0].mxu0
    %v2588 = vadd.f32 %v2515, %v2587
    %v2589 = vpop.f32.mrb[0].mxu0
    %2590 = vdwg.mxu0
    %v2592 = vsel %vm345, %v2431, 0
    %2594 = vmatprep.subr.mxu0 0.0
    %2595 = vmatpush1.msra.mxu0 %v2440
    %2596 = vmatprep.subr.mxu0 0.0
    %2597 = vmatpush1.msra.mxu0 %v2441
    %2598 = vmatprep.subr.mxu0 0.0
    %2599 = vmatpush1.msra.mxu0 %v2442
    %2600 = vmatprep.subr.mxu0 0.0
    %2601 = vmatpush1.msra.mxu0 %v2443
    %2602 = vmatprep.subr.mxu0 0.0
    %2603 = vmatpush1.msra.mxu0 0.0
    %2604 = vmatprep.subr.mxu0 0.0
    %2605 = vmatpush1.msra.mxu0 0.0
    %2606 = vmatprep.subr.mxu0 0.0
    %2607 = vmatpush1.msra.mxu0 0.0
    %2608 = vmatprep.subr.mxu0 0.0
    %2609 = vmatpush1.msra.mxu0 0.0
    %2610 = vmatprep.subr.mxu0 0.0
    %2611 = vmatpush1.msra.mxu0 0.0
    %2612 = vmatprep.subr.mxu0 0.0
    %2613 = vmatpush1.msra.mxu0 0.0
    %2614 = vmatprep.subr.mxu0 0.0
    %2615 = vmatpush1.msra.mxu0 0.0
    %2616 = vmatprep.subr.mxu0 0.0
    %2617 = vmatpush1.msra.mxu0 0.0
    %2618 = vmatprep.subr.mxu0 0.0
    %2619 = vmatpush1.msra.mxu0 0.0
    %2620 = vmatprep.subr.mxu0 0.0
    %2621 = vmatpush1.msra.mxu0 0.0
    %2622 = vmatprep.subr.mxu0 0.0
    %2623 = vmatpush1.msra.mxu0 0.0
    %2624 = vmatprep.subr.mxu0 0.0
    %2625 = vmatpush1.msra.mxu0 0.0
    %2626 = vmatprep.subr.mxu0 0.0
    %2627 = vmatpush1.msra.mxu0 0.0
    %2628 = vmatprep.subr.mxu0 0.0
    %2629 = vmatpush1.msra.mxu0 0.0
    %2630 = vmatprep.subr.mxu0 0.0
    %2631 = vmatpush1.msra.mxu0 0.0
    %2632 = vmatprep.subr.mxu0 0.0
    %2633 = vmatpush1.msra.mxu0 0.0
    %2634 = vmatprep.subr.mxu0 0.0
    %2635 = vmatpush1.msra.mxu0 0.0
    %2636 = vmatprep.subr.mxu0 0.0
    %2637 = vmatpush1.msra.mxu0 0.0
    %2638 = vmatprep.subr.mxu0 0.0
    %2639 = vmatpush1.msra.mxu0 0.0
    %2640 = vmatprep.subr.mxu0 0.0
    %2641 = vmatpush1.msra.mxu0 0.0
    %2642 = vmatprep.subr.mxu0 0.0
    %2643 = vmatpush1.msra.mxu0 0.0
    %2644 = vmatprep.subr.mxu0 0.0
    %2645 = vmatpush1.msra.mxu0 0.0
    %2646 = vmatprep.subr.mxu0 0.0
    %2647 = vmatpush1.msra.mxu0 0.0
    %2648 = vmatprep.subr.mxu0 0.0
    %2649 = vmatpush1.msra.mxu0 0.0
    %2650 = vmatprep.subr.mxu0 0.0
    %2651 = vmatpush1.msra.mxu0 0.0
    %2652 = vmatprep.subr.mxu0 0.0
    %2653 = vmatpush1.msra.mxu0 0.0
    %2654 = vmatprep.subr.mxu0 0.0
    %2655 = vmatpush1.msra.mxu0 0.0
    %2656 = vmatprep.subr.mxu0 0.0
    %2657 = vmatpush1.msra.mxu0 0.0
    %2658 = vmatprep.mubr.f32.mxu0 0.0
    %2659 = vmatmul.mubr.f32.gmra.mrb[0].mxu0 %v2592
    %v2660 = vpop.f32.mrb[0].mxu0
    %v2661 = vadd.f32 0.0, %v2660
    %v2662 = vpop.f32.mrb[0].mxu0
    %2663 = vdwg.mxu0
    %v2664 = vadd.f32 %v2588, %v2661
    %v2666 = vlaneseq
    %v2667 = vshrl.u32 %v2666, 7
    %v2668 = vsub.s32 0, %v2667
    %v2669 = vrot.slane %v2444, %v2668
    %v2671 = vadd.f32 %v2664, %v2669
    %v2672 = vxor.u32 %v2671, 2147483648
    %v2673 = vmul.f32 %v2672, 1.442695
    %v2674 = vpow.pop %v2673
    %v2675 = vadd.f32 %v2674, 1.0
    %v2676 = vrcp.pop %v2675
    %v2677 = vmul.f32 1.0, %v2676
    %vm2678 = vcmask 80896
    %2679 = vst.msk [vmem:[#allocation25] sm:$0xff] %vm2678, %v2677
    // Predicated region
    $region150: #{forward.1} parent=1 // pred_check
      _
    $region151: #{forward.1} parent=1 // pred_check_branch
      %2681 = sbr.rel (0) target = $region153
    $region152: #{forward.1} parent=1 // pred_region
      %s2683 = ssub.s32 128, 128
      %2684 = vsyncadd [#allocation4], %s2683
      %s2686 = sshll.u32 [#allocation25], 4
      %s2687 = int_to_ptr.vmem [resolvable:$true] %s2686
      %2689 = dma.vmem_to_hbm [thread:$0]  %s2687, 128, %s23, [#allocation4]
    $region153: #{forward.1} parent=1 // pred_fallthru
      _
    // Predicated region
    $region154: #{forward.1} parent=1 // pred_check
      _
    $region155: #{forward.1} parent=1 // pred_check_branch
      %2691 = sbr.rel (0) target = $region157
    $region156: #{forward.1} parent=1 // pred_region
      %2692 = dma.done [#allocation4], 128
    $region157: #{forward.1} parent=1 // pred_fallthru
      _
    %2693 = vsyncpa [#allocation3], 1
    %2694 = vsyncpa [#allocation6], 1
    %2695 = vsyncpa [#allocation9], 1
    %2696 = vsyncpa [#allocation12], 1
    %2697 = vsyncpa [#allocation15], 1
    %2698 = vsyncpa [#allocation18], 1
    %2699 = vsyncpa [#allocation21], 1
    %2700 = vsyncpa [#allocation24], 1
    %2701 = vsyncpa [#allocation4], 1

</llo_original>
